<compile_context>
chip_gen: v5e
topology: v5e:2x2
jax: 0.10.0
libtpu: 0.0.40
codegen_flags: <defaults>
</compile_context>

<pallas_src>
import functools

import jax
import jax.numpy as jnp
import numpy as np
from jax import lax
from jax.experimental import pallas as pl
from jax.experimental.pallas import tpu as pltpu

LANE = 128  # channel padding target -> lane-dense stores / matmul N-dim


def _round_up(x, m):
    return ((x + m - 1) // m) * m


# ---------------------------------------------------------------------------
# Fused ResBlock kernel (one grid step == one batch element)
# ---------------------------------------------------------------------------
def _resblock_kernel(x_ref, wfr_ref, sfr_ref, tfr_ref,
                     w2_ref, s2_ref, t2_ref,
                     out_ref,
                     patchf_ref, hpad_ref, patch2_ref, res_ref,
                     *, H, W, K, Kp, Cin, Cpad, pad1, WL):
    HW = H * W
    xv = x_ref[0]                       # (Hp, Wp, Cin) f32

    # ---- ONE shared im2col patch of x (serves conv1 AND size_fix) ----------
    for kh in range(Kp):
        for kw in range(Kp):
            c0 = (kh * Kp + kw) * Cin
            patchf_ref[:, c0:c0 + Cin] = (
                xv[kh:kh + H, kw:kw + W, :].reshape(HW, Cin))

    # ---- single front matmul: columns [0,Cpad)=conv1, [Cpad,2Cpad)=size_fix -
    z = jnp.dot(patchf_ref[...].astype(jnp.bfloat16), wfr_ref[...],
                preferred_element_type=jnp.float32)         # (HW, 2*Cpad) f32
    z = z * sfr_ref[...] + tfr_ref[...]                      # folded BN(+bias)
    h = jnp.maximum(z[:, :Cpad], 0.0)                        # conv1->BN->ReLU
    res_ref[...] = z[:, Cpad:]                               # residual (no ReLU)

    # ---- stage h into padded scratch; interior starts at sublane-aligned WL -
    if pad1 > 0:                        # zero only the halo border strips
        Wt = WL + W + pad1
        zrow = jnp.zeros((pad1, Wt, Cpad), jnp.float32)
        zcol = jnp.zeros((H + 2 * pad1, pad1, Cpad), jnp.float32)
        hpad_ref[0:pad1, :, :] = zrow
        hpad_ref[pad1 + H:pad1 + H + pad1, :, :] = zrow
        hpad_ref[:, WL - pad1:WL, :] = zcol
        hpad_ref[:, WL + W:WL + W + pad1, :] = zcol
    hpad_ref[pad1:pad1 + H, WL:WL + W, :] = h.reshape(H, W, Cpad)

    # ---- conv2 as ONE im2col matmul, contraction = K*K*Cpad -----------------
    for kh in range(K):
        for kw in range(K):
            tap = kh * K + kw
            c0 = WL - pad1 + kw
            patch2_ref[:, tap * Cpad:(tap + 1) * Cpad] = (
                hpad_ref[kh:kh + H, c0:c0 + W, :]
                .reshape(HW, Cpad).astype(jnp.bfloat16))
    y = jnp.dot(patch2_ref[...], w2_ref[...],
                preferred_element_type=jnp.float32)          # (HW, Cpad) f32

    # ---- folded BN(+bias) + residual add + ReLU; lane-dense (HW,128) store --
    out_ref[0] = jnp.maximum(
        y * s2_ref[...] + t2_ref[...] + res_ref[...], 0.0
    ).astype(out_ref.dtype)


# ---------------------------------------------------------------------------
# Wrapper: NCHW in / NCHW out, like the PyTorch module
# ---------------------------------------------------------------------------
def resblock_forward(x_nchw, params):
    N, Cin, H, W = x_nchw.shape
    KH, KW, wCin, Cout = params["w1"].shape
    assert KH == KW and wCin == Cin
    K = KH
    assert K % 2 == 1, "only odd kernel sizes give 'same' padding (K//2)"
    pad1 = K // 2
    Kp = max(K, 3)                     # shared front window (conv1 + 3x3 size_fix)
    pad_x = Kp // 2                    # one spatial pad of x serves both convs
    Cpad = max(LANE, _round_up(Cout, LANE))
    WL = _round_up(pad1, 8)            # sublane-aligned interior column in hpad

    # NCHW -> NHWC; pad x once on the host.
    x = jnp.transpose(x_nchw, (0, 2, 3, 1)).astype(jnp.float32)
    xp = jnp.pad(x, ((0, 0), (pad_x, pad_x), (pad_x, pad_x), (0, 0)))
    Hp, Wp = H + 2 * pad_x, W + 2 * pad_x

    def fold_bn(bn, bias, eps=1e-5):
        # eval-mode BN folded with the conv bias: y = conv(x)*scale + shift
        gamma, beta, mean, var = bn
        scale = gamma / jnp.sqrt(var + eps)
        shift = beta - mean * scale + bias * scale
        padc = (0, Cpad - Cout)
        return (jnp.pad(scale, padc).reshape(1, Cpad).astype(jnp.float32),
                jnp.pad(shift, padc).reshape(1, Cpad).astype(jnp.float32))

    s1, t1 = fold_bn(params["bn"], params["b1"])      # shared BN, conv1 bias
    s2, t2 = fold_bn(params["bn"], params["b2"])      # shared BN, conv2 bias
    sfx, tfx = fold_bn(params["bn_fix"], params["bf"])
    s_front = jnp.concatenate([s1, sfx], axis=1)      # (1, 2*Cpad)
    t_front = jnp.concatenate([t1, tfx], axis=1)

    def embed(w):  # (k,k,Cin,Cout) -> (Kp*Kp*Cin, Cpad); center-embed into Kp grid
        k = w.shape[0]
        d = (Kp - k) // 2
        w = jnp.pad(w, ((d, Kp - k - d), (d, Kp - k - d),
                        (0, 0), (0, Cpad - Cout)))
        return w.reshape(Kp * Kp * Cin, Cpad)

    # conv1 and size_fix weights merged along the output-channel axis.
    w_front = jnp.concatenate([embed(params["w1"]), embed(params["wf"])],
                              axis=1).astype(jnp.bfloat16)   # (Kp*Kp*Cin, 2*Cpad)

    w2m = jnp.pad(params["w2"],
                  ((0, 0), (0, 0), (0, Cpad - Cout), (0, Cpad - Cout)))
    w2m = w2m.reshape(K * K * Cpad, Cpad).astype(jnp.bfloat16)

    kernel = functools.partial(_resblock_kernel, H=H, W=W, K=K, Kp=Kp,
                               Cin=Cin, Cpad=Cpad, pad1=pad1, WL=WL)

    out = pl.pallas_call(
        kernel,
        out_shape=jax.ShapeDtypeStruct((N, H * W, Cpad), jnp.float32),
        grid_spec=pltpu.PrefetchScalarGridSpec(
            num_scalar_prefetch=0,
            grid=(N,),
            in_specs=[
                pl.BlockSpec((1, Hp, Wp, Cin), lambda n: (n, 0, 0, 0)),
                pl.BlockSpec((Kp * Kp * Cin, 2 * Cpad), lambda n: (0, 0)),
                pl.BlockSpec((1, 2 * Cpad), lambda n: (0, 0)),
                pl.BlockSpec((1, 2 * Cpad), lambda n: (0, 0)),
                pl.BlockSpec((K * K * Cpad, Cpad), lambda n: (0, 0)),
                pl.BlockSpec((1, Cpad), lambda n: (0, 0)),
                pl.BlockSpec((1, Cpad), lambda n: (0, 0)),
            ],
            out_specs=pl.BlockSpec((1, H * W, Cpad), lambda n: (n, 0, 0)),
            scratch_shapes=[
                pltpu.VMEM((H * W, Kp * Kp * Cin), jnp.float32),              # x im2col
                pltpu.VMEM((H + 2 * pad1, WL + W + pad1, Cpad), jnp.float32), # padded h
                pltpu.VMEM((H * W, K * K * Cpad), jnp.bfloat16),              # conv2 im2col
                pltpu.VMEM((H * W, Cpad), jnp.float32),                       # residual
            ],
        ),
        compiler_params=pltpu.CompilerParams(
            dimension_semantics=("parallel",)),   # batch axis shards over v7x's 2 TCs
    )(xp, w_front, s_front, t_front, w2m, s2, t2)

    out = out[:, :, :Cout].reshape(N, H, W, Cout)
    return jnp.transpose(out, (0, 3, 1, 2))       # NHWC -> NCHW


# ---------------------------------------------------------------------------
# Pure-JAX reference (same bf16-MXU / f32-accumulate precision as the kernel)
# ---------------------------------------------------------------------------
def _ref_conv(x_nhwc, w_hwio):
    return lax.conv_general_dilated(
        x_nhwc.astype(jnp.bfloat16), w_hwio.astype(jnp.bfloat16),
        window_strides=(1, 1), padding="SAME",
        dimension_numbers=("NHWC", "HWIO", "NHWC"),
        preferred_element_type=jnp.float32)


def resblock_reference(x_nchw, params):
    x = jnp.transpose(x_nchw, (0, 2, 3, 1))

    def fold(bn, eps=1e-5):
        g, b, m, v = bn
        s = g / jnp.sqrt(v + eps)
        return s, b - m * s

    s, t = fold(params["bn"])
    sf, tf = fold(params["bn_fix"])
    h = jnp.maximum((_ref_conv(x, params["w1"]) + params["b1"]) * s + t, 0.0)
    y = (_ref_conv(h, params["w2"]) + params["b2"]) * s + t
    r = (_ref_conv(x, params["wf"]) + params["bf"]) * sf + tf
    out = jnp.maximum(y + r, 0.0)
    return jnp.transpose(out, (0, 3, 1, 2))


# ---------------------------------------------------------------------------
# Deterministic parameter construction (shapes follow ResBlock.__init__)
# ---------------------------------------------------------------------------
def make_params(key, in_ch, out_ch, k):
    ks = jax.random.split(key, 12)

    def conv_w(subkey, cin, cout, ksz):
        # PyTorch (Cout, Cin, KH, KW) layout, transposed to HWIO
        w = 0.1 * jax.random.normal(subkey, (cout, cin, ksz, ksz), jnp.float32)
        return jnp.transpose(w, (2, 3, 1, 0))

    return {
        "w1": conv_w(ks[0], in_ch, out_ch, k),
        "b1": 0.05 * jax.random.normal(ks[1], (out_ch,), jnp.float32),
        "w2": conv_w(ks[2], out_ch, out_ch, k),
        "b2": 0.05 * jax.random.normal(ks[3], (out_ch,), jnp.float32),
        # shared BatchNorm2d(out_channels): gamma, beta, running_mean, running_var
        "bn": (1.0 + 0.1 * jax.random.normal(ks[4], (out_ch,), jnp.float32),
               0.1 * jax.random.normal(ks[5], (out_ch,), jnp.float32),
               0.1 * jax.random.normal(ks[6], (out_ch,), jnp.float32),
               1.0 + 0.1 * jax.nn.softplus(jax.random.normal(ks[7], (out_ch,), jnp.float32))),
        # size_fix = Conv2d(in, out, 3, pad=1) + BatchNorm2d(out)
        "wf": conv_w(ks[8], in_ch, out_ch, 3),
        "bf": 0.05 * jax.random.normal(ks[9], (out_ch,), jnp.float32),
        "bn_fix": (1.0 + 0.1 * jax.random.normal(ks[10], (out_ch,), jnp.float32),
                   0.1 * jax.random.normal(ks[11], (out_ch,), jnp.float32),
                   jnp.zeros((out_ch,), jnp.float32),
                   jnp.ones((out_ch,), jnp.float32)),
    }


if __name__ == "__main__":
    N, IN_CH, OUT_CH, H, W, K = 2, 4, 8, 16, 16, 3  # stride=1, batch_norm=True

    key = jax.random.PRNGKey(0)
    k_x, k_p = jax.random.split(key)
    x = jax.random.normal(k_x, (N, IN_CH, H, W), jnp.float32)   # NCHW, like PyTorch
    params = make_params(k_p, IN_CH, OUT_CH, K)

    fwd = jax.jit(resblock_forward)
    out = jax.block_until_ready(fwd(x, params))
    ref = jax.block_until_ready(resblock_reference(x, params))

    assert out.shape == (N, OUT_CH, H, W)
    # bf16 MXU in both paths; tolerance covers bf16 rounding-boundary flips of h.
    np.testing.assert_allclose(np.asarray(out), np.asarray(ref), atol=5e-3, rtol=5e-3)

    print("KERNEL_OK")
</pallas_src>

<mosaic_0001>
module attributes {stable_mosaic.version = 11 : i64} {
  func.func @_resblock_kernel(%arg0: i32, %arg1: memref<1x18x18x4xf32, #tpu.memory_space<vmem>>, %arg2: memref<36x256xbf16, #tpu.memory_space<vmem>>, %arg3: memref<1x256xf32, #tpu.memory_space<vmem>>, %arg4: memref<1x256xf32, #tpu.memory_space<vmem>>, %arg5: memref<1152x128xbf16, #tpu.memory_space<vmem>>, %arg6: memref<1x128xf32, #tpu.memory_space<vmem>>, %arg7: memref<1x128xf32, #tpu.memory_space<vmem>>, %arg8: memref<1x256x128xf32, #tpu.memory_space<vmem>>, %arg9: memref<256x36xf32, #tpu.memory_space<vmem>>, %arg10: memref<18x25x128xf32, #tpu.memory_space<vmem>>, %arg11: memref<256x1152xbf16, #tpu.memory_space<vmem>>, %arg12: memref<256x128xf32, #tpu.memory_space<vmem>>) attributes {dimension_semantics = [#tpu.dimension_semantics<parallel>], iteration_bounds = array<i64: 2>, scalar_prefetch = 0 : i64, scratch_operands = 4 : i64, tpu.core_type = #tpu.core_type<tc>, window_params = [{transform_indices = @transform_0, window_bounds = array<i64: 1, 18, 18, 4>}, {pipeline_mode = #tpu.pipeline_mode<synchronous>, transform_indices = @transform_1, window_bounds = array<i64: 36, 256>}, {pipeline_mode = #tpu.pipeline_mode<synchronous>, transform_indices = @transform_2, window_bounds = array<i64: 1, 256>}, {pipeline_mode = #tpu.pipeline_mode<synchronous>, transform_indices = @transform_3, window_bounds = array<i64: 1, 256>}, {pipeline_mode = #tpu.pipeline_mode<synchronous>, transform_indices = @transform_4, window_bounds = array<i64: 1152, 128>}, {pipeline_mode = #tpu.pipeline_mode<synchronous>, transform_indices = @transform_5, window_bounds = array<i64: 1, 128>}, {pipeline_mode = #tpu.pipeline_mode<synchronous>, transform_indices = @transform_6, window_bounds = array<i64: 1, 128>}, {transform_indices = @transform_7, window_bounds = array<i64: 1, 256, 128>}]} {
    %c0 = arith.constant 0 : index
    %c0_0 = arith.constant 0 : index
    %c0_1 = arith.constant 0 : index
    %c0_2 = arith.constant 0 : index
    %0 = vector.load %arg1[%c0, %c0_0, %c0_1, %c0_2] : memref<1x18x18x4xf32, #tpu.memory_space<vmem>>, vector<1x18x18x4xf32>
    %1 = vector.shape_cast %0 : vector<1x18x18x4xf32> to vector<18x18x4xf32>
    %2 = vector.extract_strided_slice %1 {offsets = [0, 0, 0], sizes = [16, 16, 4], strides = [1, 1, 1]} : vector<18x18x4xf32> to vector<16x16x4xf32>
    %3 = vector.shape_cast %2 : vector<16x16x4xf32> to vector<256x4xf32>
    %c0_3 = arith.constant 0 : index
    %c0_4 = arith.constant 0 : index
    %4 = vector.load %arg9[%c0_3, %c0_4] : memref<256x36xf32, #tpu.memory_space<vmem>>, vector<256x4xf32>
    tpu.vector_store %arg9[%c0_3, %c0_4], %3 {strides = array<i32>} : memref<256x36xf32, #tpu.memory_space<vmem>>, vector<256x4xf32>,
    %5 = vector.extract_strided_slice %1 {offsets = [0, 1, 0], sizes = [16, 16, 4], strides = [1, 1, 1]} : vector<18x18x4xf32> to vector<16x16x4xf32>
    %6 = vector.shape_cast %5 : vector<16x16x4xf32> to vector<256x4xf32>
    %c0_5 = arith.constant 0 : index
    %c4 = arith.constant 4 : index
    %7 = vector.load %arg9[%c0_5, %c4] : memref<256x36xf32, #tpu.memory_space<vmem>>, vector<256x4xf32>
    tpu.vector_store %arg9[%c0_5, %c4], %6 {strides = array<i32>} : memref<256x36xf32, #tpu.memory_space<vmem>>, vector<256x4xf32>,
    %8 = vector.extract_strided_slice %1 {offsets = [0, 2, 0], sizes = [16, 16, 4], strides = [1, 1, 1]} : vector<18x18x4xf32> to vector<16x16x4xf32>
    %9 = vector.shape_cast %8 : vector<16x16x4xf32> to vector<256x4xf32>
    %c0_6 = arith.constant 0 : index
    %c8 = arith.constant 8 : index
    %10 = vector.load %arg9[%c0_6, %c8] : memref<256x36xf32, #tpu.memory_space<vmem>>, vector<256x4xf32>
    tpu.vector_store %arg9[%c0_6, %c8], %9 {strides = array<i32>} : memref<256x36xf32, #tpu.memory_space<vmem>>, vector<256x4xf32>,
    %11 = vector.extract_strided_slice %1 {offsets = [1, 0, 0], sizes = [16, 16, 4], strides = [1, 1, 1]} : vector<18x18x4xf32> to vector<16x16x4xf32>
    %12 = vector.shape_cast %11 : vector<16x16x4xf32> to vector<256x4xf32>
    %c0_7 = arith.constant 0 : index
    %c12 = arith.constant 12 : index
    %13 = vector.load %arg9[%c0_7, %c12] : memref<256x36xf32, #tpu.memory_space<vmem>>, vector<256x4xf32>
    tpu.vector_store %arg9[%c0_7, %c12], %12 {strides = array<i32>} : memref<256x36xf32, #tpu.memory_space<vmem>>, vector<256x4xf32>,
    %14 = vector.extract_strided_slice %1 {offsets = [1, 1, 0], sizes = [16, 16, 4], strides = [1, 1, 1]} : vector<18x18x4xf32> to vector<16x16x4xf32>
    %15 = vector.shape_cast %14 : vector<16x16x4xf32> to vector<256x4xf32>
    %c0_8 = arith.constant 0 : index
    %c16 = arith.constant 16 : index
    %16 = vector.load %arg9[%c0_8, %c16] : memref<256x36xf32, #tpu.memory_space<vmem>>, vector<256x4xf32>
    tpu.vector_store %arg9[%c0_8, %c16], %15 {strides = array<i32>} : memref<256x36xf32, #tpu.memory_space<vmem>>, vector<256x4xf32>,
    %17 = vector.extract_strided_slice %1 {offsets = [1, 2, 0], sizes = [16, 16, 4], strides = [1, 1, 1]} : vector<18x18x4xf32> to vector<16x16x4xf32>
    %18 = vector.shape_cast %17 : vector<16x16x4xf32> to vector<256x4xf32>
    %c0_9 = arith.constant 0 : index
    %c20 = arith.constant 20 : index
    %19 = vector.load %arg9[%c0_9, %c20] : memref<256x36xf32, #tpu.memory_space<vmem>>, vector<256x4xf32>
    tpu.vector_store %arg9[%c0_9, %c20], %18 {strides = array<i32>} : memref<256x36xf32, #tpu.memory_space<vmem>>, vector<256x4xf32>,
    %20 = vector.extract_strided_slice %1 {offsets = [2, 0, 0], sizes = [16, 16, 4], strides = [1, 1, 1]} : vector<18x18x4xf32> to vector<16x16x4xf32>
    %21 = vector.shape_cast %20 : vector<16x16x4xf32> to vector<256x4xf32>
    %c0_10 = arith.constant 0 : index
    %c24 = arith.constant 24 : index
    %22 = vector.load %arg9[%c0_10, %c24] : memref<256x36xf32, #tpu.memory_space<vmem>>, vector<256x4xf32>
    tpu.vector_store %arg9[%c0_10, %c24], %21 {strides = array<i32>} : memref<256x36xf32, #tpu.memory_space<vmem>>, vector<256x4xf32>,
    %23 = vector.extract_strided_slice %1 {offsets = [2, 1, 0], sizes = [16, 16, 4], strides = [1, 1, 1]} : vector<18x18x4xf32> to vector<16x16x4xf32>
    %24 = vector.shape_cast %23 : vector<16x16x4xf32> to vector<256x4xf32>
    %c0_11 = arith.constant 0 : index
    %c28 = arith.constant 28 : index
    %25 = vector.load %arg9[%c0_11, %c28] : memref<256x36xf32, #tpu.memory_space<vmem>>, vector<256x4xf32>
    tpu.vector_store %arg9[%c0_11, %c28], %24 {strides = array<i32>} : memref<256x36xf32, #tpu.memory_space<vmem>>, vector<256x4xf32>,
    %26 = vector.extract_strided_slice %1 {offsets = [2, 2, 0], sizes = [16, 16, 4], strides = [1, 1, 1]} : vector<18x18x4xf32> to vector<16x16x4xf32>
    %27 = vector.shape_cast %26 : vector<16x16x4xf32> to vector<256x4xf32>
    %c0_12 = arith.constant 0 : index
    %c32 = arith.constant 32 : index
    %28 = vector.load %arg9[%c0_12, %c32] : memref<256x36xf32, #tpu.memory_space<vmem>>, vector<256x4xf32>
    tpu.vector_store %arg9[%c0_12, %c32], %27 {strides = array<i32>} : memref<256x36xf32, #tpu.memory_space<vmem>>, vector<256x4xf32>,
    %c0_13 = arith.constant 0 : index
    %c0_14 = arith.constant 0 : index
    %29 = vector.load %arg9[%c0_13, %c0_14] : memref<256x36xf32, #tpu.memory_space<vmem>>, vector<256x36xf32>
    %30 = arith.truncf %29 : vector<256x36xf32> to vector<256x36xbf16>
    %c0_15 = arith.constant 0 : index
    %c0_16 = arith.constant 0 : index
    %31 = vector.load %arg2[%c0_15, %c0_16] : memref<36x256xbf16, #tpu.memory_space<vmem>>, vector<36x256xbf16>
    %cst = arith.constant dense<0.000000e+00> : vector<256x256xf32>
    %32 = tpu.matmul %30, %31, %cst {dimension_numbers = #tpu.dot_dimension_numbers<[1], [0], [0], [1], [0, 0, 1, 1], [], []>} : vector<256x36xbf16>, vector<36x256xbf16>, vector<256x256xf32> -> vector<256x256xf32>
    %c0_17 = arith.constant 0 : index
    %c0_18 = arith.constant 0 : index
    %33 = vector.load %arg3[%c0_17, %c0_18] : memref<1x256xf32, #tpu.memory_space<vmem>>, vector<1x256xf32>
    %34 = vector.broadcast %33 : vector<1x256xf32> to vector<256x256xf32>
    %35 = arith.mulf %32, %34 : vector<256x256xf32>
    %c0_19 = arith.constant 0 : index
    %c0_20 = arith.constant 0 : index
    %36 = vector.load %arg4[%c0_19, %c0_20] : memref<1x256xf32, #tpu.memory_space<vmem>>, vector<1x256xf32>
    %37 = vector.broadcast %36 : vector<1x256xf32> to vector<256x256xf32>
    %38 = arith.addf %35, %37 : vector<256x256xf32>
    %39 = vector.extract_strided_slice %38 {offsets = [0, 0], sizes = [256, 128], strides = [1, 1]} : vector<256x256xf32> to vector<256x128xf32>
    %cst_21 = arith.constant 0.000000e+00 : f32
    %40 = vector.broadcast %cst_21 : f32 to vector<256x128xf32>
    %41 = arith.maximumf %39, %40 : vector<256x128xf32>
    %42 = vector.extract_strided_slice %38 {offsets = [0, 128], sizes = [256, 128], strides = [1, 1]} : vector<256x256xf32> to vector<256x128xf32>
    %c0_22 = arith.constant 0 : index
    %c0_23 = arith.constant 0 : index
    %43 = vector.load %arg12[%c0_22, %c0_23] : memref<256x128xf32, #tpu.memory_space<vmem>>, vector<256x128xf32>
    tpu.vector_store %arg12[%c0_22, %c0_23], %42 {strides = array<i32>} : memref<256x128xf32, #tpu.memory_space<vmem>>, vector<256x128xf32>,
    %cst_24 = arith.constant 0.000000e+00 : f32
    %44 = vector.broadcast %cst_24 : f32 to vector<1x25x128xf32>
    %cst_25 = arith.constant 0.000000e+00 : f32
    %45 = vector.broadcast %cst_25 : f32 to vector<18x1x128xf32>
    %c0_26 = arith.constant 0 : index
    %c0_27 = arith.constant 0 : index
    %c0_28 = arith.constant 0 : index
    %46 = vector.load %arg10[%c0_26, %c0_27, %c0_28] : memref<18x25x128xf32, #tpu.memory_space<vmem>>, vector<1x25x128xf32>
    tpu.vector_store %arg10[%c0_26, %c0_27, %c0_28], %44 {strides = array<i32>} : memref<18x25x128xf32, #tpu.memory_space<vmem>>, vector<1x25x128xf32>,
    %c17 = arith.constant 17 : index
    %c0_29 = arith.constant 0 : index
    %c0_30 = arith.constant 0 : index
    %47 = vector.load %arg10[%c17, %c0_29, %c0_30] : memref<18x25x128xf32, #tpu.memory_space<vmem>>, vector<1x25x128xf32>
    tpu.vector_store %arg10[%c17, %c0_29, %c0_30], %44 {strides = array<i32>} : memref<18x25x128xf32, #tpu.memory_space<vmem>>, vector<1x25x128xf32>,
    %c0_31 = arith.constant 0 : index
    %c7 = arith.constant 7 : index
    %c0_32 = arith.constant 0 : index
    %48 = vector.load %arg10[%c0_31, %c7, %c0_32] : memref<18x25x128xf32, #tpu.memory_space<vmem>>, vector<18x1x128xf32>
    tpu.vector_store %arg10[%c0_31, %c7, %c0_32], %45 {strides = array<i32>} : memref<18x25x128xf32, #tpu.memory_space<vmem>>, vector<18x1x128xf32>,
    %c0_33 = arith.constant 0 : index
    %c24_34 = arith.constant 24 : index
    %c0_35 = arith.constant 0 : index
    %49 = vector.load %arg10[%c0_33, %c24_34, %c0_35] : memref<18x25x128xf32, #tpu.memory_space<vmem>>, vector<18x1x128xf32>
    tpu.vector_store %arg10[%c0_33, %c24_34, %c0_35], %45 {strides = array<i32>} : memref<18x25x128xf32, #tpu.memory_space<vmem>>, vector<18x1x128xf32>,
    %50 = vector.shape_cast %41 : vector<256x128xf32> to vector<16x16x128xf32>
    %c1 = arith.constant 1 : index
    %c8_36 = arith.constant 8 : index
    %c0_37 = arith.constant 0 : index
    %51 = vector.load %arg10[%c1, %c8_36, %c0_37] : memref<18x25x128xf32, #tpu.memory_space<vmem>>, vector<16x16x128xf32>
    tpu.vector_store %arg10[%c1, %c8_36, %c0_37], %50 {strides = array<i32>} : memref<18x25x128xf32, #tpu.memory_space<vmem>>, vector<16x16x128xf32>,
    %c0_38 = arith.constant 0 : index
    %c7_39 = arith.constant 7 : index
    %c0_40 = arith.constant 0 : index
    %52 = vector.load %arg10[%c0_38, %c7_39, %c0_40] : memref<18x25x128xf32, #tpu.memory_space<vmem>>, vector<16x16x128xf32>
    %53 = vector.shape_cast %52 : vector<16x16x128xf32> to vector<256x128xf32>
    %54 = arith.truncf %53 : vector<256x128xf32> to vector<256x128xbf16>
    %c0_41 = arith.constant 0 : index
    %c0_42 = arith.constant 0 : index
    %55 = vector.load %arg11[%c0_41, %c0_42] : memref<256x1152xbf16, #tpu.memory_space<vmem>>, vector<256x128xbf16>
    tpu.vector_store %arg11[%c0_41, %c0_42], %54 {strides = array<i32>} : memref<256x1152xbf16, #tpu.memory_space<vmem>>, vector<256x128xbf16>,
    %c0_43 = arith.constant 0 : index
    %c8_44 = arith.constant 8 : index
    %c0_45 = arith.constant 0 : index
    %56 = vector.load %arg10[%c0_43, %c8_44, %c0_45] : memref<18x25x128xf32, #tpu.memory_space<vmem>>, vector<16x16x128xf32>
    %57 = vector.shape_cast %56 : vector<16x16x128xf32> to vector<256x128xf32>
    %58 = arith.truncf %57 : vector<256x128xf32> to vector<256x128xbf16>
    %c0_46 = arith.constant 0 : index
    %c128 = arith.constant 128 : index
    %59 = vector.load %arg11[%c0_46, %c128] : memref<256x1152xbf16, #tpu.memory_space<vmem>>, vector<256x128xbf16>
    tpu.vector_store %arg11[%c0_46, %c128], %58 {strides = array<i32>} : memref<256x1152xbf16, #tpu.memory_space<vmem>>, vector<256x128xbf16>,
    %c0_47 = arith.constant 0 : index
    %c9 = arith.constant 9 : index
    %c0_48 = arith.constant 0 : index
    %60 = vector.load %arg10[%c0_47, %c9, %c0_48] : memref<18x25x128xf32, #tpu.memory_space<vmem>>, vector<16x16x128xf32>
    %61 = vector.shape_cast %60 : vector<16x16x128xf32> to vector<256x128xf32>
    %62 = arith.truncf %61 : vector<256x128xf32> to vector<256x128xbf16>
    %c0_49 = arith.constant 0 : index
    %c256 = arith.constant 256 : index
    %63 = vector.load %arg11[%c0_49, %c256] : memref<256x1152xbf16, #tpu.memory_space<vmem>>, vector<256x128xbf16>
    tpu.vector_store %arg11[%c0_49, %c256], %62 {strides = array<i32>} : memref<256x1152xbf16, #tpu.memory_space<vmem>>, vector<256x128xbf16>,
    %c1_50 = arith.constant 1 : index
    %c7_51 = arith.constant 7 : index
    %c0_52 = arith.constant 0 : index
    %64 = vector.load %arg10[%c1_50, %c7_51, %c0_52] : memref<18x25x128xf32, #tpu.memory_space<vmem>>, vector<16x16x128xf32>
    %65 = vector.shape_cast %64 : vector<16x16x128xf32> to vector<256x128xf32>
    %66 = arith.truncf %65 : vector<256x128xf32> to vector<256x128xbf16>
    %c0_53 = arith.constant 0 : index
    %c384 = arith.constant 384 : index
    %67 = vector.load %arg11[%c0_53, %c384] : memref<256x1152xbf16, #tpu.memory_space<vmem>>, vector<256x128xbf16>
    tpu.vector_store %arg11[%c0_53, %c384], %66 {strides = array<i32>} : memref<256x1152xbf16, #tpu.memory_space<vmem>>, vector<256x128xbf16>,
    %c1_54 = arith.constant 1 : index
    %c8_55 = arith.constant 8 : index
    %c0_56 = arith.constant 0 : index
    %68 = vector.load %arg10[%c1_54, %c8_55, %c0_56] : memref<18x25x128xf32, #tpu.memory_space<vmem>>, vector<16x16x128xf32>
    %69 = vector.shape_cast %68 : vector<16x16x128xf32> to vector<256x128xf32>
    %70 = arith.truncf %69 : vector<256x128xf32> to vector<256x128xbf16>
    %c0_57 = arith.constant 0 : index
    %c512 = arith.constant 512 : index
    %71 = vector.load %arg11[%c0_57, %c512] : memref<256x1152xbf16, #tpu.memory_space<vmem>>, vector<256x128xbf16>
    tpu.vector_store %arg11[%c0_57, %c512], %70 {strides = array<i32>} : memref<256x1152xbf16, #tpu.memory_space<vmem>>, vector<256x128xbf16>,
    %c1_58 = arith.constant 1 : index
    %c9_59 = arith.constant 9 : index
    %c0_60 = arith.constant 0 : index
    %72 = vector.load %arg10[%c1_58, %c9_59, %c0_60] : memref<18x25x128xf32, #tpu.memory_space<vmem>>, vector<16x16x128xf32>
    %73 = vector.shape_cast %72 : vector<16x16x128xf32> to vector<256x128xf32>
    %74 = arith.truncf %73 : vector<256x128xf32> to vector<256x128xbf16>
    %c0_61 = arith.constant 0 : index
    %c640 = arith.constant 640 : index
    %75 = vector.load %arg11[%c0_61, %c640] : memref<256x1152xbf16, #tpu.memory_space<vmem>>, vector<256x128xbf16>
    tpu.vector_store %arg11[%c0_61, %c640], %74 {strides = array<i32>} : memref<256x1152xbf16, #tpu.memory_space<vmem>>, vector<256x128xbf16>,
    %c2 = arith.constant 2 : index
    %c7_62 = arith.constant 7 : index
    %c0_63 = arith.constant 0 : index
    %76 = vector.load %arg10[%c2, %c7_62, %c0_63] : memref<18x25x128xf32, #tpu.memory_space<vmem>>, vector<16x16x128xf32>
    %77 = vector.shape_cast %76 : vector<16x16x128xf32> to vector<256x128xf32>
    %78 = arith.truncf %77 : vector<256x128xf32> to vector<256x128xbf16>
    %c0_64 = arith.constant 0 : index
    %c768 = arith.constant 768 : index
    %79 = vector.load %arg11[%c0_64, %c768] : memref<256x1152xbf16, #tpu.memory_space<vmem>>, vector<256x128xbf16>
    tpu.vector_store %arg11[%c0_64, %c768], %78 {strides = array<i32>} : memref<256x1152xbf16, #tpu.memory_space<vmem>>, vector<256x128xbf16>,
    %c2_65 = arith.constant 2 : index
    %c8_66 = arith.constant 8 : index
    %c0_67 = arith.constant 0 : index
    %80 = vector.load %arg10[%c2_65, %c8_66, %c0_67] : memref<18x25x128xf32, #tpu.memory_space<vmem>>, vector<16x16x128xf32>
    %81 = vector.shape_cast %80 : vector<16x16x128xf32> to vector<256x128xf32>
    %82 = arith.truncf %81 : vector<256x128xf32> to vector<256x128xbf16>
    %c0_68 = arith.constant 0 : index
    %c896 = arith.constant 896 : index
    %83 = vector.load %arg11[%c0_68, %c896] : memref<256x1152xbf16, #tpu.memory_space<vmem>>, vector<256x128xbf16>
    tpu.vector_store %arg11[%c0_68, %c896], %82 {strides = array<i32>} : memref<256x1152xbf16, #tpu.memory_space<vmem>>, vector<256x128xbf16>,
    %c2_69 = arith.constant 2 : index
    %c9_70 = arith.constant 9 : index
    %c0_71 = arith.constant 0 : index
    %84 = vector.load %arg10[%c2_69, %c9_70, %c0_71] : memref<18x25x128xf32, #tpu.memory_space<vmem>>, vector<16x16x128xf32>
    %85 = vector.shape_cast %84 : vector<16x16x128xf32> to vector<256x128xf32>
    %86 = arith.truncf %85 : vector<256x128xf32> to vector<256x128xbf16>
    %c0_72 = arith.constant 0 : index
    %c1024 = arith.constant 1024 : index
    %87 = vector.load %arg11[%c0_72, %c1024] : memref<256x1152xbf16, #tpu.memory_space<vmem>>, vector<256x128xbf16>
    tpu.vector_store %arg11[%c0_72, %c1024], %86 {strides = array<i32>} : memref<256x1152xbf16, #tpu.memory_space<vmem>>, vector<256x128xbf16>,
    %c0_73 = arith.constant 0 : index
    %c0_74 = arith.constant 0 : index
    %88 = vector.load %arg11[%c0_73, %c0_74] : memref<256x1152xbf16, #tpu.memory_space<vmem>>, vector<256x1152xbf16>
    %c0_75 = arith.constant 0 : index
    %c0_76 = arith.constant 0 : index
    %89 = vector.load %arg5[%c0_75, %c0_76] : memref<1152x128xbf16, #tpu.memory_space<vmem>>, vector<1152x128xbf16>
    %cst_77 = arith.constant dense<0.000000e+00> : vector<256x128xf32>
    %90 = tpu.matmul %88, %89, %cst_77 {dimension_numbers = #tpu.dot_dimension_numbers<[1], [0], [0], [1], [0, 0, 1, 1], [], []>} : vector<256x1152xbf16>, vector<1152x128xbf16>, vector<256x128xf32> -> vector<256x128xf32>
    %c0_78 = arith.constant 0 : index
    %c0_79 = arith.constant 0 : index
    %91 = vector.load %arg6[%c0_78, %c0_79] : memref<1x128xf32, #tpu.memory_space<vmem>>, vector<1x128xf32>
    %92 = vector.broadcast %91 : vector<1x128xf32> to vector<256x128xf32>
    %93 = arith.mulf %90, %92 : vector<256x128xf32>
    %c0_80 = arith.constant 0 : index
    %c0_81 = arith.constant 0 : index
    %94 = vector.load %arg7[%c0_80, %c0_81] : memref<1x128xf32, #tpu.memory_space<vmem>>, vector<1x128xf32>
    %95 = vector.broadcast %94 : vector<1x128xf32> to vector<256x128xf32>
    %96 = arith.addf %93, %95 : vector<256x128xf32>
    %c0_82 = arith.constant 0 : index
    %c0_83 = arith.constant 0 : index
    %97 = vector.load %arg12[%c0_82, %c0_83] : memref<256x128xf32, #tpu.memory_space<vmem>>, vector<256x128xf32>
    %98 = arith.addf %96, %97 : vector<256x128xf32>
    %cst_84 = arith.constant 0.000000e+00 : f32
    %99 = vector.broadcast %cst_84 : f32 to vector<256x128xf32>
    %100 = arith.maximumf %98, %99 : vector<256x128xf32>
    %c0_85 = arith.constant 0 : index
    %c0_86 = arith.constant 0 : index
    %c0_87 = arith.constant 0 : index
    %101 = vector.load %arg8[%c0_85, %c0_86, %c0_87] : memref<1x256x128xf32, #tpu.memory_space<vmem>>, vector<1x256x128xf32>
    %102 = vector.shape_cast %101 : vector<1x256x128xf32> to vector<256x128xf32>
    %103 = vector.shape_cast %100 : vector<256x128xf32> to vector<1x256x128xf32>
    tpu.vector_store %arg8[%c0_85, %c0_86, %c0_87], %103 {strides = array<i32>} : memref<1x256x128xf32, #tpu.memory_space<vmem>>, vector<1x256x128xf32>,
    return
  }
  func.func @transform_0(%arg0: i32) -> (i32, i32, i32, i32) {
    %c0_i32 = arith.constant 0 : i32
    %c0_i32_0 = arith.constant 0 : i32
    %c0_i32_1 = arith.constant 0 : i32
    %c0_i32_2 = arith.constant 0 : i32
    return %arg0, %c0_i32, %c0_i32_0, %c0_i32_1 : i32, i32, i32, i32
  }
  func.func @transform_1(%arg0: i32) -> (i32, i32) {
    %c0_i32 = arith.constant 0 : i32
    %c0_i32_0 = arith.constant 0 : i32
    %c0_i32_1 = arith.constant 0 : i32
    return %c0_i32, %c0_i32_0 : i32, i32
  }
  func.func @transform_2(%arg0: i32) -> (i32, i32) {
    %c0_i32 = arith.constant 0 : i32
    %c0_i32_0 = arith.constant 0 : i32
    %c0_i32_1 = arith.constant 0 : i32
    return %c0_i32, %c0_i32_0 : i32, i32
  }
  func.func @transform_3(%arg0: i32) -> (i32, i32) {
    %c0_i32 = arith.constant 0 : i32
    %c0_i32_0 = arith.constant 0 : i32
    %c0_i32_1 = arith.constant 0 : i32
    return %c0_i32, %c0_i32_0 : i32, i32
  }
  func.func @transform_4(%arg0: i32) -> (i32, i32) {
    %c0_i32 = arith.constant 0 : i32
    %c0_i32_0 = arith.constant 0 : i32
    %c0_i32_1 = arith.constant 0 : i32
    return %c0_i32, %c0_i32_0 : i32, i32
  }
  func.func @transform_5(%arg0: i32) -> (i32, i32) {
    %c0_i32 = arith.constant 0 : i32
    %c0_i32_0 = arith.constant 0 : i32
    %c0_i32_1 = arith.constant 0 : i32
    return %c0_i32, %c0_i32_0 : i32, i32
  }
  func.func @transform_6(%arg0: i32) -> (i32, i32) {
    %c0_i32 = arith.constant 0 : i32
    %c0_i32_0 = arith.constant 0 : i32
    %c0_i32_1 = arith.constant 0 : i32
    return %c0_i32, %c0_i32_0 : i32, i32
  }
  func.func @transform_7(%arg0: i32) -> (i32, i32, i32) {
    %c0_i32 = arith.constant 0 : i32
    %c0_i32_0 = arith.constant 0 : i32
    %c0_i32_1 = arith.constant 0 : i32
    return %arg0, %c0_i32, %c0_i32_0 : i32, i32, i32
  }
}

</mosaic_0001>

<llo_original>
// kernel: resblock_forward.1
$region0: #{resblock_forward.1}
  #allocation0 [shape = 'u32[]', space=smem, size = 0x4, offset = 0x4, fixed_abs, tag = 'smem constant byte address 0x4 - core index']
  #allocation1 [shape = 'u32[72,128]{1,0:T(1,128)}', space=vmem, size = 0x9000, scoped, tag = 'internal scratch']
  #allocation2 [shape = 'f32[256,36]{1,0:T(8,128)}', space=vmem, size = 0x20000, scoped, tag = 'scratch operand']
  #allocation3 [shape = 'f32[18,25,128]{2,1,0:T(8,128)}', space=vmem, size = 0x48000, scoped, tag = 'scratch operand']
  #allocation4 [shape = 'bf16[256,1152]{1,0:T(8,128)(2,1)}', space=vmem, size = 0x90000, scoped, tag = 'scratch operand']
  #allocation5 [shape = 'f32[256,128]{1,0:T(8,128)}', space=vmem, size = 0x20000, scoped, tag = 'scratch operand']
  %s0 = inlined_call_operand.vmem [shape: f32[2,18,18,4], index: 0, kind: input, shape index: {}]
  %s1 = inlined_call_operand.vmem [shape: bf16[36,256], index: 1, kind: input, shape index: {}]
  %s2 = inlined_call_operand.vmem [shape: f32[1,256], index: 2, kind: input, shape index: {}]
  %s3 = inlined_call_operand.vmem [shape: f32[1,256], index: 3, kind: input, shape index: {}]
  %s4 = inlined_call_operand.vmem [shape: bf16[1152,128], index: 4, kind: input, shape index: {}]
  %s5 = inlined_call_operand.vmem [shape: f32[1,128], index: 5, kind: input, shape index: {}]
  %s6 = inlined_call_operand.vmem [shape: f32[1,128], index: 6, kind: input, shape index: {}]
  %s7 = inlined_call_operand.vmem [shape: f32[2,256,128], index: 7, kind: output, shape index: {}]
  %s8 = sld [smem:[#allocation0]]
  $region61: #{resblock_forward.1} parent=0
    _
  %s10 = ssub.s32 1, %s8
  %s11 = scalar_select 0, %s10, %s8
  loop: start=0, step=1, limit=4
  $region2: #{resblock_forward.1} parent=0 // loop_pre_header
    _
  $region3: #{resblock_forward.1} parent=0 // loop_header
    %s13 = sphi 0, %s17
    %p14 = scmp.ge.s32.totalorder %s13, 4
    %s23 = sphi 0, %s25
    %s26 = sphi 0, %s23
    %s27 = sphi 0, %s26
    %s43 = sphi 0, %s27
    %s47 = sphi 0, %s47
    %s49 = sphi 0, %s47
    %s50 = sphi 0, %s49
    %s64 = sphi 0, %s50
    %s68 = sphi 0, %s68
    %s70 = sphi 0, %s68
    %s71 = sphi 0, %s70
    %s85 = sphi 0, %s71
    %s89 = sphi 0, %s89
    %s91 = sphi 0, %s89
    %s92 = sphi 0, %s91
    %s106 = sphi 0, %s92
    %s110 = sphi 0, %s110
    %s112 = sphi 0, %s110
    %s113 = sphi 0, %s112
    %s127 = sphi 0, %s113
    %s131 = sphi 0, %s131
    %s133 = sphi 0, %s131
    %s134 = sphi 0, %s133
    %s148 = sphi 0, %s134
    %s152 = sphi 0, %s152
    %s154 = sphi 0, %s152
    %s155 = sphi 0, %s154
    %s169 = sphi 0, %s155
    %s175 = sphi 0, %s177
    %s178 = sphi 0, %s175
    %s179 = sphi 0, %s178
    %s195 = sphi 0, %s179
  $region4: #{resblock_forward.1} parent=0 // loop_header_branch
    %16 = sbr.rel (%p14) target = $region8
  $region5: #{resblock_forward.1} parent=0 // loop_body
    %s18 = ssub.s32 %s13, 1
    %s19 = ssub.s32 %s13, 2
    %s20 = sadd.s32 %s13, 1
    %s21 = ssub.s32 %s13, %s20
    %p22 = scmp.eq.s32.totalorder %s21, 0
    %s24 = sadd.s32 %s23, 1
    %s25 = scalar_select %p22, %s23, %s24
    %p28 = pneg %p22
    %p29 = scmp.eq.s32.totalorder %s13, 1
    %p30 = por %p28, %p29
    %p31 = scmp.ne.s32.totalorder %s23, %s26
    %p32 = scmp.eq.s32.totalorder %s13, 0
    %p33 = por %p31, %p32
    %p34 = scmp.ne.s32.totalorder %s23, %s26
    %p35 = scmp.eq.s32.totalorder %s18, 1
    %p36 = por %p34, %p35
    %p37 = scmp.ne.s32.totalorder %s26, %s27
    %p38 = scmp.eq.s32.totalorder %s18, 0
    %p39 = por %p37, %p38
    %p40 = scmp.ne.s32.totalorder %s26, %s27
    %p41 = scmp.eq.s32.totalorder %s19, 1
    %p42 = por %p40, %p41
    %p44 = scmp.ne.s32.totalorder %s27, %s43
    %p45 = scmp.eq.s32.totalorder %s19, 0
    %p46 = por %p44, %p45
    %s48 = sadd.s32 %s47, 1
    %p51 = scmp.eq.s32.totalorder %s13, 1
    %p52 = scmp.ne.s32.totalorder %s47, %s49
    %p53 = scmp.eq.s32.totalorder %s13, 0
    %p54 = por %p52, %p53
    %p55 = scmp.ne.s32.totalorder %s47, %s49
    %p56 = scmp.eq.s32.totalorder %s18, 1
    %p57 = por %p55, %p56
    %p58 = scmp.ne.s32.totalorder %s49, %s50
    %p59 = scmp.eq.s32.totalorder %s18, 0
    %p60 = por %p58, %p59
    %p61 = scmp.ne.s32.totalorder %s49, %s50
    %p62 = scmp.eq.s32.totalorder %s19, 1
    %p63 = por %p61, %p62
    %p65 = scmp.ne.s32.totalorder %s50, %s64
    %p66 = scmp.eq.s32.totalorder %s19, 0
    %p67 = por %p65, %p66
    %s69 = sadd.s32 %s68, 1
    %p72 = scmp.eq.s32.totalorder %s13, 1
    %p73 = scmp.ne.s32.totalorder %s68, %s70
    %p74 = scmp.eq.s32.totalorder %s13, 0
    %p75 = por %p73, %p74
    %p76 = scmp.ne.s32.totalorder %s68, %s70
    %p77 = scmp.eq.s32.totalorder %s18, 1
    %p78 = por %p76, %p77
    %p79 = scmp.ne.s32.totalorder %s70, %s71
    %p80 = scmp.eq.s32.totalorder %s18, 0
    %p81 = por %p79, %p80
    %p82 = scmp.ne.s32.totalorder %s70, %s71
    %p83 = scmp.eq.s32.totalorder %s19, 1
    %p84 = por %p82, %p83
    %p86 = scmp.ne.s32.totalorder %s71, %s85
    %p87 = scmp.eq.s32.totalorder %s19, 0
    %p88 = por %p86, %p87
    %s90 = sadd.s32 %s89, 1
    %p93 = scmp.eq.s32.totalorder %s13, 1
    %p94 = scmp.ne.s32.totalorder %s89, %s91
    %p95 = scmp.eq.s32.totalorder %s13, 0
    %p96 = por %p94, %p95
    %p97 = scmp.ne.s32.totalorder %s89, %s91
    %p98 = scmp.eq.s32.totalorder %s18, 1
    %p99 = por %p97, %p98
    %p100 = scmp.ne.s32.totalorder %s91, %s92
    %p101 = scmp.eq.s32.totalorder %s18, 0
    %p102 = por %p100, %p101
    %p103 = scmp.ne.s32.totalorder %s91, %s92
    %p104 = scmp.eq.s32.totalorder %s19, 1
    %p105 = por %p103, %p104
    %p107 = scmp.ne.s32.totalorder %s92, %s106
    %p108 = scmp.eq.s32.totalorder %s19, 0
    %p109 = por %p107, %p108
    %s111 = sadd.s32 %s110, 1
    %p114 = scmp.eq.s32.totalorder %s13, 1
    %p115 = scmp.ne.s32.totalorder %s110, %s112
    %p116 = scmp.eq.s32.totalorder %s13, 0
    %p117 = por %p115, %p116
    %p118 = scmp.ne.s32.totalorder %s110, %s112
    %p119 = scmp.eq.s32.totalorder %s18, 1
    %p120 = por %p118, %p119
    %p121 = scmp.ne.s32.totalorder %s112, %s113
    %p122 = scmp.eq.s32.totalorder %s18, 0
    %p123 = por %p121, %p122
    %p124 = scmp.ne.s32.totalorder %s112, %s113
    %p125 = scmp.eq.s32.totalorder %s19, 1
    %p126 = por %p124, %p125
    %p128 = scmp.ne.s32.totalorder %s113, %s127
    %p129 = scmp.eq.s32.totalorder %s19, 0
    %p130 = por %p128, %p129
    %s132 = sadd.s32 %s131, 1
    %p135 = scmp.eq.s32.totalorder %s13, 1
    %p136 = scmp.ne.s32.totalorder %s131, %s133
    %p137 = scmp.eq.s32.totalorder %s13, 0
    %p138 = por %p136, %p137
    %p139 = scmp.ne.s32.totalorder %s131, %s133
    %p140 = scmp.eq.s32.totalorder %s18, 1
    %p141 = por %p139, %p140
    %p142 = scmp.ne.s32.totalorder %s133, %s134
    %p143 = scmp.eq.s32.totalorder %s18, 0
    %p144 = por %p142, %p143
    %p145 = scmp.ne.s32.totalorder %s133, %s134
    %p146 = scmp.eq.s32.totalorder %s19, 1
    %p147 = por %p145, %p146
    %p149 = scmp.ne.s32.totalorder %s134, %s148
    %p150 = scmp.eq.s32.totalorder %s19, 0
    %p151 = por %p149, %p150
    %s153 = sadd.s32 %s152, 1
    %p156 = scmp.eq.s32.totalorder %s13, 1
    %p157 = scmp.ne.s32.totalorder %s152, %s154
    %p158 = scmp.eq.s32.totalorder %s13, 0
    %p159 = por %p157, %p158
    %p160 = scmp.ne.s32.totalorder %s152, %s154
    %p161 = scmp.eq.s32.totalorder %s18, 1
    %p162 = por %p160, %p161
    %p163 = scmp.ne.s32.totalorder %s154, %s155
    %p164 = scmp.eq.s32.totalorder %s18, 0
    %p165 = por %p163, %p164
    %p166 = scmp.ne.s32.totalorder %s154, %s155
    %p167 = scmp.eq.s32.totalorder %s19, 1
    %p168 = por %p166, %p167
    %p170 = scmp.ne.s32.totalorder %s155, %s169
    %p171 = scmp.eq.s32.totalorder %s19, 0
    %p172 = por %p170, %p171
    %s173 = ssub.s32 %s13, %s20
    %p174 = scmp.eq.s32.totalorder %s173, 0
    %s176 = sadd.s32 %s175, 1
    %s177 = scalar_select %p174, %s175, %s176
    %p180 = pneg %p174
    %p181 = scmp.eq.s32.totalorder %s13, 1
    %p182 = por %p180, %p181
    %p183 = scmp.ne.s32.totalorder %s175, %s178
    %p184 = scmp.eq.s32.totalorder %s13, 0
    %p185 = por %p183, %p184
    %p186 = scmp.ne.s32.totalorder %s175, %s178
    %p187 = scmp.eq.s32.totalorder %s18, 1
    %p188 = por %p186, %p187
    %p189 = scmp.ne.s32.totalorder %s178, %s179
    %p190 = scmp.eq.s32.totalorder %s18, 0
    %p191 = por %p189, %p190
    %p192 = scmp.ne.s32.totalorder %s178, %s179
    %p193 = scmp.eq.s32.totalorder %s19, 1
    %p194 = por %p192, %p193
    %p196 = scmp.ne.s32.totalorder %s179, %s195
    %p197 = scmp.eq.s32.totalorder %s19, 0
    %p198 = por %p196, %p197
    %p199 = scmp.le.s32.totalorder 1, %s13
    %p200 = scmp.lt.s32.totalorder %s13, 3
    %p201 = pnand %p199, %p200
    %p202 = pneg %p201
    // Predicated region
    $region9: #{resblock_forward.1} parent=5 // pred_check
      _
    $region10: #{resblock_forward.1} parent=5 // pred_check_branch
      %204 = sbr.rel (%p201) target = $region12
    $region11: #{resblock_forward.1} parent=5 // pred_region
      %s205 = ssub.s32 %s13, 1
      // Predicated region
      $region13: #{resblock_forward.1} parent=11 // pred_check
        %p206 = pneg %p60
      $region14: #{resblock_forward.1} parent=11 // pred_check_branch
        %208 = sbr.rel (%p206) target = $region16
      $region15: #{resblock_forward.1} parent=11 // pred_region
        _
      $region16: #{resblock_forward.1} parent=11 // pred_fallthru
        _
      // Predicated region
      $region17: #{resblock_forward.1} parent=11 // pred_check
        %p209 = pneg %p81
      $region18: #{resblock_forward.1} parent=11 // pred_check_branch
        %211 = sbr.rel (%p209) target = $region20
      $region19: #{resblock_forward.1} parent=11 // pred_region
        _
      $region20: #{resblock_forward.1} parent=11 // pred_fallthru
        _
      // Predicated region
      $region21: #{resblock_forward.1} parent=11 // pred_check
        %p212 = pneg %p102
      $region22: #{resblock_forward.1} parent=11 // pred_check_branch
        %214 = sbr.rel (%p212) target = $region24
      $region23: #{resblock_forward.1} parent=11 // pred_region
        _
      $region24: #{resblock_forward.1} parent=11 // pred_fallthru
        _
      // Predicated region
      $region25: #{resblock_forward.1} parent=11 // pred_check
        %p215 = pneg %p123
      $region26: #{resblock_forward.1} parent=11 // pred_check_branch
        %217 = sbr.rel (%p215) target = $region28
      $region27: #{resblock_forward.1} parent=11 // pred_region
        _
      $region28: #{resblock_forward.1} parent=11 // pred_fallthru
        _
      // Predicated region
      $region29: #{resblock_forward.1} parent=11 // pred_check
        %p218 = pneg %p144
      $region30: #{resblock_forward.1} parent=11 // pred_check_branch
        %220 = sbr.rel (%p218) target = $region32
      $region31: #{resblock_forward.1} parent=11 // pred_region
        _
      $region32: #{resblock_forward.1} parent=11 // pred_fallthru
        _
      // Predicated region
      $region33: #{resblock_forward.1} parent=11 // pred_check
        %p221 = pneg %p165
      $region34: #{resblock_forward.1} parent=11 // pred_check_branch
        %223 = sbr.rel (%p221) target = $region36
      $region35: #{resblock_forward.1} parent=11 // pred_region
        _
      $region36: #{resblock_forward.1} parent=11 // pred_fallthru
        _
    $region12: #{resblock_forward.1} parent=5 // pred_fallthru
      _
    %p224 = scmp.lt.s32.totalorder %s13, 2
    // Predicated region
    $region37: #{resblock_forward.1} parent=5 // pred_check
      %p225 = pneg %p224
    $region38: #{resblock_forward.1} parent=5 // pred_check_branch
      %227 = sbr.rel (%p225) target = $region40
    $region39: #{resblock_forward.1} parent=5 // pred_region
      // Predicated region
      $region41: #{resblock_forward.1} parent=39 // pred_check
        %p228 = pneg %p33
      $region42: #{resblock_forward.1} parent=39 // pred_check_branch
        %230 = sbr.rel (%p228) target = $region44
      $region43: #{resblock_forward.1} parent=39 // pred_region
        %p231 = scmp.lt.s32.totalorder %s13, 1
        %s232 = scalar_select %p231, %s13, 1
        %s233 = smul.addr %s232, 54
        %s234 = smul.addr %s233, 8
        %s235 = scalar_lea.vmem %s0, %s234
      $region44: #{resblock_forward.1} parent=39 // pred_fallthru
        _
    $region40: #{resblock_forward.1} parent=5 // pred_fallthru
      _
    %p236 = scmp.le.s32.totalorder 1, %s13
    %p237 = scmp.lt.s32.totalorder %s13, 3
    %p238 = pnand %p236, %p237
    %p239 = pneg %p238
    // Predicated region
    $region45: #{resblock_forward.1} parent=5 // pred_check
      _
    $region46: #{resblock_forward.1} parent=5 // pred_check_branch
      %241 = sbr.rel (%p238) target = $region48
    $region47: #{resblock_forward.1} parent=5 // pred_region
      %s242 = ssub.s32 %s13, 1
      %p243 = scmp.lt.s32.totalorder %s18, 1
      %s244 = scalar_select %p243, %s18, 1
      %s245 = smul.addr %s244, 54
      %s246 = smul.addr %s245, 8
      %s247 = scalar_lea.vmem %s0, %s246
      %p248 = pneg %p39
      %p249 = pneg %p36
      %p250 = pneg %p60
      %p251 = pneg %p57
      %p252 = pneg %p81
      %p253 = pneg %p78
      %p254 = pneg %p102
      %p255 = pneg %p99
      %p256 = pneg %p123
      %p257 = pneg %p120
      %p258 = pneg %p144
      %p259 = pneg %p141
      %p260 = pneg %p165
      %p261 = pneg %p162
      %p262 = pneg %p191
      %p263 = pneg %p188
      %p264 = scmp.lt.s32.totalorder %s18, 1
      %s265 = scalar_select %p264, %s18, 1
      %s266 = smul.addr %s265, 32
      %s267 = smul.addr %s266, 8
      %s268 = scalar_lea.vmem %s7, %s267
      %p269 = scmp.lt.s32.totalorder %s18, 1
      %s270 = scalar_select %p269, %s18, 1
      %s271 = smul.addr %s270, 54
      %s272 = smul.addr %s271, 8
      %s273 = scalar_lea.vmem %s0, %s272
      %p274 = scmp.lt.s32.totalorder %s18, 1
      %s275 = scalar_select %p274, %s18, 1
      %s276 = smul.addr %s275, 32
      %s277 = smul.addr %s276, 8
      %s278 = scalar_lea.vmem %s7, %s277
      %v280 = vld [vmem:[%s273] sm:$0xff]
      %v281 = vld [vmem:[%s273 + $0x8] sm:$0xff]
      %v282 = vld [vmem:[%s273 + $0x10] sm:$0x3]
      %v283 = vld [vmem:[%s273 + $0x18] sm:$0xff]
      %v284 = vld [vmem:[%s273 + $0x20] sm:$0xff]
      %v285 = vld [vmem:[%s273 + $0x28] sm:$0x3]
      %v286 = vld [vmem:[%s273 + $0x30] sm:$0xff]
      %v287 = vld [vmem:[%s273 + $0x38] sm:$0xff]
      %v288 = vld [vmem:[%s273 + $0x40] sm:$0x3]
      %v289 = vld [vmem:[%s273 + $0x48] sm:$0xff]
      %v290 = vld [vmem:[%s273 + $0x50] sm:$0xff]
      %v291 = vld [vmem:[%s273 + $0x58] sm:$0x3]
      %v292 = vld [vmem:[%s273 + $0x60] sm:$0xff]
      %v293 = vld [vmem:[%s273 + $0x68] sm:$0xff]
      %v294 = vld [vmem:[%s273 + $0x70] sm:$0x3]
      %v295 = vld [vmem:[%s273 + $0x78] sm:$0xff]
      %v296 = vld [vmem:[%s273 + $0x80] sm:$0xff]
      %v297 = vld [vmem:[%s273 + $0x88] sm:$0x3]
      %v298 = vld [vmem:[%s273 + $0x90] sm:$0xff]
      %v299 = vld [vmem:[%s273 + $0x98] sm:$0xff]
      %v300 = vld [vmem:[%s273 + $0xa0] sm:$0x3]
      %v301 = vld [vmem:[%s273 + $0xa8] sm:$0xff]
      %v302 = vld [vmem:[%s273 + $0xb0] sm:$0xff]
      %v303 = vld [vmem:[%s273 + $0xb8] sm:$0x3]
      %v304 = vld [vmem:[%s273 + $0xc0] sm:$0xff]
      %v305 = vld [vmem:[%s273 + $0xc8] sm:$0xff]
      %v306 = vld [vmem:[%s273 + $0xd0] sm:$0x3]
      %v307 = vld [vmem:[%s273 + $0xd8] sm:$0xff]
      %v308 = vld [vmem:[%s273 + $0xe0] sm:$0xff]
      %v309 = vld [vmem:[%s273 + $0xe8] sm:$0x3]
      %v310 = vld [vmem:[%s273 + $0xf0] sm:$0xff]
      %v311 = vld [vmem:[%s273 + $0xf8] sm:$0xff]
      %v312 = vld [vmem:[%s273 + $0x100] sm:$0x3]
      %v313 = vld [vmem:[%s273 + $0x108] sm:$0xff]
      %v314 = vld [vmem:[%s273 + $0x110] sm:$0xff]
      %v315 = vld [vmem:[%s273 + $0x118] sm:$0x3]
      %v316 = vld [vmem:[%s273 + $0x120] sm:$0xff]
      %v317 = vld [vmem:[%s273 + $0x128] sm:$0xff]
      %v318 = vld [vmem:[%s273 + $0x130] sm:$0x3]
      %v319 = vld [vmem:[%s273 + $0x138] sm:$0xff]
      %v320 = vld [vmem:[%s273 + $0x140] sm:$0xff]
      %v321 = vld [vmem:[%s273 + $0x148] sm:$0x3]
      %v322 = vld [vmem:[%s273 + $0x150] sm:$0xff]
      %v323 = vld [vmem:[%s273 + $0x158] sm:$0xff]
      %v324 = vld [vmem:[%s273 + $0x160] sm:$0x3]
      %v325 = vld [vmem:[%s273 + $0x168] sm:$0xff]
      %v326 = vld [vmem:[%s273 + $0x170] sm:$0xff]
      %v327 = vld [vmem:[%s273 + $0x178] sm:$0x3]
      %v328 = vld [vmem:[%s273 + $0x180] sm:$0xff]
      %v329 = vld [vmem:[%s273 + $0x188] sm:$0xff]
      %v330 = vld [vmem:[%s273 + $0x190] sm:$0x3]
      %v331 = vld [vmem:[%s273 + $0x198] sm:$0xff]
      %v332 = vld [vmem:[%s273 + $0x1a0] sm:$0xff]
      %v333 = vld [vmem:[%s273 + $0x1a8] sm:$0x3]
      %vm334 = vcmask 31744
      %335 = vst.msk [vmem:[#allocation2] sm:$0xff] %vm334, %v280
      %336 = vst.msk [vmem:[#allocation2 + $0x8] sm:$0xff] %vm334, %v281
      %337 = vst.msk [vmem:[#allocation2 + $0x10] sm:$0xff] %vm334, %v283
      %338 = vst.msk [vmem:[#allocation2 + $0x18] sm:$0xff] %vm334, %v284
      %339 = vst.msk [vmem:[#allocation2 + $0x20] sm:$0xff] %vm334, %v286
      %340 = vst.msk [vmem:[#allocation2 + $0x28] sm:$0xff] %vm334, %v287
      %341 = vst.msk [vmem:[#allocation2 + $0x30] sm:$0xff] %vm334, %v289
      %342 = vst.msk [vmem:[#allocation2 + $0x38] sm:$0xff] %vm334, %v290
      %343 = vst.msk [vmem:[#allocation2 + $0x40] sm:$0xff] %vm334, %v292
      %344 = vst.msk [vmem:[#allocation2 + $0x48] sm:$0xff] %vm334, %v293
      %345 = vst.msk [vmem:[#allocation2 + $0x50] sm:$0xff] %vm334, %v295
      %346 = vst.msk [vmem:[#allocation2 + $0x58] sm:$0xff] %vm334, %v296
      %347 = vst.msk [vmem:[#allocation2 + $0x60] sm:$0xff] %vm334, %v298
      %348 = vst.msk [vmem:[#allocation2 + $0x68] sm:$0xff] %vm334, %v299
      %349 = vst.msk [vmem:[#allocation2 + $0x70] sm:$0xff] %vm334, %v301
      %350 = vst.msk [vmem:[#allocation2 + $0x78] sm:$0xff] %vm334, %v302
      %351 = vst.msk [vmem:[#allocation2 + $0x80] sm:$0xff] %vm334, %v304
      %352 = vst.msk [vmem:[#allocation2 + $0x88] sm:$0xff] %vm334, %v305
      %353 = vst.msk [vmem:[#allocation2 + $0x90] sm:$0xff] %vm334, %v307
      %354 = vst.msk [vmem:[#allocation2 + $0x98] sm:$0xff] %vm334, %v308
      %355 = vst.msk [vmem:[#allocation2 + $0xa0] sm:$0xff] %vm334, %v310
      %356 = vst.msk [vmem:[#allocation2 + $0xa8] sm:$0xff] %vm334, %v311
      %357 = vst.msk [vmem:[#allocation2 + $0xb0] sm:$0xff] %vm334, %v313
      %358 = vst.msk [vmem:[#allocation2 + $0xb8] sm:$0xff] %vm334, %v314
      %359 = vst.msk [vmem:[#allocation2 + $0xc0] sm:$0xff] %vm334, %v316
      %360 = vst.msk [vmem:[#allocation2 + $0xc8] sm:$0xff] %vm334, %v317
      %361 = vst.msk [vmem:[#allocation2 + $0xd0] sm:$0xff] %vm334, %v319
      %362 = vst.msk [vmem:[#allocation2 + $0xd8] sm:$0xff] %vm334, %v320
      %363 = vst.msk [vmem:[#allocation2 + $0xe0] sm:$0xff] %vm334, %v322
      %364 = vst.msk [vmem:[#allocation2 + $0xe8] sm:$0xff] %vm334, %v323
      %365 = vst.msk [vmem:[#allocation2 + $0xf0] sm:$0xff] %vm334, %v325
      %366 = vst.msk [vmem:[#allocation2 + $0xf8] sm:$0xff] %vm334, %v326
      %vm415 = vcmask 1046528
      %v416 = vrot.slane %v280, 1
      %v417 = vrot.slane %v281, 1
      %v418 = vsel %vm415, %v416, %v417
      %v419 = vrot.slane %v282, 1
      %v420 = vsel %vm415, %v417, %v419
      %v421 = vrot.slane %v283, 1
      %v422 = vrot.slane %v284, 1
      %v423 = vsel %vm415, %v421, %v422
      %v424 = vrot.slane %v285, 1
      %v425 = vsel %vm415, %v422, %v424
      %v426 = vrot.slane %v286, 1
      %v427 = vrot.slane %v287, 1
      %v428 = vsel %vm415, %v426, %v427
      %v429 = vrot.slane %v288, 1
      %v430 = vsel %vm415, %v427, %v429
      %v431 = vrot.slane %v289, 1
      %v432 = vrot.slane %v290, 1
      %v433 = vsel %vm415, %v431, %v432
      %v434 = vrot.slane %v291, 1
      %v435 = vsel %vm415, %v432, %v434
      %v436 = vrot.slane %v292, 1
      %v437 = vrot.slane %v293, 1
      %v438 = vsel %vm415, %v436, %v437
      %v439 = vrot.slane %v294, 1
      %v440 = vsel %vm415, %v437, %v439
      %v441 = vrot.slane %v295, 1
      %v442 = vrot.slane %v296, 1
      %v443 = vsel %vm415, %v441, %v442
      %v444 = vrot.slane %v297, 1
      %v445 = vsel %vm415, %v442, %v444
      %v446 = vrot.slane %v298, 1
      %v447 = vrot.slane %v299, 1
      %v448 = vsel %vm415, %v446, %v447
      %v449 = vrot.slane %v300, 1
      %v450 = vsel %vm415, %v447, %v449
      %v451 = vrot.slane %v301, 1
      %v452 = vrot.slane %v302, 1
      %v453 = vsel %vm415, %v451, %v452
      %v454 = vrot.slane %v303, 1
      %v455 = vsel %vm415, %v452, %v454
      %v456 = vrot.slane %v304, 1
      %v457 = vrot.slane %v305, 1
      %v458 = vsel %vm415, %v456, %v457
      %v459 = vrot.slane %v306, 1
      %v460 = vsel %vm415, %v457, %v459
      %v461 = vrot.slane %v307, 1
      %v462 = vrot.slane %v308, 1
      %v463 = vsel %vm415, %v461, %v462
      %v464 = vrot.slane %v309, 1
      %v465 = vsel %vm415, %v462, %v464
      %v466 = vrot.slane %v310, 1
      %v467 = vrot.slane %v311, 1
      %v468 = vsel %vm415, %v466, %v467
      %v469 = vrot.slane %v312, 1
      %v470 = vsel %vm415, %v467, %v469
      %v471 = vrot.slane %v313, 1
      %v472 = vrot.slane %v314, 1
      %v473 = vsel %vm415, %v471, %v472
      %v474 = vrot.slane %v315, 1
      %v475 = vsel %vm415, %v472, %v474
      %v476 = vrot.slane %v316, 1
      %v477 = vrot.slane %v317, 1
      %v478 = vsel %vm415, %v476, %v477
      %v479 = vrot.slane %v318, 1
      %v480 = vsel %vm415, %v477, %v479
      %v481 = vrot.slane %v319, 1
      %v482 = vrot.slane %v320, 1
      %v483 = vsel %vm415, %v481, %v482
      %v484 = vrot.slane %v321, 1
      %v485 = vsel %vm415, %v482, %v484
      %v486 = vrot.slane %v322, 1
      %v487 = vrot.slane %v323, 1
      %v488 = vsel %vm415, %v486, %v487
      %v489 = vrot.slane %v324, 1
      %v490 = vsel %vm415, %v487, %v489
      %v491 = vrot.slane %v325, 1
      %v492 = vrot.slane %v326, 1
      %v493 = vsel %vm415, %v491, %v492
      %v494 = vrot.slane %v327, 1
      %v495 = vsel %vm415, %v492, %v494
      %496 = vrot.lane.b32.xlu0 %v418, 4
      %v497 = vpop.permute.xlu0 %496
      %498 = vrot.lane.b32.xlu0 %v420, 4
      %v499 = vpop.permute.xlu0 %498
      %500 = vrot.lane.b32.xlu0 %v423, 4
      %v501 = vpop.permute.xlu0 %500
      %502 = vrot.lane.b32.xlu0 %v425, 4
      %v503 = vpop.permute.xlu0 %502
      %504 = vrot.lane.b32.xlu0 %v428, 4
      %v505 = vpop.permute.xlu0 %504
      %506 = vrot.lane.b32.xlu0 %v430, 4
      %v507 = vpop.permute.xlu0 %506
      %508 = vrot.lane.b32.xlu0 %v433, 4
      %v509 = vpop.permute.xlu0 %508
      %510 = vrot.lane.b32.xlu0 %v435, 4
      %v511 = vpop.permute.xlu0 %510
      %512 = vrot.lane.b32.xlu0 %v438, 4
      %v513 = vpop.permute.xlu0 %512
      %514 = vrot.lane.b32.xlu0 %v440, 4
      %v515 = vpop.permute.xlu0 %514
      %516 = vrot.lane.b32.xlu0 %v443, 4
      %v517 = vpop.permute.xlu0 %516
      %518 = vrot.lane.b32.xlu0 %v445, 4
      %v519 = vpop.permute.xlu0 %518
      %520 = vrot.lane.b32.xlu0 %v448, 4
      %v521 = vpop.permute.xlu0 %520
      %522 = vrot.lane.b32.xlu0 %v450, 4
      %v523 = vpop.permute.xlu0 %522
      %524 = vrot.lane.b32.xlu0 %v453, 4
      %v525 = vpop.permute.xlu0 %524
      %526 = vrot.lane.b32.xlu0 %v455, 4
      %v527 = vpop.permute.xlu0 %526
      %528 = vrot.lane.b32.xlu0 %v458, 4
      %v529 = vpop.permute.xlu0 %528
      %530 = vrot.lane.b32.xlu0 %v460, 4
      %v531 = vpop.permute.xlu0 %530
      %532 = vrot.lane.b32.xlu0 %v463, 4
      %v533 = vpop.permute.xlu0 %532
      %534 = vrot.lane.b32.xlu0 %v465, 4
      %v535 = vpop.permute.xlu0 %534
      %536 = vrot.lane.b32.xlu0 %v468, 4
      %v537 = vpop.permute.xlu0 %536
      %538 = vrot.lane.b32.xlu0 %v470, 4
      %v539 = vpop.permute.xlu0 %538
      %540 = vrot.lane.b32.xlu0 %v473, 4
      %v541 = vpop.permute.xlu0 %540
      %542 = vrot.lane.b32.xlu0 %v475, 4
      %v543 = vpop.permute.xlu0 %542
      %544 = vrot.lane.b32.xlu0 %v478, 4
      %v545 = vpop.permute.xlu0 %544
      %546 = vrot.lane.b32.xlu0 %v480, 4
      %v547 = vpop.permute.xlu0 %546
      %548 = vrot.lane.b32.xlu0 %v483, 4
      %v549 = vpop.permute.xlu0 %548
      %550 = vrot.lane.b32.xlu0 %v485, 4
      %v551 = vpop.permute.xlu0 %550
      %552 = vrot.lane.b32.xlu0 %v488, 4
      %v553 = vpop.permute.xlu0 %552
      %554 = vrot.lane.b32.xlu0 %v490, 4
      %v555 = vpop.permute.xlu0 %554
      %556 = vrot.lane.b32.xlu0 %v493, 4
      %v557 = vpop.permute.xlu0 %556
      %558 = vrot.lane.b32.xlu0 %v495, 4
      %v559 = vpop.permute.xlu0 %558
      %vm592 = vcmask 64544
      %593 = vst.msk [vmem:[#allocation2] sm:$0xff] %vm592, %v497
      %594 = vst.msk [vmem:[#allocation2 + $0x8] sm:$0xff] %vm592, %v499
      %595 = vst.msk [vmem:[#allocation2 + $0x10] sm:$0xff] %vm592, %v501
      %596 = vst.msk [vmem:[#allocation2 + $0x18] sm:$0xff] %vm592, %v503
      %597 = vst.msk [vmem:[#allocation2 + $0x20] sm:$0xff] %vm592, %v505
      %598 = vst.msk [vmem:[#allocation2 + $0x28] sm:$0xff] %vm592, %v507
      %599 = vst.msk [vmem:[#allocation2 + $0x30] sm:$0xff] %vm592, %v509
      %600 = vst.msk [vmem:[#allocation2 + $0x38] sm:$0xff] %vm592, %v511
      %601 = vst.msk [vmem:[#allocation2 + $0x40] sm:$0xff] %vm592, %v513
      %602 = vst.msk [vmem:[#allocation2 + $0x48] sm:$0xff] %vm592, %v515
      %603 = vst.msk [vmem:[#allocation2 + $0x50] sm:$0xff] %vm592, %v517
      %604 = vst.msk [vmem:[#allocation2 + $0x58] sm:$0xff] %vm592, %v519
      %605 = vst.msk [vmem:[#allocation2 + $0x60] sm:$0xff] %vm592, %v521
      %606 = vst.msk [vmem:[#allocation2 + $0x68] sm:$0xff] %vm592, %v523
      %607 = vst.msk [vmem:[#allocation2 + $0x70] sm:$0xff] %vm592, %v525
      %608 = vst.msk [vmem:[#allocation2 + $0x78] sm:$0xff] %vm592, %v527
      %609 = vst.msk [vmem:[#allocation2 + $0x80] sm:$0xff] %vm592, %v529
      %610 = vst.msk [vmem:[#allocation2 + $0x88] sm:$0xff] %vm592, %v531
      %611 = vst.msk [vmem:[#allocation2 + $0x90] sm:$0xff] %vm592, %v533
      %612 = vst.msk [vmem:[#allocation2 + $0x98] sm:$0xff] %vm592, %v535
      %613 = vst.msk [vmem:[#allocation2 + $0xa0] sm:$0xff] %vm592, %v537
      %614 = vst.msk [vmem:[#allocation2 + $0xa8] sm:$0xff] %vm592, %v539
      %615 = vst.msk [vmem:[#allocation2 + $0xb0] sm:$0xff] %vm592, %v541
      %616 = vst.msk [vmem:[#allocation2 + $0xb8] sm:$0xff] %vm592, %v543
      %617 = vst.msk [vmem:[#allocation2 + $0xc0] sm:$0xff] %vm592, %v545
      %618 = vst.msk [vmem:[#allocation2 + $0xc8] sm:$0xff] %vm592, %v547
      %619 = vst.msk [vmem:[#allocation2 + $0xd0] sm:$0xff] %vm592, %v549
      %620 = vst.msk [vmem:[#allocation2 + $0xd8] sm:$0xff] %vm592, %v551
      %621 = vst.msk [vmem:[#allocation2 + $0xe0] sm:$0xff] %vm592, %v553
      %622 = vst.msk [vmem:[#allocation2 + $0xe8] sm:$0xff] %vm592, %v555
      %623 = vst.msk [vmem:[#allocation2 + $0xf0] sm:$0xff] %vm592, %v557
      %624 = vst.msk [vmem:[#allocation2 + $0xf8] sm:$0xff] %vm592, %v559
      %vm625 = vcmask 1045504
      %v626 = vrot.slane %v280, 2
      %v627 = vrot.slane %v281, 2
      %v628 = vsel %vm625, %v626, %v627
      %v629 = vrot.slane %v282, 2
      %v630 = vsel %vm625, %v627, %v629
      %v631 = vrot.slane %v283, 2
      %v632 = vrot.slane %v284, 2
      %v633 = vsel %vm625, %v631, %v632
      %v634 = vrot.slane %v285, 2
      %v635 = vsel %vm625, %v632, %v634
      %v636 = vrot.slane %v286, 2
      %v637 = vrot.slane %v287, 2
      %v638 = vsel %vm625, %v636, %v637
      %v639 = vrot.slane %v288, 2
      %v640 = vsel %vm625, %v637, %v639
      %v641 = vrot.slane %v289, 2
      %v642 = vrot.slane %v290, 2
      %v643 = vsel %vm625, %v641, %v642
      %v644 = vrot.slane %v291, 2
      %v645 = vsel %vm625, %v642, %v644
      %v646 = vrot.slane %v292, 2
      %v647 = vrot.slane %v293, 2
      %v648 = vsel %vm625, %v646, %v647
      %v649 = vrot.slane %v294, 2
      %v650 = vsel %vm625, %v647, %v649
      %v651 = vrot.slane %v295, 2
      %v652 = vrot.slane %v296, 2
      %v653 = vsel %vm625, %v651, %v652
      %v654 = vrot.slane %v297, 2
      %v655 = vsel %vm625, %v652, %v654
      %v656 = vrot.slane %v298, 2
      %v657 = vrot.slane %v299, 2
      %v658 = vsel %vm625, %v656, %v657
      %v659 = vrot.slane %v300, 2
      %v660 = vsel %vm625, %v657, %v659
      %v661 = vrot.slane %v301, 2
      %v662 = vrot.slane %v302, 2
      %v663 = vsel %vm625, %v661, %v662
      %v664 = vrot.slane %v303, 2
      %v665 = vsel %vm625, %v662, %v664
      %v666 = vrot.slane %v304, 2
      %v667 = vrot.slane %v305, 2
      %v668 = vsel %vm625, %v666, %v667
      %v669 = vrot.slane %v306, 2
      %v670 = vsel %vm625, %v667, %v669
      %v671 = vrot.slane %v307, 2
      %v672 = vrot.slane %v308, 2
      %v673 = vsel %vm625, %v671, %v672
      %v674 = vrot.slane %v309, 2
      %v675 = vsel %vm625, %v672, %v674
      %v676 = vrot.slane %v310, 2
      %v677 = vrot.slane %v311, 2
      %v678 = vsel %vm625, %v676, %v677
      %v679 = vrot.slane %v312, 2
      %v680 = vsel %vm625, %v677, %v679
      %v681 = vrot.slane %v313, 2
      %v682 = vrot.slane %v314, 2
      %v683 = vsel %vm625, %v681, %v682
      %v684 = vrot.slane %v315, 2
      %v685 = vsel %vm625, %v682, %v684
      %v686 = vrot.slane %v316, 2
      %v687 = vrot.slane %v317, 2
      %v688 = vsel %vm625, %v686, %v687
      %v689 = vrot.slane %v318, 2
      %v690 = vsel %vm625, %v687, %v689
      %v691 = vrot.slane %v319, 2
      %v692 = vrot.slane %v320, 2
      %v693 = vsel %vm625, %v691, %v692
      %v694 = vrot.slane %v321, 2
      %v695 = vsel %vm625, %v692, %v694
      %v696 = vrot.slane %v322, 2
      %v697 = vrot.slane %v323, 2
      %v698 = vsel %vm625, %v696, %v697
      %v699 = vrot.slane %v324, 2
      %v700 = vsel %vm625, %v697, %v699
      %v701 = vrot.slane %v325, 2
      %v702 = vrot.slane %v326, 2
      %v703 = vsel %vm625, %v701, %v702
      %v704 = vrot.slane %v327, 2
      %v705 = vsel %vm625, %v702, %v704
      %706 = vrot.lane.b32.xlu0 %v628, 8
      %v707 = vpop.permute.xlu0 %706
      %708 = vrot.lane.b32.xlu0 %v630, 8
      %v709 = vpop.permute.xlu0 %708
      %710 = vrot.lane.b32.xlu0 %v633, 8
      %v711 = vpop.permute.xlu0 %710
      %712 = vrot.lane.b32.xlu0 %v635, 8
      %v713 = vpop.permute.xlu0 %712
      %714 = vrot.lane.b32.xlu0 %v638, 8
      %v715 = vpop.permute.xlu0 %714
      %716 = vrot.lane.b32.xlu0 %v640, 8
      %v717 = vpop.permute.xlu0 %716
      %718 = vrot.lane.b32.xlu0 %v643, 8
      %v719 = vpop.permute.xlu0 %718
      %720 = vrot.lane.b32.xlu0 %v645, 8
      %v721 = vpop.permute.xlu0 %720
      %722 = vrot.lane.b32.xlu0 %v648, 8
      %v723 = vpop.permute.xlu0 %722
      %724 = vrot.lane.b32.xlu0 %v650, 8
      %v725 = vpop.permute.xlu0 %724
      %726 = vrot.lane.b32.xlu0 %v653, 8
      %v727 = vpop.permute.xlu0 %726
      %728 = vrot.lane.b32.xlu0 %v655, 8
      %v729 = vpop.permute.xlu0 %728
      %730 = vrot.lane.b32.xlu0 %v658, 8
      %v731 = vpop.permute.xlu0 %730
      %732 = vrot.lane.b32.xlu0 %v660, 8
      %v733 = vpop.permute.xlu0 %732
      %734 = vrot.lane.b32.xlu0 %v663, 8
      %v735 = vpop.permute.xlu0 %734
      %736 = vrot.lane.b32.xlu0 %v665, 8
      %v737 = vpop.permute.xlu0 %736
      %738 = vrot.lane.b32.xlu0 %v668, 8
      %v739 = vpop.permute.xlu0 %738
      %740 = vrot.lane.b32.xlu0 %v670, 8
      %v741 = vpop.permute.xlu0 %740
      %742 = vrot.lane.b32.xlu0 %v673, 8
      %v743 = vpop.permute.xlu0 %742
      %744 = vrot.lane.b32.xlu0 %v675, 8
      %v745 = vpop.permute.xlu0 %744
      %746 = vrot.lane.b32.xlu0 %v678, 8
      %v747 = vpop.permute.xlu0 %746
      %748 = vrot.lane.b32.xlu0 %v680, 8
      %v749 = vpop.permute.xlu0 %748
      %750 = vrot.lane.b32.xlu0 %v683, 8
      %v751 = vpop.permute.xlu0 %750
      %752 = vrot.lane.b32.xlu0 %v685, 8
      %v753 = vpop.permute.xlu0 %752
      %754 = vrot.lane.b32.xlu0 %v688, 8
      %v755 = vpop.permute.xlu0 %754
      %756 = vrot.lane.b32.xlu0 %v690, 8
      %v757 = vpop.permute.xlu0 %756
      %758 = vrot.lane.b32.xlu0 %v693, 8
      %v759 = vpop.permute.xlu0 %758
      %760 = vrot.lane.b32.xlu0 %v695, 8
      %v761 = vpop.permute.xlu0 %760
      %762 = vrot.lane.b32.xlu0 %v698, 8
      %v763 = vpop.permute.xlu0 %762
      %764 = vrot.lane.b32.xlu0 %v700, 8
      %v765 = vpop.permute.xlu0 %764
      %766 = vrot.lane.b32.xlu0 %v703, 8
      %v767 = vpop.permute.xlu0 %766
      %768 = vrot.lane.b32.xlu0 %v705, 8
      %v769 = vpop.permute.xlu0 %768
      %vm802 = vcmask 97344
      %803 = vst.msk [vmem:[#allocation2] sm:$0xff] %vm802, %v707
      %804 = vst.msk [vmem:[#allocation2 + $0x8] sm:$0xff] %vm802, %v709
      %805 = vst.msk [vmem:[#allocation2 + $0x10] sm:$0xff] %vm802, %v711
      %806 = vst.msk [vmem:[#allocation2 + $0x18] sm:$0xff] %vm802, %v713
      %807 = vst.msk [vmem:[#allocation2 + $0x20] sm:$0xff] %vm802, %v715
      %808 = vst.msk [vmem:[#allocation2 + $0x28] sm:$0xff] %vm802, %v717
      %809 = vst.msk [vmem:[#allocation2 + $0x30] sm:$0xff] %vm802, %v719
      %810 = vst.msk [vmem:[#allocation2 + $0x38] sm:$0xff] %vm802, %v721
      %811 = vst.msk [vmem:[#allocation2 + $0x40] sm:$0xff] %vm802, %v723
      %812 = vst.msk [vmem:[#allocation2 + $0x48] sm:$0xff] %vm802, %v725
      %813 = vst.msk [vmem:[#allocation2 + $0x50] sm:$0xff] %vm802, %v727
      %814 = vst.msk [vmem:[#allocation2 + $0x58] sm:$0xff] %vm802, %v729
      %815 = vst.msk [vmem:[#allocation2 + $0x60] sm:$0xff] %vm802, %v731
      %816 = vst.msk [vmem:[#allocation2 + $0x68] sm:$0xff] %vm802, %v733
      %817 = vst.msk [vmem:[#allocation2 + $0x70] sm:$0xff] %vm802, %v735
      %818 = vst.msk [vmem:[#allocation2 + $0x78] sm:$0xff] %vm802, %v737
      %819 = vst.msk [vmem:[#allocation2 + $0x80] sm:$0xff] %vm802, %v739
      %820 = vst.msk [vmem:[#allocation2 + $0x88] sm:$0xff] %vm802, %v741
      %821 = vst.msk [vmem:[#allocation2 + $0x90] sm:$0xff] %vm802, %v743
      %822 = vst.msk [vmem:[#allocation2 + $0x98] sm:$0xff] %vm802, %v745
      %823 = vst.msk [vmem:[#allocation2 + $0xa0] sm:$0xff] %vm802, %v747
      %824 = vst.msk [vmem:[#allocation2 + $0xa8] sm:$0xff] %vm802, %v749
      %825 = vst.msk [vmem:[#allocation2 + $0xb0] sm:$0xff] %vm802, %v751
      %826 = vst.msk [vmem:[#allocation2 + $0xb8] sm:$0xff] %vm802, %v753
      %827 = vst.msk [vmem:[#allocation2 + $0xc0] sm:$0xff] %vm802, %v755
      %828 = vst.msk [vmem:[#allocation2 + $0xc8] sm:$0xff] %vm802, %v757
      %829 = vst.msk [vmem:[#allocation2 + $0xd0] sm:$0xff] %vm802, %v759
      %830 = vst.msk [vmem:[#allocation2 + $0xd8] sm:$0xff] %vm802, %v761
      %831 = vst.msk [vmem:[#allocation2 + $0xe0] sm:$0xff] %vm802, %v763
      %832 = vst.msk [vmem:[#allocation2 + $0xe8] sm:$0xff] %vm802, %v765
      %833 = vst.msk [vmem:[#allocation2 + $0xf0] sm:$0xff] %vm802, %v767
      %834 = vst.msk [vmem:[#allocation2 + $0xf8] sm:$0xff] %vm802, %v769
      %837 = vrot.lane.b32.xlu0 %v283, 12
      %v838 = vpop.permute.xlu0 %837
      %839 = vrot.lane.b32.xlu0 %v284, 12
      %v840 = vpop.permute.xlu0 %839
      %841 = vrot.lane.b32.xlu0 %v286, 12
      %v842 = vpop.permute.xlu0 %841
      %843 = vrot.lane.b32.xlu0 %v287, 12
      %v844 = vpop.permute.xlu0 %843
      %845 = vrot.lane.b32.xlu0 %v289, 12
      %v846 = vpop.permute.xlu0 %845
      %847 = vrot.lane.b32.xlu0 %v290, 12
      %v848 = vpop.permute.xlu0 %847
      %849 = vrot.lane.b32.xlu0 %v292, 12
      %v850 = vpop.permute.xlu0 %849
      %851 = vrot.lane.b32.xlu0 %v293, 12
      %v852 = vpop.permute.xlu0 %851
      %853 = vrot.lane.b32.xlu0 %v295, 12
      %v854 = vpop.permute.xlu0 %853
      %855 = vrot.lane.b32.xlu0 %v296, 12
      %v856 = vpop.permute.xlu0 %855
      %857 = vrot.lane.b32.xlu0 %v298, 12
      %v858 = vpop.permute.xlu0 %857
      %859 = vrot.lane.b32.xlu0 %v299, 12
      %v860 = vpop.permute.xlu0 %859
      %861 = vrot.lane.b32.xlu0 %v301, 12
      %v862 = vpop.permute.xlu0 %861
      %863 = vrot.lane.b32.xlu0 %v302, 12
      %v864 = vpop.permute.xlu0 %863
      %865 = vrot.lane.b32.xlu0 %v304, 12
      %v866 = vpop.permute.xlu0 %865
      %867 = vrot.lane.b32.xlu0 %v305, 12
      %v868 = vpop.permute.xlu0 %867
      %869 = vrot.lane.b32.xlu0 %v307, 12
      %v870 = vpop.permute.xlu0 %869
      %871 = vrot.lane.b32.xlu0 %v308, 12
      %v872 = vpop.permute.xlu0 %871
      %873 = vrot.lane.b32.xlu0 %v310, 12
      %v874 = vpop.permute.xlu0 %873
      %875 = vrot.lane.b32.xlu0 %v311, 12
      %v876 = vpop.permute.xlu0 %875
      %877 = vrot.lane.b32.xlu0 %v313, 12
      %v878 = vpop.permute.xlu0 %877
      %879 = vrot.lane.b32.xlu0 %v314, 12
      %v880 = vpop.permute.xlu0 %879
      %881 = vrot.lane.b32.xlu0 %v316, 12
      %v882 = vpop.permute.xlu0 %881
      %883 = vrot.lane.b32.xlu0 %v317, 12
      %v884 = vpop.permute.xlu0 %883
      %885 = vrot.lane.b32.xlu0 %v319, 12
      %v886 = vpop.permute.xlu0 %885
      %887 = vrot.lane.b32.xlu0 %v320, 12
      %v888 = vpop.permute.xlu0 %887
      %889 = vrot.lane.b32.xlu0 %v322, 12
      %v890 = vpop.permute.xlu0 %889
      %891 = vrot.lane.b32.xlu0 %v323, 12
      %v892 = vpop.permute.xlu0 %891
      %893 = vrot.lane.b32.xlu0 %v325, 12
      %v894 = vpop.permute.xlu0 %893
      %895 = vrot.lane.b32.xlu0 %v326, 12
      %v896 = vpop.permute.xlu0 %895
      %897 = vrot.lane.b32.xlu0 %v328, 12
      %v898 = vpop.permute.xlu0 %897
      %899 = vrot.lane.b32.xlu0 %v329, 12
      %v900 = vpop.permute.xlu0 %899
      %vm933 = vcmask 130144
      %934 = vst.msk [vmem:[#allocation2] sm:$0xff] %vm933, %v838
      %935 = vst.msk [vmem:[#allocation2 + $0x8] sm:$0xff] %vm933, %v840
      %936 = vst.msk [vmem:[#allocation2 + $0x10] sm:$0xff] %vm933, %v842
      %937 = vst.msk [vmem:[#allocation2 + $0x18] sm:$0xff] %vm933, %v844
      %938 = vst.msk [vmem:[#allocation2 + $0x20] sm:$0xff] %vm933, %v846
      %939 = vst.msk [vmem:[#allocation2 + $0x28] sm:$0xff] %vm933, %v848
      %940 = vst.msk [vmem:[#allocation2 + $0x30] sm:$0xff] %vm933, %v850
      %941 = vst.msk [vmem:[#allocation2 + $0x38] sm:$0xff] %vm933, %v852
      %942 = vst.msk [vmem:[#allocation2 + $0x40] sm:$0xff] %vm933, %v854
      %943 = vst.msk [vmem:[#allocation2 + $0x48] sm:$0xff] %vm933, %v856
      %944 = vst.msk [vmem:[#allocation2 + $0x50] sm:$0xff] %vm933, %v858
      %945 = vst.msk [vmem:[#allocation2 + $0x58] sm:$0xff] %vm933, %v860
      %946 = vst.msk [vmem:[#allocation2 + $0x60] sm:$0xff] %vm933, %v862
      %947 = vst.msk [vmem:[#allocation2 + $0x68] sm:$0xff] %vm933, %v864
      %948 = vst.msk [vmem:[#allocation2 + $0x70] sm:$0xff] %vm933, %v866
      %949 = vst.msk [vmem:[#allocation2 + $0x78] sm:$0xff] %vm933, %v868
      %950 = vst.msk [vmem:[#allocation2 + $0x80] sm:$0xff] %vm933, %v870
      %951 = vst.msk [vmem:[#allocation2 + $0x88] sm:$0xff] %vm933, %v872
      %952 = vst.msk [vmem:[#allocation2 + $0x90] sm:$0xff] %vm933, %v874
      %953 = vst.msk [vmem:[#allocation2 + $0x98] sm:$0xff] %vm933, %v876
      %954 = vst.msk [vmem:[#allocation2 + $0xa0] sm:$0xff] %vm933, %v878
      %955 = vst.msk [vmem:[#allocation2 + $0xa8] sm:$0xff] %vm933, %v880
      %956 = vst.msk [vmem:[#allocation2 + $0xb0] sm:$0xff] %vm933, %v882
      %957 = vst.msk [vmem:[#allocation2 + $0xb8] sm:$0xff] %vm933, %v884
      %958 = vst.msk [vmem:[#allocation2 + $0xc0] sm:$0xff] %vm933, %v886
      %959 = vst.msk [vmem:[#allocation2 + $0xc8] sm:$0xff] %vm933, %v888
      %960 = vst.msk [vmem:[#allocation2 + $0xd0] sm:$0xff] %vm933, %v890
      %961 = vst.msk [vmem:[#allocation2 + $0xd8] sm:$0xff] %vm933, %v892
      %962 = vst.msk [vmem:[#allocation2 + $0xe0] sm:$0xff] %vm933, %v894
      %963 = vst.msk [vmem:[#allocation2 + $0xe8] sm:$0xff] %vm933, %v896
      %964 = vst.msk [vmem:[#allocation2 + $0xf0] sm:$0xff] %vm933, %v898
      %965 = vst.msk [vmem:[#allocation2 + $0xf8] sm:$0xff] %vm933, %v900
      %v967 = vrot.slane %v328, 1
      %v968 = vrot.slane %v329, 1
      %v969 = vsel %vm415, %v967, %v968
      %v970 = vrot.slane %v330, 1
      %v971 = vsel %vm415, %v968, %v970
      %972 = vrot.lane.b32.xlu0 %v423, 16
      %v973 = vpop.permute.xlu0 %972
      %974 = vrot.lane.b32.xlu0 %v425, 16
      %v975 = vpop.permute.xlu0 %974
      %976 = vrot.lane.b32.xlu0 %v428, 16
      %v977 = vpop.permute.xlu0 %976
      %978 = vrot.lane.b32.xlu0 %v430, 16
      %v979 = vpop.permute.xlu0 %978
      %980 = vrot.lane.b32.xlu0 %v433, 16
      %v981 = vpop.permute.xlu0 %980
      %982 = vrot.lane.b32.xlu0 %v435, 16
      %v983 = vpop.permute.xlu0 %982
      %984 = vrot.lane.b32.xlu0 %v438, 16
      %v985 = vpop.permute.xlu0 %984
      %986 = vrot.lane.b32.xlu0 %v440, 16
      %v987 = vpop.permute.xlu0 %986
      %988 = vrot.lane.b32.xlu0 %v443, 16
      %v989 = vpop.permute.xlu0 %988
      %990 = vrot.lane.b32.xlu0 %v445, 16
      %v991 = vpop.permute.xlu0 %990
      %992 = vrot.lane.b32.xlu0 %v448, 16
      %v993 = vpop.permute.xlu0 %992
      %994 = vrot.lane.b32.xlu0 %v450, 16
      %v995 = vpop.permute.xlu0 %994
      %996 = vrot.lane.b32.xlu0 %v453, 16
      %v997 = vpop.permute.xlu0 %996
      %998 = vrot.lane.b32.xlu0 %v455, 16
      %v999 = vpop.permute.xlu0 %998
      %1000 = vrot.lane.b32.xlu0 %v458, 16
      %v1001 = vpop.permute.xlu0 %1000
      %1002 = vrot.lane.b32.xlu0 %v460, 16
      %v1003 = vpop.permute.xlu0 %1002
      %1004 = vrot.lane.b32.xlu0 %v463, 16
      %v1005 = vpop.permute.xlu0 %1004
      %1006 = vrot.lane.b32.xlu0 %v465, 16
      %v1007 = vpop.permute.xlu0 %1006
      %1008 = vrot.lane.b32.xlu0 %v468, 16
      %v1009 = vpop.permute.xlu0 %1008
      %1010 = vrot.lane.b32.xlu0 %v470, 16
      %v1011 = vpop.permute.xlu0 %1010
      %1012 = vrot.lane.b32.xlu0 %v473, 16
      %v1013 = vpop.permute.xlu0 %1012
      %1014 = vrot.lane.b32.xlu0 %v475, 16
      %v1015 = vpop.permute.xlu0 %1014
      %1016 = vrot.lane.b32.xlu0 %v478, 16
      %v1017 = vpop.permute.xlu0 %1016
      %1018 = vrot.lane.b32.xlu0 %v480, 16
      %v1019 = vpop.permute.xlu0 %1018
      %1020 = vrot.lane.b32.xlu0 %v483, 16
      %v1021 = vpop.permute.xlu0 %1020
      %1022 = vrot.lane.b32.xlu0 %v485, 16
      %v1023 = vpop.permute.xlu0 %1022
      %1024 = vrot.lane.b32.xlu0 %v488, 16
      %v1025 = vpop.permute.xlu0 %1024
      %1026 = vrot.lane.b32.xlu0 %v490, 16
      %v1027 = vpop.permute.xlu0 %1026
      %1028 = vrot.lane.b32.xlu0 %v493, 16
      %v1029 = vpop.permute.xlu0 %1028
      %1030 = vrot.lane.b32.xlu0 %v495, 16
      %v1031 = vpop.permute.xlu0 %1030
      %1032 = vrot.lane.b32.xlu0 %v969, 16
      %v1033 = vpop.permute.xlu0 %1032
      %1034 = vrot.lane.b32.xlu0 %v971, 16
      %v1035 = vpop.permute.xlu0 %1034
      %vm1068 = vcmask 162944
      %1069 = vst.msk [vmem:[#allocation2] sm:$0xff] %vm1068, %v973
      %1070 = vst.msk [vmem:[#allocation2 + $0x8] sm:$0xff] %vm1068, %v975
      %1071 = vst.msk [vmem:[#allocation2 + $0x10] sm:$0xff] %vm1068, %v977
      %1072 = vst.msk [vmem:[#allocation2 + $0x18] sm:$0xff] %vm1068, %v979
      %1073 = vst.msk [vmem:[#allocation2 + $0x20] sm:$0xff] %vm1068, %v981
      %1074 = vst.msk [vmem:[#allocation2 + $0x28] sm:$0xff] %vm1068, %v983
      %1075 = vst.msk [vmem:[#allocation2 + $0x30] sm:$0xff] %vm1068, %v985
      %1076 = vst.msk [vmem:[#allocation2 + $0x38] sm:$0xff] %vm1068, %v987
      %1077 = vst.msk [vmem:[#allocation2 + $0x40] sm:$0xff] %vm1068, %v989
      %1078 = vst.msk [vmem:[#allocation2 + $0x48] sm:$0xff] %vm1068, %v991
      %1079 = vst.msk [vmem:[#allocation2 + $0x50] sm:$0xff] %vm1068, %v993
      %1080 = vst.msk [vmem:[#allocation2 + $0x58] sm:$0xff] %vm1068, %v995
      %1081 = vst.msk [vmem:[#allocation2 + $0x60] sm:$0xff] %vm1068, %v997
      %1082 = vst.msk [vmem:[#allocation2 + $0x68] sm:$0xff] %vm1068, %v999
      %1083 = vst.msk [vmem:[#allocation2 + $0x70] sm:$0xff] %vm1068, %v1001
      %1084 = vst.msk [vmem:[#allocation2 + $0x78] sm:$0xff] %vm1068, %v1003
      %1085 = vst.msk [vmem:[#allocation2 + $0x80] sm:$0xff] %vm1068, %v1005
      %1086 = vst.msk [vmem:[#allocation2 + $0x88] sm:$0xff] %vm1068, %v1007
      %1087 = vst.msk [vmem:[#allocation2 + $0x90] sm:$0xff] %vm1068, %v1009
      %1088 = vst.msk [vmem:[#allocation2 + $0x98] sm:$0xff] %vm1068, %v1011
      %1089 = vst.msk [vmem:[#allocation2 + $0xa0] sm:$0xff] %vm1068, %v1013
      %1090 = vst.msk [vmem:[#allocation2 + $0xa8] sm:$0xff] %vm1068, %v1015
      %1091 = vst.msk [vmem:[#allocation2 + $0xb0] sm:$0xff] %vm1068, %v1017
      %1092 = vst.msk [vmem:[#allocation2 + $0xb8] sm:$0xff] %vm1068, %v1019
      %1093 = vst.msk [vmem:[#allocation2 + $0xc0] sm:$0xff] %vm1068, %v1021
      %1094 = vst.msk [vmem:[#allocation2 + $0xc8] sm:$0xff] %vm1068, %v1023
      %1095 = vst.msk [vmem:[#allocation2 + $0xd0] sm:$0xff] %vm1068, %v1025
      %1096 = vst.msk [vmem:[#allocation2 + $0xd8] sm:$0xff] %vm1068, %v1027
      %1097 = vst.msk [vmem:[#allocation2 + $0xe0] sm:$0xff] %vm1068, %v1029
      %1098 = vst.msk [vmem:[#allocation2 + $0xe8] sm:$0xff] %vm1068, %v1031
      %1099 = vst.msk [vmem:[#allocation2 + $0xf0] sm:$0xff] %vm1068, %v1033
      %1100 = vst.msk [vmem:[#allocation2 + $0xf8] sm:$0xff] %vm1068, %v1035
      %v1101 = vrot.slane %v328, 2
      %v1102 = vrot.slane %v329, 2
      %v1103 = vsel %vm625, %v1101, %v1102
      %v1104 = vrot.slane %v330, 2
      %v1105 = vsel %vm625, %v1102, %v1104
      %1106 = vrot.lane.b32.xlu0 %v633, 20
      %v1107 = vpop.permute.xlu0 %1106
      %1108 = vrot.lane.b32.xlu0 %v635, 20
      %v1109 = vpop.permute.xlu0 %1108
      %1110 = vrot.lane.b32.xlu0 %v638, 20
      %v1111 = vpop.permute.xlu0 %1110
      %1112 = vrot.lane.b32.xlu0 %v640, 20
      %v1113 = vpop.permute.xlu0 %1112
      %1114 = vrot.lane.b32.xlu0 %v643, 20
      %v1115 = vpop.permute.xlu0 %1114
      %1116 = vrot.lane.b32.xlu0 %v645, 20
      %v1117 = vpop.permute.xlu0 %1116
      %1118 = vrot.lane.b32.xlu0 %v648, 20
      %v1119 = vpop.permute.xlu0 %1118
      %1120 = vrot.lane.b32.xlu0 %v650, 20
      %v1121 = vpop.permute.xlu0 %1120
      %1122 = vrot.lane.b32.xlu0 %v653, 20
      %v1123 = vpop.permute.xlu0 %1122
      %1124 = vrot.lane.b32.xlu0 %v655, 20
      %v1125 = vpop.permute.xlu0 %1124
      %1126 = vrot.lane.b32.xlu0 %v658, 20
      %v1127 = vpop.permute.xlu0 %1126
      %1128 = vrot.lane.b32.xlu0 %v660, 20
      %v1129 = vpop.permute.xlu0 %1128
      %1130 = vrot.lane.b32.xlu0 %v663, 20
      %v1131 = vpop.permute.xlu0 %1130
      %1132 = vrot.lane.b32.xlu0 %v665, 20
      %v1133 = vpop.permute.xlu0 %1132
      %1134 = vrot.lane.b32.xlu0 %v668, 20
      %v1135 = vpop.permute.xlu0 %1134
      %1136 = vrot.lane.b32.xlu0 %v670, 20
      %v1137 = vpop.permute.xlu0 %1136
      %1138 = vrot.lane.b32.xlu0 %v673, 20
      %v1139 = vpop.permute.xlu0 %1138
      %1140 = vrot.lane.b32.xlu0 %v675, 20
      %v1141 = vpop.permute.xlu0 %1140
      %1142 = vrot.lane.b32.xlu0 %v678, 20
      %v1143 = vpop.permute.xlu0 %1142
      %1144 = vrot.lane.b32.xlu0 %v680, 20
      %v1145 = vpop.permute.xlu0 %1144
      %1146 = vrot.lane.b32.xlu0 %v683, 20
      %v1147 = vpop.permute.xlu0 %1146
      %1148 = vrot.lane.b32.xlu0 %v685, 20
      %v1149 = vpop.permute.xlu0 %1148
      %1150 = vrot.lane.b32.xlu0 %v688, 20
      %v1151 = vpop.permute.xlu0 %1150
      %1152 = vrot.lane.b32.xlu0 %v690, 20
      %v1153 = vpop.permute.xlu0 %1152
      %1154 = vrot.lane.b32.xlu0 %v693, 20
      %v1155 = vpop.permute.xlu0 %1154
      %1156 = vrot.lane.b32.xlu0 %v695, 20
      %v1157 = vpop.permute.xlu0 %1156
      %1158 = vrot.lane.b32.xlu0 %v698, 20
      %v1159 = vpop.permute.xlu0 %1158
      %1160 = vrot.lane.b32.xlu0 %v700, 20
      %v1161 = vpop.permute.xlu0 %1160
      %1162 = vrot.lane.b32.xlu0 %v703, 20
      %v1163 = vpop.permute.xlu0 %1162
      %1164 = vrot.lane.b32.xlu0 %v705, 20
      %v1165 = vpop.permute.xlu0 %1164
      %1166 = vrot.lane.b32.xlu0 %v1103, 20
      %v1167 = vpop.permute.xlu0 %1166
      %1168 = vrot.lane.b32.xlu0 %v1105, 20
      %v1169 = vpop.permute.xlu0 %1168
      %vm1202 = vcmask 195744
      %1203 = vst.msk [vmem:[#allocation2] sm:$0xff] %vm1202, %v1107
      %1204 = vst.msk [vmem:[#allocation2 + $0x8] sm:$0xff] %vm1202, %v1109
      %1205 = vst.msk [vmem:[#allocation2 + $0x10] sm:$0xff] %vm1202, %v1111
      %1206 = vst.msk [vmem:[#allocation2 + $0x18] sm:$0xff] %vm1202, %v1113
      %1207 = vst.msk [vmem:[#allocation2 + $0x20] sm:$0xff] %vm1202, %v1115
      %1208 = vst.msk [vmem:[#allocation2 + $0x28] sm:$0xff] %vm1202, %v1117
      %1209 = vst.msk [vmem:[#allocation2 + $0x30] sm:$0xff] %vm1202, %v1119
      %1210 = vst.msk [vmem:[#allocation2 + $0x38] sm:$0xff] %vm1202, %v1121
      %1211 = vst.msk [vmem:[#allocation2 + $0x40] sm:$0xff] %vm1202, %v1123
      %1212 = vst.msk [vmem:[#allocation2 + $0x48] sm:$0xff] %vm1202, %v1125
      %1213 = vst.msk [vmem:[#allocation2 + $0x50] sm:$0xff] %vm1202, %v1127
      %1214 = vst.msk [vmem:[#allocation2 + $0x58] sm:$0xff] %vm1202, %v1129
      %1215 = vst.msk [vmem:[#allocation2 + $0x60] sm:$0xff] %vm1202, %v1131
      %1216 = vst.msk [vmem:[#allocation2 + $0x68] sm:$0xff] %vm1202, %v1133
      %1217 = vst.msk [vmem:[#allocation2 + $0x70] sm:$0xff] %vm1202, %v1135
      %1218 = vst.msk [vmem:[#allocation2 + $0x78] sm:$0xff] %vm1202, %v1137
      %1219 = vst.msk [vmem:[#allocation2 + $0x80] sm:$0xff] %vm1202, %v1139
      %1220 = vst.msk [vmem:[#allocation2 + $0x88] sm:$0xff] %vm1202, %v1141
      %1221 = vst.msk [vmem:[#allocation2 + $0x90] sm:$0xff] %vm1202, %v1143
      %1222 = vst.msk [vmem:[#allocation2 + $0x98] sm:$0xff] %vm1202, %v1145
      %1223 = vst.msk [vmem:[#allocation2 + $0xa0] sm:$0xff] %vm1202, %v1147
      %1224 = vst.msk [vmem:[#allocation2 + $0xa8] sm:$0xff] %vm1202, %v1149
      %1225 = vst.msk [vmem:[#allocation2 + $0xb0] sm:$0xff] %vm1202, %v1151
      %1226 = vst.msk [vmem:[#allocation2 + $0xb8] sm:$0xff] %vm1202, %v1153
      %1227 = vst.msk [vmem:[#allocation2 + $0xc0] sm:$0xff] %vm1202, %v1155
      %1228 = vst.msk [vmem:[#allocation2 + $0xc8] sm:$0xff] %vm1202, %v1157
      %1229 = vst.msk [vmem:[#allocation2 + $0xd0] sm:$0xff] %vm1202, %v1159
      %1230 = vst.msk [vmem:[#allocation2 + $0xd8] sm:$0xff] %vm1202, %v1161
      %1231 = vst.msk [vmem:[#allocation2 + $0xe0] sm:$0xff] %vm1202, %v1163
      %1232 = vst.msk [vmem:[#allocation2 + $0xe8] sm:$0xff] %vm1202, %v1165
      %1233 = vst.msk [vmem:[#allocation2 + $0xf0] sm:$0xff] %vm1202, %v1167
      %1234 = vst.msk [vmem:[#allocation2 + $0xf8] sm:$0xff] %vm1202, %v1169
      %1237 = vrot.lane.b32.xlu0 %v286, 24
      %v1238 = vpop.permute.xlu0 %1237
      %1239 = vrot.lane.b32.xlu0 %v287, 24
      %v1240 = vpop.permute.xlu0 %1239
      %1241 = vrot.lane.b32.xlu0 %v289, 24
      %v1242 = vpop.permute.xlu0 %1241
      %1243 = vrot.lane.b32.xlu0 %v290, 24
      %v1244 = vpop.permute.xlu0 %1243
      %1245 = vrot.lane.b32.xlu0 %v292, 24
      %v1246 = vpop.permute.xlu0 %1245
      %1247 = vrot.lane.b32.xlu0 %v293, 24
      %v1248 = vpop.permute.xlu0 %1247
      %1249 = vrot.lane.b32.xlu0 %v295, 24
      %v1250 = vpop.permute.xlu0 %1249
      %1251 = vrot.lane.b32.xlu0 %v296, 24
      %v1252 = vpop.permute.xlu0 %1251
      %1253 = vrot.lane.b32.xlu0 %v298, 24
      %v1254 = vpop.permute.xlu0 %1253
      %1255 = vrot.lane.b32.xlu0 %v299, 24
      %v1256 = vpop.permute.xlu0 %1255
      %1257 = vrot.lane.b32.xlu0 %v301, 24
      %v1258 = vpop.permute.xlu0 %1257
      %1259 = vrot.lane.b32.xlu0 %v302, 24
      %v1260 = vpop.permute.xlu0 %1259
      %1261 = vrot.lane.b32.xlu0 %v304, 24
      %v1262 = vpop.permute.xlu0 %1261
      %1263 = vrot.lane.b32.xlu0 %v305, 24
      %v1264 = vpop.permute.xlu0 %1263
      %1265 = vrot.lane.b32.xlu0 %v307, 24
      %v1266 = vpop.permute.xlu0 %1265
      %1267 = vrot.lane.b32.xlu0 %v308, 24
      %v1268 = vpop.permute.xlu0 %1267
      %1269 = vrot.lane.b32.xlu0 %v310, 24
      %v1270 = vpop.permute.xlu0 %1269
      %1271 = vrot.lane.b32.xlu0 %v311, 24
      %v1272 = vpop.permute.xlu0 %1271
      %1273 = vrot.lane.b32.xlu0 %v313, 24
      %v1274 = vpop.permute.xlu0 %1273
      %1275 = vrot.lane.b32.xlu0 %v314, 24
      %v1276 = vpop.permute.xlu0 %1275
      %1277 = vrot.lane.b32.xlu0 %v316, 24
      %v1278 = vpop.permute.xlu0 %1277
      %1279 = vrot.lane.b32.xlu0 %v317, 24
      %v1280 = vpop.permute.xlu0 %1279
      %1281 = vrot.lane.b32.xlu0 %v319, 24
      %v1282 = vpop.permute.xlu0 %1281
      %1283 = vrot.lane.b32.xlu0 %v320, 24
      %v1284 = vpop.permute.xlu0 %1283
      %1285 = vrot.lane.b32.xlu0 %v322, 24
      %v1286 = vpop.permute.xlu0 %1285
      %1287 = vrot.lane.b32.xlu0 %v323, 24
      %v1288 = vpop.permute.xlu0 %1287
      %1289 = vrot.lane.b32.xlu0 %v325, 24
      %v1290 = vpop.permute.xlu0 %1289
      %1291 = vrot.lane.b32.xlu0 %v326, 24
      %v1292 = vpop.permute.xlu0 %1291
      %1293 = vrot.lane.b32.xlu0 %v328, 24
      %v1294 = vpop.permute.xlu0 %1293
      %1295 = vrot.lane.b32.xlu0 %v329, 24
      %v1296 = vpop.permute.xlu0 %1295
      %1297 = vrot.lane.b32.xlu0 %v331, 24
      %v1298 = vpop.permute.xlu0 %1297
      %1299 = vrot.lane.b32.xlu0 %v332, 24
      %v1300 = vpop.permute.xlu0 %1299
      %vm1333 = vcmask 228544
      %1334 = vst.msk [vmem:[#allocation2] sm:$0xff] %vm1333, %v1238
      %1335 = vst.msk [vmem:[#allocation2 + $0x8] sm:$0xff] %vm1333, %v1240
      %1336 = vst.msk [vmem:[#allocation2 + $0x10] sm:$0xff] %vm1333, %v1242
      %1337 = vst.msk [vmem:[#allocation2 + $0x18] sm:$0xff] %vm1333, %v1244
      %1338 = vst.msk [vmem:[#allocation2 + $0x20] sm:$0xff] %vm1333, %v1246
      %1339 = vst.msk [vmem:[#allocation2 + $0x28] sm:$0xff] %vm1333, %v1248
      %1340 = vst.msk [vmem:[#allocation2 + $0x30] sm:$0xff] %vm1333, %v1250
      %1341 = vst.msk [vmem:[#allocation2 + $0x38] sm:$0xff] %vm1333, %v1252
      %1342 = vst.msk [vmem:[#allocation2 + $0x40] sm:$0xff] %vm1333, %v1254
      %1343 = vst.msk [vmem:[#allocation2 + $0x48] sm:$0xff] %vm1333, %v1256
      %1344 = vst.msk [vmem:[#allocation2 + $0x50] sm:$0xff] %vm1333, %v1258
      %1345 = vst.msk [vmem:[#allocation2 + $0x58] sm:$0xff] %vm1333, %v1260
      %1346 = vst.msk [vmem:[#allocation2 + $0x60] sm:$0xff] %vm1333, %v1262
      %1347 = vst.msk [vmem:[#allocation2 + $0x68] sm:$0xff] %vm1333, %v1264
      %1348 = vst.msk [vmem:[#allocation2 + $0x70] sm:$0xff] %vm1333, %v1266
      %1349 = vst.msk [vmem:[#allocation2 + $0x78] sm:$0xff] %vm1333, %v1268
      %1350 = vst.msk [vmem:[#allocation2 + $0x80] sm:$0xff] %vm1333, %v1270
      %1351 = vst.msk [vmem:[#allocation2 + $0x88] sm:$0xff] %vm1333, %v1272
      %1352 = vst.msk [vmem:[#allocation2 + $0x90] sm:$0xff] %vm1333, %v1274
      %1353 = vst.msk [vmem:[#allocation2 + $0x98] sm:$0xff] %vm1333, %v1276
      %1354 = vst.msk [vmem:[#allocation2 + $0xa0] sm:$0xff] %vm1333, %v1278
      %1355 = vst.msk [vmem:[#allocation2 + $0xa8] sm:$0xff] %vm1333, %v1280
      %1356 = vst.msk [vmem:[#allocation2 + $0xb0] sm:$0xff] %vm1333, %v1282
      %1357 = vst.msk [vmem:[#allocation2 + $0xb8] sm:$0xff] %vm1333, %v1284
      %1358 = vst.msk [vmem:[#allocation2 + $0xc0] sm:$0xff] %vm1333, %v1286
      %1359 = vst.msk [vmem:[#allocation2 + $0xc8] sm:$0xff] %vm1333, %v1288
      %1360 = vst.msk [vmem:[#allocation2 + $0xd0] sm:$0xff] %vm1333, %v1290
      %1361 = vst.msk [vmem:[#allocation2 + $0xd8] sm:$0xff] %vm1333, %v1292
      %1362 = vst.msk [vmem:[#allocation2 + $0xe0] sm:$0xff] %vm1333, %v1294
      %1363 = vst.msk [vmem:[#allocation2 + $0xe8] sm:$0xff] %vm1333, %v1296
      %1364 = vst.msk [vmem:[#allocation2 + $0xf0] sm:$0xff] %vm1333, %v1298
      %1365 = vst.msk [vmem:[#allocation2 + $0xf8] sm:$0xff] %vm1333, %v1300
      %v1367 = vrot.slane %v331, 1
      %v1368 = vrot.slane %v332, 1
      %v1369 = vsel %vm415, %v1367, %v1368
      %v1370 = vrot.slane %v333, 1
      %v1371 = vsel %vm415, %v1368, %v1370
      %1372 = vrot.lane.b32.xlu0 %v428, 28
      %v1373 = vpop.permute.xlu0 %1372
      %1374 = vrot.lane.b32.xlu0 %v430, 28
      %v1375 = vpop.permute.xlu0 %1374
      %1376 = vrot.lane.b32.xlu0 %v433, 28
      %v1377 = vpop.permute.xlu0 %1376
      %1378 = vrot.lane.b32.xlu0 %v435, 28
      %v1379 = vpop.permute.xlu0 %1378
      %1380 = vrot.lane.b32.xlu0 %v438, 28
      %v1381 = vpop.permute.xlu0 %1380
      %1382 = vrot.lane.b32.xlu0 %v440, 28
      %v1383 = vpop.permute.xlu0 %1382
      %1384 = vrot.lane.b32.xlu0 %v443, 28
      %v1385 = vpop.permute.xlu0 %1384
      %1386 = vrot.lane.b32.xlu0 %v445, 28
      %v1387 = vpop.permute.xlu0 %1386
      %1388 = vrot.lane.b32.xlu0 %v448, 28
      %v1389 = vpop.permute.xlu0 %1388
      %1390 = vrot.lane.b32.xlu0 %v450, 28
      %v1391 = vpop.permute.xlu0 %1390
      %1392 = vrot.lane.b32.xlu0 %v453, 28
      %v1393 = vpop.permute.xlu0 %1392
      %1394 = vrot.lane.b32.xlu0 %v455, 28
      %v1395 = vpop.permute.xlu0 %1394
      %1396 = vrot.lane.b32.xlu0 %v458, 28
      %v1397 = vpop.permute.xlu0 %1396
      %1398 = vrot.lane.b32.xlu0 %v460, 28
      %v1399 = vpop.permute.xlu0 %1398
      %1400 = vrot.lane.b32.xlu0 %v463, 28
      %v1401 = vpop.permute.xlu0 %1400
      %1402 = vrot.lane.b32.xlu0 %v465, 28
      %v1403 = vpop.permute.xlu0 %1402
      %1404 = vrot.lane.b32.xlu0 %v468, 28
      %v1405 = vpop.permute.xlu0 %1404
      %1406 = vrot.lane.b32.xlu0 %v470, 28
      %v1407 = vpop.permute.xlu0 %1406
      %1408 = vrot.lane.b32.xlu0 %v473, 28
      %v1409 = vpop.permute.xlu0 %1408
      %1410 = vrot.lane.b32.xlu0 %v475, 28
      %v1411 = vpop.permute.xlu0 %1410
      %1412 = vrot.lane.b32.xlu0 %v478, 28
      %v1413 = vpop.permute.xlu0 %1412
      %1414 = vrot.lane.b32.xlu0 %v480, 28
      %v1415 = vpop.permute.xlu0 %1414
      %1416 = vrot.lane.b32.xlu0 %v483, 28
      %v1417 = vpop.permute.xlu0 %1416
      %1418 = vrot.lane.b32.xlu0 %v485, 28
      %v1419 = vpop.permute.xlu0 %1418
      %1420 = vrot.lane.b32.xlu0 %v488, 28
      %v1421 = vpop.permute.xlu0 %1420
      %1422 = vrot.lane.b32.xlu0 %v490, 28
      %v1423 = vpop.permute.xlu0 %1422
      %1424 = vrot.lane.b32.xlu0 %v493, 28
      %v1425 = vpop.permute.xlu0 %1424
      %1426 = vrot.lane.b32.xlu0 %v495, 28
      %v1427 = vpop.permute.xlu0 %1426
      %1428 = vrot.lane.b32.xlu0 %v969, 28
      %v1429 = vpop.permute.xlu0 %1428
      %1430 = vrot.lane.b32.xlu0 %v971, 28
      %v1431 = vpop.permute.xlu0 %1430
      %1432 = vrot.lane.b32.xlu0 %v1369, 28
      %v1433 = vpop.permute.xlu0 %1432
      %1434 = vrot.lane.b32.xlu0 %v1371, 28
      %v1435 = vpop.permute.xlu0 %1434
      %vm1468 = vcmask 261344
      %1469 = vst.msk [vmem:[#allocation2] sm:$0xff] %vm1468, %v1373
      %1470 = vst.msk [vmem:[#allocation2 + $0x8] sm:$0xff] %vm1468, %v1375
      %1471 = vst.msk [vmem:[#allocation2 + $0x10] sm:$0xff] %vm1468, %v1377
      %1472 = vst.msk [vmem:[#allocation2 + $0x18] sm:$0xff] %vm1468, %v1379
      %1473 = vst.msk [vmem:[#allocation2 + $0x20] sm:$0xff] %vm1468, %v1381
      %1474 = vst.msk [vmem:[#allocation2 + $0x28] sm:$0xff] %vm1468, %v1383
      %1475 = vst.msk [vmem:[#allocation2 + $0x30] sm:$0xff] %vm1468, %v1385
      %1476 = vst.msk [vmem:[#allocation2 + $0x38] sm:$0xff] %vm1468, %v1387
      %1477 = vst.msk [vmem:[#allocation2 + $0x40] sm:$0xff] %vm1468, %v1389
      %1478 = vst.msk [vmem:[#allocation2 + $0x48] sm:$0xff] %vm1468, %v1391
      %1479 = vst.msk [vmem:[#allocation2 + $0x50] sm:$0xff] %vm1468, %v1393
      %1480 = vst.msk [vmem:[#allocation2 + $0x58] sm:$0xff] %vm1468, %v1395
      %1481 = vst.msk [vmem:[#allocation2 + $0x60] sm:$0xff] %vm1468, %v1397
      %1482 = vst.msk [vmem:[#allocation2 + $0x68] sm:$0xff] %vm1468, %v1399
      %1483 = vst.msk [vmem:[#allocation2 + $0x70] sm:$0xff] %vm1468, %v1401
      %1484 = vst.msk [vmem:[#allocation2 + $0x78] sm:$0xff] %vm1468, %v1403
      %1485 = vst.msk [vmem:[#allocation2 + $0x80] sm:$0xff] %vm1468, %v1405
      %1486 = vst.msk [vmem:[#allocation2 + $0x88] sm:$0xff] %vm1468, %v1407
      %1487 = vst.msk [vmem:[#allocation2 + $0x90] sm:$0xff] %vm1468, %v1409
      %1488 = vst.msk [vmem:[#allocation2 + $0x98] sm:$0xff] %vm1468, %v1411
      %1489 = vst.msk [vmem:[#allocation2 + $0xa0] sm:$0xff] %vm1468, %v1413
      %1490 = vst.msk [vmem:[#allocation2 + $0xa8] sm:$0xff] %vm1468, %v1415
      %1491 = vst.msk [vmem:[#allocation2 + $0xb0] sm:$0xff] %vm1468, %v1417
      %1492 = vst.msk [vmem:[#allocation2 + $0xb8] sm:$0xff] %vm1468, %v1419
      %1493 = vst.msk [vmem:[#allocation2 + $0xc0] sm:$0xff] %vm1468, %v1421
      %1494 = vst.msk [vmem:[#allocation2 + $0xc8] sm:$0xff] %vm1468, %v1423
      %1495 = vst.msk [vmem:[#allocation2 + $0xd0] sm:$0xff] %vm1468, %v1425
      %1496 = vst.msk [vmem:[#allocation2 + $0xd8] sm:$0xff] %vm1468, %v1427
      %1497 = vst.msk [vmem:[#allocation2 + $0xe0] sm:$0xff] %vm1468, %v1429
      %1498 = vst.msk [vmem:[#allocation2 + $0xe8] sm:$0xff] %vm1468, %v1431
      %1499 = vst.msk [vmem:[#allocation2 + $0xf0] sm:$0xff] %vm1468, %v1433
      %1500 = vst.msk [vmem:[#allocation2 + $0xf8] sm:$0xff] %vm1468, %v1435
      %v1501 = vrot.slane %v331, 2
      %v1502 = vrot.slane %v332, 2
      %v1503 = vsel %vm625, %v1501, %v1502
      %v1504 = vrot.slane %v333, 2
      %v1505 = vsel %vm625, %v1502, %v1504
      %1506 = vrot.lane.b32.xlu0 %v638, 32
      %v1507 = vpop.permute.xlu0 %1506
      %1508 = vrot.lane.b32.xlu0 %v640, 32
      %v1509 = vpop.permute.xlu0 %1508
      %1510 = vrot.lane.b32.xlu0 %v643, 32
      %v1511 = vpop.permute.xlu0 %1510
      %1512 = vrot.lane.b32.xlu0 %v645, 32
      %v1513 = vpop.permute.xlu0 %1512
      %1514 = vrot.lane.b32.xlu0 %v648, 32
      %v1515 = vpop.permute.xlu0 %1514
      %1516 = vrot.lane.b32.xlu0 %v650, 32
      %v1517 = vpop.permute.xlu0 %1516
      %1518 = vrot.lane.b32.xlu0 %v653, 32
      %v1519 = vpop.permute.xlu0 %1518
      %1520 = vrot.lane.b32.xlu0 %v655, 32
      %v1521 = vpop.permute.xlu0 %1520
      %1522 = vrot.lane.b32.xlu0 %v658, 32
      %v1523 = vpop.permute.xlu0 %1522
      %1524 = vrot.lane.b32.xlu0 %v660, 32
      %v1525 = vpop.permute.xlu0 %1524
      %1526 = vrot.lane.b32.xlu0 %v663, 32
      %v1527 = vpop.permute.xlu0 %1526
      %1528 = vrot.lane.b32.xlu0 %v665, 32
      %v1529 = vpop.permute.xlu0 %1528
      %1530 = vrot.lane.b32.xlu0 %v668, 32
      %v1531 = vpop.permute.xlu0 %1530
      %1532 = vrot.lane.b32.xlu0 %v670, 32
      %v1533 = vpop.permute.xlu0 %1532
      %1534 = vrot.lane.b32.xlu0 %v673, 32
      %v1535 = vpop.permute.xlu0 %1534
      %1536 = vrot.lane.b32.xlu0 %v675, 32
      %v1537 = vpop.permute.xlu0 %1536
      %1538 = vrot.lane.b32.xlu0 %v678, 32
      %v1539 = vpop.permute.xlu0 %1538
      %1540 = vrot.lane.b32.xlu0 %v680, 32
      %v1541 = vpop.permute.xlu0 %1540
      %1542 = vrot.lane.b32.xlu0 %v683, 32
      %v1543 = vpop.permute.xlu0 %1542
      %1544 = vrot.lane.b32.xlu0 %v685, 32
      %v1545 = vpop.permute.xlu0 %1544
      %1546 = vrot.lane.b32.xlu0 %v688, 32
      %v1547 = vpop.permute.xlu0 %1546
      %1548 = vrot.lane.b32.xlu0 %v690, 32
      %v1549 = vpop.permute.xlu0 %1548
      %1550 = vrot.lane.b32.xlu0 %v693, 32
      %v1551 = vpop.permute.xlu0 %1550
      %1552 = vrot.lane.b32.xlu0 %v695, 32
      %v1553 = vpop.permute.xlu0 %1552
      %1554 = vrot.lane.b32.xlu0 %v698, 32
      %v1555 = vpop.permute.xlu0 %1554
      %1556 = vrot.lane.b32.xlu0 %v700, 32
      %v1557 = vpop.permute.xlu0 %1556
      %1558 = vrot.lane.b32.xlu0 %v703, 32
      %v1559 = vpop.permute.xlu0 %1558
      %1560 = vrot.lane.b32.xlu0 %v705, 32
      %v1561 = vpop.permute.xlu0 %1560
      %1562 = vrot.lane.b32.xlu0 %v1103, 32
      %v1563 = vpop.permute.xlu0 %1562
      %1564 = vrot.lane.b32.xlu0 %v1105, 32
      %v1565 = vpop.permute.xlu0 %1564
      %1566 = vrot.lane.b32.xlu0 %v1503, 32
      %v1567 = vpop.permute.xlu0 %1566
      %1568 = vrot.lane.b32.xlu0 %v1505, 32
      %v1569 = vpop.permute.xlu0 %1568
      %vm1602 = vcmask 294144
      %1603 = vst.msk [vmem:[#allocation2] sm:$0xff] %vm1602, %v1507
      %1604 = vst.msk [vmem:[#allocation2 + $0x8] sm:$0xff] %vm1602, %v1509
      %1605 = vst.msk [vmem:[#allocation2 + $0x10] sm:$0xff] %vm1602, %v1511
      %1606 = vst.msk [vmem:[#allocation2 + $0x18] sm:$0xff] %vm1602, %v1513
      %1607 = vst.msk [vmem:[#allocation2 + $0x20] sm:$0xff] %vm1602, %v1515
      %1608 = vst.msk [vmem:[#allocation2 + $0x28] sm:$0xff] %vm1602, %v1517
      %1609 = vst.msk [vmem:[#allocation2 + $0x30] sm:$0xff] %vm1602, %v1519
      %1610 = vst.msk [vmem:[#allocation2 + $0x38] sm:$0xff] %vm1602, %v1521
      %1611 = vst.msk [vmem:[#allocation2 + $0x40] sm:$0xff] %vm1602, %v1523
      %1612 = vst.msk [vmem:[#allocation2 + $0x48] sm:$0xff] %vm1602, %v1525
      %1613 = vst.msk [vmem:[#allocation2 + $0x50] sm:$0xff] %vm1602, %v1527
      %1614 = vst.msk [vmem:[#allocation2 + $0x58] sm:$0xff] %vm1602, %v1529
      %1615 = vst.msk [vmem:[#allocation2 + $0x60] sm:$0xff] %vm1602, %v1531
      %1616 = vst.msk [vmem:[#allocation2 + $0x68] sm:$0xff] %vm1602, %v1533
      %1617 = vst.msk [vmem:[#allocation2 + $0x70] sm:$0xff] %vm1602, %v1535
      %1618 = vst.msk [vmem:[#allocation2 + $0x78] sm:$0xff] %vm1602, %v1537
      %1619 = vst.msk [vmem:[#allocation2 + $0x80] sm:$0xff] %vm1602, %v1539
      %1620 = vst.msk [vmem:[#allocation2 + $0x88] sm:$0xff] %vm1602, %v1541
      %1621 = vst.msk [vmem:[#allocation2 + $0x90] sm:$0xff] %vm1602, %v1543
      %1622 = vst.msk [vmem:[#allocation2 + $0x98] sm:$0xff] %vm1602, %v1545
      %1623 = vst.msk [vmem:[#allocation2 + $0xa0] sm:$0xff] %vm1602, %v1547
      %1624 = vst.msk [vmem:[#allocation2 + $0xa8] sm:$0xff] %vm1602, %v1549
      %1625 = vst.msk [vmem:[#allocation2 + $0xb0] sm:$0xff] %vm1602, %v1551
      %1626 = vst.msk [vmem:[#allocation2 + $0xb8] sm:$0xff] %vm1602, %v1553
      %1627 = vst.msk [vmem:[#allocation2 + $0xc0] sm:$0xff] %vm1602, %v1555
      %1628 = vst.msk [vmem:[#allocation2 + $0xc8] sm:$0xff] %vm1602, %v1557
      %1629 = vst.msk [vmem:[#allocation2 + $0xd0] sm:$0xff] %vm1602, %v1559
      %1630 = vst.msk [vmem:[#allocation2 + $0xd8] sm:$0xff] %vm1602, %v1561
      %1631 = vst.msk [vmem:[#allocation2 + $0xe0] sm:$0xff] %vm1602, %v1563
      %1632 = vst.msk [vmem:[#allocation2 + $0xe8] sm:$0xff] %vm1602, %v1565
      %1633 = vst.msk [vmem:[#allocation2 + $0xf0] sm:$0xff] %vm1602, %v1567
      %1634 = vst.msk [vmem:[#allocation2 + $0xf8] sm:$0xff] %vm1602, %v1569
      %v1635 = vld [vmem:[#allocation2] sm:$0xff]
      %v1636 = vld [vmem:[#allocation2 + $0x8] sm:$0xff]
      %v1637 = vld [vmem:[#allocation2 + $0x10] sm:$0xff]
      %v1638 = vld [vmem:[#allocation2 + $0x18] sm:$0xff]
      %v1639 = vld [vmem:[#allocation2 + $0x20] sm:$0xff]
      %v1640 = vld [vmem:[#allocation2 + $0x28] sm:$0xff]
      %v1641 = vld [vmem:[#allocation2 + $0x30] sm:$0xff]
      %v1642 = vld [vmem:[#allocation2 + $0x38] sm:$0xff]
      %v1643 = vld [vmem:[#allocation2 + $0x40] sm:$0xff]
      %v1644 = vld [vmem:[#allocation2 + $0x48] sm:$0xff]
      %v1645 = vld [vmem:[#allocation2 + $0x50] sm:$0xff]
      %v1646 = vld [vmem:[#allocation2 + $0x58] sm:$0xff]
      %v1647 = vld [vmem:[#allocation2 + $0x60] sm:$0xff]
      %v1648 = vld [vmem:[#allocation2 + $0x68] sm:$0xff]
      %v1649 = vld [vmem:[#allocation2 + $0x70] sm:$0xff]
      %v1650 = vld [vmem:[#allocation2 + $0x78] sm:$0xff]
      %v1651 = vld [vmem:[#allocation2 + $0x80] sm:$0xff]
      %v1652 = vld [vmem:[#allocation2 + $0x88] sm:$0xff]
      %v1653 = vld [vmem:[#allocation2 + $0x90] sm:$0xff]
      %v1654 = vld [vmem:[#allocation2 + $0x98] sm:$0xff]
      %v1655 = vld [vmem:[#allocation2 + $0xa0] sm:$0xff]
      %v1656 = vld [vmem:[#allocation2 + $0xa8] sm:$0xff]
      %v1657 = vld [vmem:[#allocation2 + $0xb0] sm:$0xff]
      %v1658 = vld [vmem:[#allocation2 + $0xb8] sm:$0xff]
      %v1659 = vld [vmem:[#allocation2 + $0xc0] sm:$0xff]
      %v1660 = vld [vmem:[#allocation2 + $0xc8] sm:$0xff]
      %v1661 = vld [vmem:[#allocation2 + $0xd0] sm:$0xff]
      %v1662 = vld [vmem:[#allocation2 + $0xd8] sm:$0xff]
      %v1663 = vld [vmem:[#allocation2 + $0xe0] sm:$0xff]
      %v1664 = vld [vmem:[#allocation2 + $0xe8] sm:$0xff]
      %v1665 = vld [vmem:[#allocation2 + $0xf0] sm:$0xff]
      %v1666 = vld [vmem:[#allocation2 + $0xf8] sm:$0xff]
      %v1667 = vpack.c.bf16 %v1636, %v1635
      %v1668 = vpack.c.bf16 %v1638, %v1637
      %v1669 = vpack.c.bf16 %v1640, %v1639
      %v1670 = vpack.c.bf16 %v1642, %v1641
      %v1671 = vpack.c.bf16 %v1644, %v1643
      %v1672 = vpack.c.bf16 %v1646, %v1645
      %v1673 = vpack.c.bf16 %v1648, %v1647
      %v1674 = vpack.c.bf16 %v1650, %v1649
      %v1675 = vpack.c.bf16 %v1652, %v1651
      %v1676 = vpack.c.bf16 %v1654, %v1653
      %v1677 = vpack.c.bf16 %v1656, %v1655
      %v1678 = vpack.c.bf16 %v1658, %v1657
      %v1679 = vpack.c.bf16 %v1660, %v1659
      %v1680 = vpack.c.bf16 %v1662, %v1661
      %v1681 = vpack.c.bf16 %v1664, %v1663
      %v1682 = vpack.c.bf16 %v1666, %v1665
      %v1683 = vld [vmem:[%s1] sm:$0xff]
      %v1684 = vld [vmem:[%s1 + $0x8] sm:$0xff]
      %v1685 = vld [vmem:[%s1 + $0x10] sm:$0xff]
      %v1686 = vld [vmem:[%s1 + $0x18] sm:$0xff]
      %v1687 = vld [vmem:[%s1 + $0x20] sm:$0x33]
      %v1693 = vunpack.c.l.b16 %v1683
      %v1694 = vunpack.c.h.b16 %v1683
      %v1695 = vunpack.c.l.b16 %v1684
      %v1696 = vunpack.c.h.b16 %v1684
      %v1697 = vunpack.c.l.b16 %v1685
      %v1698 = vunpack.c.h.b16 %v1685
      %v1699 = vunpack.c.l.b16 %v1686
      %v1700 = vunpack.c.h.b16 %v1686
      %v1701 = vunpack.c.l.b16 %v1687
      %v1702 = vunpack.c.h.b16 %v1687
      %v1703 = vpack.c.b16 %v1695, %v1693
      %v1704 = vpack.c.b16 %v1696, %v1694
      %v1705 = vpack.c.b16 %v1699, %v1697
      %v1706 = vpack.c.b16 %v1700, %v1698
      %v1707 = vpack.c.b16 %v1701, %v1701
      %v1708 = vpack.c.b16 %v1702, %v1702
      %vm1713 = vcmask 293888
      %v1715 = vsel %vm1713, %v1667, 0
      %v1718 = vsel %vm1713, %v1668, 0
      %v1721 = vsel %vm1713, %v1669, 0
      %v1724 = vsel %vm1713, %v1670, 0
      %v1727 = vsel %vm1713, %v1671, 0
      %v1730 = vsel %vm1713, %v1672, 0
      %v1733 = vsel %vm1713, %v1673, 0
      %v1736 = vsel %vm1713, %v1674, 0
      %v1739 = vsel %vm1713, %v1675, 0
      %v1742 = vsel %vm1713, %v1676, 0
      %v1745 = vsel %vm1713, %v1677, 0
      %v1748 = vsel %vm1713, %v1678, 0
      %v1751 = vsel %vm1713, %v1679, 0
      %v1754 = vsel %vm1713, %v1680, 0
      %v1757 = vsel %vm1713, %v1681, 0
      %v1760 = vsel %vm1713, %v1682, 0
      %vm1762 = vcmask 1041408
      %v1764 = vsel %vm1762, %v1707, 0
      %v1767 = vsel %vm1762, %v1708, 0
      %1769 = vmatpush.bf16.msra.mxu0 0
      %1770 = vmatpush.bf16.msra.mxu0 0
      %1771 = vmatpush.bf16.msra.mxu0 0
      %1772 = vmatpush.bf16.msra.mxu0 0
      %1773 = vmatpush.bf16.msra.mxu0 0
      %1774 = vmatpush.bf16.msra.mxu0 %v1764
      %1775 = vmatpush.bf16.msra.mxu0 %v1705
      %1776 = vmatpush.bf16.msra.mxu0 %v1703
      %1777 = vmatmul.bf16.gmra.mxu0 %v1715
      %v1778 = vpop.f32.mrf.mxu0
      %v1779 = vadd.f32 0.0, %v1778
      %v1780 = vpop.f32.mrf.mxu0
      %v1781 = vadd.f32 0.0, %v1780
      %1782 = vmatmul.bf16.gmra.mxu0 %v1718
      %v1783 = vpop.f32.mrf.mxu0
      %v1784 = vadd.f32 0.0, %v1783
      %v1785 = vpop.f32.mrf.mxu0
      %v1786 = vadd.f32 0.0, %v1785
      %1787 = vmatmul.bf16.gmra.mxu0 %v1721
      %v1788 = vpop.f32.mrf.mxu0
      %v1789 = vadd.f32 0.0, %v1788
      %v1790 = vpop.f32.mrf.mxu0
      %v1791 = vadd.f32 0.0, %v1790
      %1792 = vmatmul.bf16.gmra.mxu0 %v1724
      %v1793 = vpop.f32.mrf.mxu0
      %v1794 = vadd.f32 0.0, %v1793
      %v1795 = vpop.f32.mrf.mxu0
      %v1796 = vadd.f32 0.0, %v1795
      %1797 = vmatmul.bf16.gmra.mxu0 %v1727
      %v1798 = vpop.f32.mrf.mxu0
      %v1799 = vadd.f32 0.0, %v1798
      %v1800 = vpop.f32.mrf.mxu0
      %v1801 = vadd.f32 0.0, %v1800
      %1802 = vmatmul.bf16.gmra.mxu0 %v1730
      %v1803 = vpop.f32.mrf.mxu0
      %v1804 = vadd.f32 0.0, %v1803
      %v1805 = vpop.f32.mrf.mxu0
      %v1806 = vadd.f32 0.0, %v1805
      %1807 = vmatmul.bf16.gmra.mxu0 %v1733
      %v1808 = vpop.f32.mrf.mxu0
      %v1809 = vadd.f32 0.0, %v1808
      %v1810 = vpop.f32.mrf.mxu0
      %v1811 = vadd.f32 0.0, %v1810
      %1812 = vmatmul.bf16.gmra.mxu0 %v1736
      %v1813 = vpop.f32.mrf.mxu0
      %v1814 = vadd.f32 0.0, %v1813
      %v1815 = vpop.f32.mrf.mxu0
      %v1816 = vadd.f32 0.0, %v1815
      %1817 = vmatmul.bf16.gmra.mxu0 %v1739
      %v1818 = vpop.f32.mrf.mxu0
      %v1819 = vadd.f32 0.0, %v1818
      %v1820 = vpop.f32.mrf.mxu0
      %v1821 = vadd.f32 0.0, %v1820
      %1822 = vmatmul.bf16.gmra.mxu0 %v1742
      %v1823 = vpop.f32.mrf.mxu0
      %v1824 = vadd.f32 0.0, %v1823
      %v1825 = vpop.f32.mrf.mxu0
      %v1826 = vadd.f32 0.0, %v1825
      %1827 = vmatmul.bf16.gmra.mxu0 %v1745
      %v1828 = vpop.f32.mrf.mxu0
      %v1829 = vadd.f32 0.0, %v1828
      %v1830 = vpop.f32.mrf.mxu0
      %v1831 = vadd.f32 0.0, %v1830
      %1832 = vmatmul.bf16.gmra.mxu0 %v1748
      %v1833 = vpop.f32.mrf.mxu0
      %v1834 = vadd.f32 0.0, %v1833
      %v1835 = vpop.f32.mrf.mxu0
      %v1836 = vadd.f32 0.0, %v1835
      %1837 = vmatmul.bf16.gmra.mxu0 %v1751
      %v1838 = vpop.f32.mrf.mxu0
      %v1839 = vadd.f32 0.0, %v1838
      %v1840 = vpop.f32.mrf.mxu0
      %v1841 = vadd.f32 0.0, %v1840
      %1842 = vmatmul.bf16.gmra.mxu0 %v1754
      %v1843 = vpop.f32.mrf.mxu0
      %v1844 = vadd.f32 0.0, %v1843
      %v1845 = vpop.f32.mrf.mxu0
      %v1846 = vadd.f32 0.0, %v1845
      %1847 = vmatmul.bf16.gmra.mxu0 %v1757
      %v1848 = vpop.f32.mrf.mxu0
      %v1849 = vadd.f32 0.0, %v1848
      %v1850 = vpop.f32.mrf.mxu0
      %v1851 = vadd.f32 0.0, %v1850
      %1852 = vmatmul.bf16.gmra.mxu0 %v1760
      %v1853 = vpop.f32.mrf.mxu0
      %v1854 = vadd.f32 0.0, %v1853
      %v1855 = vpop.f32.mrf.mxu0
      %v1856 = vadd.f32 0.0, %v1855
      %1857 = vdwg.mxu0
      %1858 = vmatpush.bf16.msra.mxu0 0
      %1859 = vmatpush.bf16.msra.mxu0 0
      %1860 = vmatpush.bf16.msra.mxu0 0
      %1861 = vmatpush.bf16.msra.mxu0 0
      %1862 = vmatpush.bf16.msra.mxu0 0
      %1863 = vmatpush.bf16.msra.mxu0 %v1767
      %1864 = vmatpush.bf16.msra.mxu0 %v1706
      %1865 = vmatpush.bf16.msra.mxu0 %v1704
      %1866 = vmatmul.bf16.gmra.mxu0 %v1715
      %v1867 = vpop.f32.mrf.mxu0
      %v1868 = vadd.f32 0.0, %v1867
      %v1869 = vpop.f32.mrf.mxu0
      %v1870 = vadd.f32 0.0, %v1869
      %1871 = vmatmul.bf16.gmra.mxu0 %v1718
      %v1872 = vpop.f32.mrf.mxu0
      %v1873 = vadd.f32 0.0, %v1872
      %v1874 = vpop.f32.mrf.mxu0
      %v1875 = vadd.f32 0.0, %v1874
      %1876 = vmatmul.bf16.gmra.mxu0 %v1721
      %v1877 = vpop.f32.mrf.mxu0
      %v1878 = vadd.f32 0.0, %v1877
      %v1879 = vpop.f32.mrf.mxu0
      %v1880 = vadd.f32 0.0, %v1879
      %1881 = vmatmul.bf16.gmra.mxu0 %v1724
      %v1882 = vpop.f32.mrf.mxu0
      %v1883 = vadd.f32 0.0, %v1882
      %v1884 = vpop.f32.mrf.mxu0
      %v1885 = vadd.f32 0.0, %v1884
      %1886 = vmatmul.bf16.gmra.mxu0 %v1727
      %v1887 = vpop.f32.mrf.mxu0
      %v1888 = vadd.f32 0.0, %v1887
      %v1889 = vpop.f32.mrf.mxu0
      %v1890 = vadd.f32 0.0, %v1889
      %1891 = vmatmul.bf16.gmra.mxu0 %v1730
      %v1892 = vpop.f32.mrf.mxu0
      %v1893 = vadd.f32 0.0, %v1892
      %v1894 = vpop.f32.mrf.mxu0
      %v1895 = vadd.f32 0.0, %v1894
      %1896 = vmatmul.bf16.gmra.mxu0 %v1733
      %v1897 = vpop.f32.mrf.mxu0
      %v1898 = vadd.f32 0.0, %v1897
      %v1899 = vpop.f32.mrf.mxu0
      %v1900 = vadd.f32 0.0, %v1899
      %1901 = vmatmul.bf16.gmra.mxu0 %v1736
      %v1902 = vpop.f32.mrf.mxu0
      %v1903 = vadd.f32 0.0, %v1902
      %v1904 = vpop.f32.mrf.mxu0
      %v1905 = vadd.f32 0.0, %v1904
      %1906 = vmatmul.bf16.gmra.mxu0 %v1739
      %v1907 = vpop.f32.mrf.mxu0
      %v1908 = vadd.f32 0.0, %v1907
      %v1909 = vpop.f32.mrf.mxu0
      %v1910 = vadd.f32 0.0, %v1909
      %1911 = vmatmul.bf16.gmra.mxu0 %v1742
      %v1912 = vpop.f32.mrf.mxu0
      %v1913 = vadd.f32 0.0, %v1912
      %v1914 = vpop.f32.mrf.mxu0
      %v1915 = vadd.f32 0.0, %v1914
      %1916 = vmatmul.bf16.gmra.mxu0 %v1745
      %v1917 = vpop.f32.mrf.mxu0
      %v1918 = vadd.f32 0.0, %v1917
      %v1919 = vpop.f32.mrf.mxu0
      %v1920 = vadd.f32 0.0, %v1919
      %1921 = vmatmul.bf16.gmra.mxu0 %v1748
      %v1922 = vpop.f32.mrf.mxu0
      %v1923 = vadd.f32 0.0, %v1922
      %v1924 = vpop.f32.mrf.mxu0
      %v1925 = vadd.f32 0.0, %v1924
      %1926 = vmatmul.bf16.gmra.mxu0 %v1751
      %v1927 = vpop.f32.mrf.mxu0
      %v1928 = vadd.f32 0.0, %v1927
      %v1929 = vpop.f32.mrf.mxu0
      %v1930 = vadd.f32 0.0, %v1929
      %1931 = vmatmul.bf16.gmra.mxu0 %v1754
      %v1932 = vpop.f32.mrf.mxu0
      %v1933 = vadd.f32 0.0, %v1932
      %v1934 = vpop.f32.mrf.mxu0
      %v1935 = vadd.f32 0.0, %v1934
      %1936 = vmatmul.bf16.gmra.mxu0 %v1757
      %v1937 = vpop.f32.mrf.mxu0
      %v1938 = vadd.f32 0.0, %v1937
      %v1939 = vpop.f32.mrf.mxu0
      %v1940 = vadd.f32 0.0, %v1939
      %1941 = vmatmul.bf16.gmra.mxu0 %v1760
      %v1942 = vpop.f32.mrf.mxu0
      %v1943 = vadd.f32 0.0, %v1942
      %v1944 = vpop.f32.mrf.mxu0
      %v1945 = vadd.f32 0.0, %v1944
      %1946 = vdwg.mxu0
      %v1947 = vld [vmem:[%s2] sm:$0x3]
      %v1949 = vperm.slane %v1947, 0
      %v1950 = vperm.slane %v1947, 1
      %v1953 = vmul.f32 %v1779, %v1949
      %v1954 = vmul.f32 %v1868, %v1950
      %v1955 = vmul.f32 %v1781, %v1949
      %v1956 = vmul.f32 %v1870, %v1950
      %v1957 = vmul.f32 %v1784, %v1949
      %v1958 = vmul.f32 %v1873, %v1950
      %v1959 = vmul.f32 %v1786, %v1949
      %v1960 = vmul.f32 %v1875, %v1950
      %v1961 = vmul.f32 %v1789, %v1949
      %v1962 = vmul.f32 %v1878, %v1950
      %v1963 = vmul.f32 %v1791, %v1949
      %v1964 = vmul.f32 %v1880, %v1950
      %v1965 = vmul.f32 %v1794, %v1949
      %v1966 = vmul.f32 %v1883, %v1950
      %v1967 = vmul.f32 %v1796, %v1949
      %v1968 = vmul.f32 %v1885, %v1950
      %v1969 = vmul.f32 %v1799, %v1949
      %v1970 = vmul.f32 %v1888, %v1950
      %v1971 = vmul.f32 %v1801, %v1949
      %v1972 = vmul.f32 %v1890, %v1950
      %v1973 = vmul.f32 %v1804, %v1949
      %v1974 = vmul.f32 %v1893, %v1950
      %v1975 = vmul.f32 %v1806, %v1949
      %v1976 = vmul.f32 %v1895, %v1950
      %v1977 = vmul.f32 %v1809, %v1949
      %v1978 = vmul.f32 %v1898, %v1950
      %v1979 = vmul.f32 %v1811, %v1949
      %v1980 = vmul.f32 %v1900, %v1950
      %v1981 = vmul.f32 %v1814, %v1949
      %v1982 = vmul.f32 %v1903, %v1950
      %v1983 = vmul.f32 %v1816, %v1949
      %v1984 = vmul.f32 %v1905, %v1950
      %v1985 = vmul.f32 %v1819, %v1949
      %v1986 = vmul.f32 %v1908, %v1950
      %v1987 = vmul.f32 %v1821, %v1949
      %v1988 = vmul.f32 %v1910, %v1950
      %v1989 = vmul.f32 %v1824, %v1949
      %v1990 = vmul.f32 %v1913, %v1950
      %v1991 = vmul.f32 %v1826, %v1949
      %v1992 = vmul.f32 %v1915, %v1950
      %v1993 = vmul.f32 %v1829, %v1949
      %v1994 = vmul.f32 %v1918, %v1950
      %v1995 = vmul.f32 %v1831, %v1949
      %v1996 = vmul.f32 %v1920, %v1950
      %v1997 = vmul.f32 %v1834, %v1949
      %v1998 = vmul.f32 %v1923, %v1950
      %v1999 = vmul.f32 %v1836, %v1949
      %v2000 = vmul.f32 %v1925, %v1950
      %v2001 = vmul.f32 %v1839, %v1949
      %v2002 = vmul.f32 %v1928, %v1950
      %v2003 = vmul.f32 %v1841, %v1949
      %v2004 = vmul.f32 %v1930, %v1950
      %v2005 = vmul.f32 %v1844, %v1949
      %v2006 = vmul.f32 %v1933, %v1950
      %v2007 = vmul.f32 %v1846, %v1949
      %v2008 = vmul.f32 %v1935, %v1950
      %v2009 = vmul.f32 %v1849, %v1949
      %v2010 = vmul.f32 %v1938, %v1950
      %v2011 = vmul.f32 %v1851, %v1949
      %v2012 = vmul.f32 %v1940, %v1950
      %v2013 = vmul.f32 %v1854, %v1949
      %v2014 = vmul.f32 %v1943, %v1950
      %v2015 = vmul.f32 %v1856, %v1949
      %v2016 = vmul.f32 %v1945, %v1950
      %v2017 = vld [vmem:[%s3] sm:$0x3]
      %v2019 = vperm.slane %v2017, 0
      %v2020 = vperm.slane %v2017, 1
      %v2023 = vadd.f32 %v1953, %v2019
      %v2024 = vadd.f32 %v1954, %v2020
      %v2025 = vadd.f32 %v1955, %v2019
      %v2026 = vadd.f32 %v1956, %v2020
      %v2027 = vadd.f32 %v1957, %v2019
      %v2028 = vadd.f32 %v1958, %v2020
      %v2029 = vadd.f32 %v1959, %v2019
      %v2030 = vadd.f32 %v1960, %v2020
      %v2031 = vadd.f32 %v1961, %v2019
      %v2032 = vadd.f32 %v1962, %v2020
      %v2033 = vadd.f32 %v1963, %v2019
      %v2034 = vadd.f32 %v1964, %v2020
      %v2035 = vadd.f32 %v1965, %v2019
      %v2036 = vadd.f32 %v1966, %v2020
      %v2037 = vadd.f32 %v1967, %v2019
      %v2038 = vadd.f32 %v1968, %v2020
      %v2039 = vadd.f32 %v1969, %v2019
      %v2040 = vadd.f32 %v1970, %v2020
      %v2041 = vadd.f32 %v1971, %v2019
      %v2042 = vadd.f32 %v1972, %v2020
      %v2043 = vadd.f32 %v1973, %v2019
      %v2044 = vadd.f32 %v1974, %v2020
      %v2045 = vadd.f32 %v1975, %v2019
      %v2046 = vadd.f32 %v1976, %v2020
      %v2047 = vadd.f32 %v1977, %v2019
      %v2048 = vadd.f32 %v1978, %v2020
      %v2049 = vadd.f32 %v1979, %v2019
      %v2050 = vadd.f32 %v1980, %v2020
      %v2051 = vadd.f32 %v1981, %v2019
      %v2052 = vadd.f32 %v1982, %v2020
      %v2053 = vadd.f32 %v1983, %v2019
      %v2054 = vadd.f32 %v1984, %v2020
      %v2055 = vadd.f32 %v1985, %v2019
      %v2056 = vadd.f32 %v1986, %v2020
      %v2057 = vadd.f32 %v1987, %v2019
      %v2058 = vadd.f32 %v1988, %v2020
      %v2059 = vadd.f32 %v1989, %v2019
      %v2060 = vadd.f32 %v1990, %v2020
      %v2061 = vadd.f32 %v1991, %v2019
      %v2062 = vadd.f32 %v1992, %v2020
      %v2063 = vadd.f32 %v1993, %v2019
      %v2064 = vadd.f32 %v1994, %v2020
      %v2065 = vadd.f32 %v1995, %v2019
      %v2066 = vadd.f32 %v1996, %v2020
      %v2067 = vadd.f32 %v1997, %v2019
      %v2068 = vadd.f32 %v1998, %v2020
      %v2069 = vadd.f32 %v1999, %v2019
      %v2070 = vadd.f32 %v2000, %v2020
      %v2071 = vadd.f32 %v2001, %v2019
      %v2072 = vadd.f32 %v2002, %v2020
      %v2073 = vadd.f32 %v2003, %v2019
      %v2074 = vadd.f32 %v2004, %v2020
      %v2075 = vadd.f32 %v2005, %v2019
      %v2076 = vadd.f32 %v2006, %v2020
      %v2077 = vadd.f32 %v2007, %v2019
      %v2078 = vadd.f32 %v2008, %v2020
      %v2079 = vadd.f32 %v2009, %v2019
      %v2080 = vadd.f32 %v2010, %v2020
      %v2081 = vadd.f32 %v2011, %v2019
      %v2082 = vadd.f32 %v2012, %v2020
      %v2083 = vadd.f32 %v2013, %v2019
      %v2084 = vadd.f32 %v2014, %v2020
      %v2085 = vadd.f32 %v2015, %v2019
      %v2086 = vadd.f32 %v2016, %v2020
      %v2087 = vmax.f32 %v2023, 0.0
      %v2088 = vmax.f32 %v2025, 0.0
      %v2089 = vmax.f32 %v2027, 0.0
      %v2090 = vmax.f32 %v2029, 0.0
      %v2091 = vmax.f32 %v2031, 0.0
      %v2092 = vmax.f32 %v2033, 0.0
      %v2093 = vmax.f32 %v2035, 0.0
      %v2094 = vmax.f32 %v2037, 0.0
      %v2095 = vmax.f32 %v2039, 0.0
      %v2096 = vmax.f32 %v2041, 0.0
      %v2097 = vmax.f32 %v2043, 0.0
      %v2098 = vmax.f32 %v2045, 0.0
      %v2099 = vmax.f32 %v2047, 0.0
      %v2100 = vmax.f32 %v2049, 0.0
      %v2101 = vmax.f32 %v2051, 0.0
      %v2102 = vmax.f32 %v2053, 0.0
      %v2103 = vmax.f32 %v2055, 0.0
      %v2104 = vmax.f32 %v2057, 0.0
      %v2105 = vmax.f32 %v2059, 0.0
      %v2106 = vmax.f32 %v2061, 0.0
      %v2107 = vmax.f32 %v2063, 0.0
      %v2108 = vmax.f32 %v2065, 0.0
      %v2109 = vmax.f32 %v2067, 0.0
      %v2110 = vmax.f32 %v2069, 0.0
      %v2111 = vmax.f32 %v2071, 0.0
      %v2112 = vmax.f32 %v2073, 0.0
      %v2113 = vmax.f32 %v2075, 0.0
      %v2114 = vmax.f32 %v2077, 0.0
      %v2115 = vmax.f32 %v2079, 0.0
      %v2116 = vmax.f32 %v2081, 0.0
      %v2117 = vmax.f32 %v2083, 0.0
      %v2118 = vmax.f32 %v2085, 0.0
      %2119 = vst [vmem:[#allocation5] sm:$0xff] %v2024
      %2120 = vst [vmem:[#allocation5 + $0x8] sm:$0xff] %v2026
      %2121 = vst [vmem:[#allocation5 + $0x10] sm:$0xff] %v2028
      %2122 = vst [vmem:[#allocation5 + $0x18] sm:$0xff] %v2030
      %2123 = vst [vmem:[#allocation5 + $0x20] sm:$0xff] %v2032
      %2124 = vst [vmem:[#allocation5 + $0x28] sm:$0xff] %v2034
      %2125 = vst [vmem:[#allocation5 + $0x30] sm:$0xff] %v2036
      %2126 = vst [vmem:[#allocation5 + $0x38] sm:$0xff] %v2038
      %2127 = vst [vmem:[#allocation5 + $0x40] sm:$0xff] %v2040
      %2128 = vst [vmem:[#allocation5 + $0x48] sm:$0xff] %v2042
      %2129 = vst [vmem:[#allocation5 + $0x50] sm:$0xff] %v2044
      %2130 = vst [vmem:[#allocation5 + $0x58] sm:$0xff] %v2046
      %2131 = vst [vmem:[#allocation5 + $0x60] sm:$0xff] %v2048
      %2132 = vst [vmem:[#allocation5 + $0x68] sm:$0xff] %v2050
      %2133 = vst [vmem:[#allocation5 + $0x70] sm:$0xff] %v2052
      %2134 = vst [vmem:[#allocation5 + $0x78] sm:$0xff] %v2054
      %2135 = vst [vmem:[#allocation5 + $0x80] sm:$0xff] %v2056
      %2136 = vst [vmem:[#allocation5 + $0x88] sm:$0xff] %v2058
      %2137 = vst [vmem:[#allocation5 + $0x90] sm:$0xff] %v2060
      %2138 = vst [vmem:[#allocation5 + $0x98] sm:$0xff] %v2062
      %2139 = vst [vmem:[#allocation5 + $0xa0] sm:$0xff] %v2064
      %2140 = vst [vmem:[#allocation5 + $0xa8] sm:$0xff] %v2066
      %2141 = vst [vmem:[#allocation5 + $0xb0] sm:$0xff] %v2068
      %2142 = vst [vmem:[#allocation5 + $0xb8] sm:$0xff] %v2070
      %2143 = vst [vmem:[#allocation5 + $0xc0] sm:$0xff] %v2072
      %2144 = vst [vmem:[#allocation5 + $0xc8] sm:$0xff] %v2074
      %2145 = vst [vmem:[#allocation5 + $0xd0] sm:$0xff] %v2076
      %2146 = vst [vmem:[#allocation5 + $0xd8] sm:$0xff] %v2078
      %2147 = vst [vmem:[#allocation5 + $0xe0] sm:$0xff] %v2080
      %2148 = vst [vmem:[#allocation5 + $0xe8] sm:$0xff] %v2082
      %2149 = vst [vmem:[#allocation5 + $0xf0] sm:$0xff] %v2084
      %2150 = vst [vmem:[#allocation5 + $0xf8] sm:$0xff] %v2086
      %2151 = vst [vmem:[#allocation3] sm:$0xff] 0.0
      %2152 = vst [vmem:[#allocation3 + $0x8] sm:$0xff] 0.0
      %2153 = vst [vmem:[#allocation3 + $0x10] sm:$0xff] 0.0
      %2154 = vst [vmem:[#allocation3 + $0x18] sm:$0x1] 0.0
      %s2155 = scalar_lea.vmem [#allocation3], 544
      %2156 = vst [vmem:[%s2155] sm:$0xff] 0.0
      %2157 = vst [vmem:[%s2155 + $0x8] sm:$0xff] 0.0
      %2158 = vst [vmem:[%s2155 + $0x10] sm:$0xff] 0.0
      %2159 = vst [vmem:[%s2155 + $0x18] sm:$0x1] 0.0
      %2160 = vst [vmem:[#allocation3 + $0x7] sm:$0x1] 0.0
      %2161 = vst [vmem:[#allocation3 + $0x27] sm:$0x1] 0.0
      %2162 = vst [vmem:[#allocation3 + $0x47] sm:$0x1] 0.0
      %2163 = vst [vmem:[#allocation3 + $0x67] sm:$0x1] 0.0
      %2164 = vst [vmem:[#allocation3 + $0x87] sm:$0x1] 0.0
      %2165 = vst [vmem:[#allocation3 + $0xa7] sm:$0x1] 0.0
      %2166 = vst [vmem:[#allocation3 + $0xc7] sm:$0x1] 0.0
      %2167 = vst [vmem:[#allocation3 + $0xe7] sm:$0x1] 0.0
      %2168 = vst [vmem:[#allocation3 + $0x107] sm:$0x1] 0.0
      %2169 = vst [vmem:[#allocation3 + $0x127] sm:$0x1] 0.0
      %2170 = vst [vmem:[#allocation3 + $0x147] sm:$0x1] 0.0
      %2171 = vst [vmem:[#allocation3 + $0x167] sm:$0x1] 0.0
      %2172 = vst [vmem:[#allocation3 + $0x187] sm:$0x1] 0.0
      %2173 = vst [vmem:[#allocation3 + $0x1a7] sm:$0x1] 0.0
      %2174 = vst [vmem:[#allocation3 + $0x1c7] sm:$0x1] 0.0
      %2175 = vst [vmem:[#allocation3 + $0x1e7] sm:$0x1] 0.0
      %2176 = vst [vmem:[#allocation3 + $0x207] sm:$0x1] 0.0
      %2177 = vst [vmem:[#allocation3 + $0x227] sm:$0x1] 0.0
      %2178 = vst [vmem:[#allocation3 + $0x18] sm:$0x1] 0.0
      %2179 = vst [vmem:[#allocation3 + $0x38] sm:$0x1] 0.0
      %2180 = vst [vmem:[#allocation3 + $0x58] sm:$0x1] 0.0
      %2181 = vst [vmem:[#allocation3 + $0x78] sm:$0x1] 0.0
      %2182 = vst [vmem:[#allocation3 + $0x98] sm:$0x1] 0.0
      %2183 = vst [vmem:[#allocation3 + $0xb8] sm:$0x1] 0.0
      %2184 = vst [vmem:[#allocation3 + $0xd8] sm:$0x1] 0.0
      %2185 = vst [vmem:[#allocation3 + $0xf8] sm:$0x1] 0.0
      %2186 = vst [vmem:[#allocation3 + $0x118] sm:$0x1] 0.0
      %2187 = vst [vmem:[#allocation3 + $0x138] sm:$0x1] 0.0
      %2188 = vst [vmem:[#allocation3 + $0x158] sm:$0x1] 0.0
      %2189 = vst [vmem:[#allocation3 + $0x178] sm:$0x1] 0.0
      %2190 = vst [vmem:[#allocation3 + $0x198] sm:$0x1] 0.0
      %2191 = vst [vmem:[#allocation3 + $0x1b8] sm:$0x1] 0.0
      %2192 = vst [vmem:[#allocation3 + $0x1d8] sm:$0x1] 0.0
      %2193 = vst [vmem:[#allocation3 + $0x1f8] sm:$0x1] 0.0
      %2194 = vst [vmem:[#allocation3 + $0x218] sm:$0x1] 0.0
      %2195 = vst [vmem:[#allocation3 + $0x238] sm:$0x1] 0.0
      %s2196 = scalar_lea.vmem [#allocation3], 32
      %2197 = vst [vmem:[%s2196 + $0x8] sm:$0xff] %v2087
      %2198 = vst [vmem:[%s2196 + $0x10] sm:$0xff] %v2088
      %2199 = vst [vmem:[%s2196 + $0x28] sm:$0xff] %v2089
      %2200 = vst [vmem:[%s2196 + $0x30] sm:$0xff] %v2090
      %2201 = vst [vmem:[%s2196 + $0x48] sm:$0xff] %v2091
      %2202 = vst [vmem:[%s2196 + $0x50] sm:$0xff] %v2092
      %2203 = vst [vmem:[%s2196 + $0x68] sm:$0xff] %v2093
      %2204 = vst [vmem:[%s2196 + $0x70] sm:$0xff] %v2094
      %2205 = vst [vmem:[%s2196 + $0x88] sm:$0xff] %v2095
      %2206 = vst [vmem:[%s2196 + $0x90] sm:$0xff] %v2096
      %2207 = vst [vmem:[%s2196 + $0xa8] sm:$0xff] %v2097
      %2208 = vst [vmem:[%s2196 + $0xb0] sm:$0xff] %v2098
      %2209 = vst [vmem:[%s2196 + $0xc8] sm:$0xff] %v2099
      %2210 = vst [vmem:[%s2196 + $0xd0] sm:$0xff] %v2100
      %2211 = vst [vmem:[%s2196 + $0xe8] sm:$0xff] %v2101
      %2212 = vst [vmem:[%s2196 + $0xf0] sm:$0xff] %v2102
      %2213 = vst [vmem:[%s2196 + $0x108] sm:$0xff] %v2103
      %2214 = vst [vmem:[%s2196 + $0x110] sm:$0xff] %v2104
      %2215 = vst [vmem:[%s2196 + $0x128] sm:$0xff] %v2105
      %2216 = vst [vmem:[%s2196 + $0x130] sm:$0xff] %v2106
      %2217 = vst [vmem:[%s2196 + $0x148] sm:$0xff] %v2107
      %2218 = vst [vmem:[%s2196 + $0x150] sm:$0xff] %v2108
      %2219 = vst [vmem:[%s2196 + $0x168] sm:$0xff] %v2109
      %2220 = vst [vmem:[%s2196 + $0x170] sm:$0xff] %v2110
      %2221 = vst [vmem:[%s2196 + $0x188] sm:$0xff] %v2111
      %2222 = vst [vmem:[%s2196 + $0x190] sm:$0xff] %v2112
      %2223 = vst [vmem:[%s2196 + $0x1a8] sm:$0xff] %v2113
      %2224 = vst [vmem:[%s2196 + $0x1b0] sm:$0xff] %v2114
      %2225 = vst [vmem:[%s2196 + $0x1c8] sm:$0xff] %v2115
      %2226 = vst [vmem:[%s2196 + $0x1d0] sm:$0xff] %v2116
      %2227 = vst [vmem:[%s2196 + $0x1e8] sm:$0xff] %v2117
      %2228 = vst [vmem:[%s2196 + $0x1f0] sm:$0xff] %v2118
      %v2229 = vld [vmem:[#allocation3 + $0x7] sm:$0xff]
      %v2230 = vld [vmem:[#allocation3 + $0xf] sm:$0xff]
      %v2231 = vld [vmem:[#allocation3 + $0x27] sm:$0xff]
      %v2232 = vld [vmem:[#allocation3 + $0x2f] sm:$0xff]
      %v2233 = vld [vmem:[#allocation3 + $0x47] sm:$0xff]
      %v2234 = vld [vmem:[#allocation3 + $0x4f] sm:$0xff]
      %v2235 = vld [vmem:[#allocation3 + $0x67] sm:$0xff]
      %v2236 = vld [vmem:[#allocation3 + $0x6f] sm:$0xff]
      %v2237 = vld [vmem:[#allocation3 + $0x87] sm:$0xff]
      %v2238 = vld [vmem:[#allocation3 + $0x8f] sm:$0xff]
      %v2239 = vld [vmem:[#allocation3 + $0xa7] sm:$0xff]
      %v2240 = vld [vmem:[#allocation3 + $0xaf] sm:$0xff]
      %v2241 = vld [vmem:[#allocation3 + $0xc7] sm:$0xff]
      %v2242 = vld [vmem:[#allocation3 + $0xcf] sm:$0xff]
      %v2243 = vld [vmem:[#allocation3 + $0xe7] sm:$0xff]
      %v2244 = vld [vmem:[#allocation3 + $0xef] sm:$0xff]
      %v2245 = vld [vmem:[#allocation3 + $0x107] sm:$0xff]
      %v2246 = vld [vmem:[#allocation3 + $0x10f] sm:$0xff]
      %v2247 = vld [vmem:[#allocation3 + $0x127] sm:$0xff]
      %v2248 = vld [vmem:[#allocation3 + $0x12f] sm:$0xff]
      %v2249 = vld [vmem:[#allocation3 + $0x147] sm:$0xff]
      %v2250 = vld [vmem:[#allocation3 + $0x14f] sm:$0xff]
      %v2251 = vld [vmem:[#allocation3 + $0x167] sm:$0xff]
      %v2252 = vld [vmem:[#allocation3 + $0x16f] sm:$0xff]
      %v2253 = vld [vmem:[#allocation3 + $0x187] sm:$0xff]
      %v2254 = vld [vmem:[#allocation3 + $0x18f] sm:$0xff]
      %v2255 = vld [vmem:[#allocation3 + $0x1a7] sm:$0xff]
      %v2256 = vld [vmem:[#allocation3 + $0x1af] sm:$0xff]
      %v2257 = vld [vmem:[#allocation3 + $0x1c7] sm:$0xff]
      %v2258 = vld [vmem:[#allocation3 + $0x1cf] sm:$0xff]
      %v2259 = vld [vmem:[#allocation3 + $0x1e7] sm:$0xff]
      %v2260 = vld [vmem:[#allocation3 + $0x1ef] sm:$0xff]
      %v2261 = vpack.c.bf16 %v2229, %v2229
      %v2262 = vpack.c.bf16 %v2230, %v2230
      %v2263 = vpack.c.bf16 %v2231, %v2231
      %v2264 = vpack.c.bf16 %v2232, %v2232
      %v2265 = vpack.c.bf16 %v2233, %v2233
      %v2266 = vpack.c.bf16 %v2234, %v2234
      %v2267 = vpack.c.bf16 %v2235, %v2235
      %v2268 = vpack.c.bf16 %v2236, %v2236
      %v2269 = vpack.c.bf16 %v2237, %v2237
      %v2270 = vpack.c.bf16 %v2238, %v2238
      %v2271 = vpack.c.bf16 %v2239, %v2239
      %v2272 = vpack.c.bf16 %v2240, %v2240
      %v2273 = vpack.c.bf16 %v2241, %v2241
      %v2274 = vpack.c.bf16 %v2242, %v2242
      %v2275 = vpack.c.bf16 %v2243, %v2243
      %v2276 = vpack.c.bf16 %v2244, %v2244
      %v2277 = vpack.c.bf16 %v2245, %v2245
      %v2278 = vpack.c.bf16 %v2246, %v2246
      %v2279 = vpack.c.bf16 %v2247, %v2247
      %v2280 = vpack.c.bf16 %v2248, %v2248
      %v2281 = vpack.c.bf16 %v2249, %v2249
      %v2282 = vpack.c.bf16 %v2250, %v2250
      %v2283 = vpack.c.bf16 %v2251, %v2251
      %v2284 = vpack.c.bf16 %v2252, %v2252
      %v2285 = vpack.c.bf16 %v2253, %v2253
      %v2286 = vpack.c.bf16 %v2254, %v2254
      %v2287 = vpack.c.bf16 %v2255, %v2255
      %v2288 = vpack.c.bf16 %v2256, %v2256
      %v2289 = vpack.c.bf16 %v2257, %v2257
      %v2290 = vpack.c.bf16 %v2258, %v2258
      %v2291 = vpack.c.bf16 %v2259, %v2259
      %v2292 = vpack.c.bf16 %v2260, %v2260
      %2293 = vst [vmem:[#allocation4] sm:$0xf] %v2261
      %2294 = vst [vmem:[#allocation4 + $0x24] sm:$0xf] %v2262
      %2295 = vst [vmem:[#allocation4 + $0x48] sm:$0xf] %v2263
      %2296 = vst [vmem:[#allocation4 + $0x6c] sm:$0xf] %v2264
      %2297 = vst [vmem:[#allocation4 + $0x90] sm:$0xf] %v2265
      %2298 = vst [vmem:[#allocation4 + $0xb4] sm:$0xf] %v2266
      %2299 = vst [vmem:[#allocation4 + $0xd8] sm:$0xf] %v2267
      %2300 = vst [vmem:[#allocation4 + $0xfc] sm:$0xf] %v2268
      %2301 = vst [vmem:[#allocation4 + $0x120] sm:$0xf] %v2269
      %2302 = vst [vmem:[#allocation4 + $0x144] sm:$0xf] %v2270
      %2303 = vst [vmem:[#allocation4 + $0x168] sm:$0xf] %v2271
      %2304 = vst [vmem:[#allocation4 + $0x18c] sm:$0xf] %v2272
      %2305 = vst [vmem:[#allocation4 + $0x1b0] sm:$0xf] %v2273
      %2306 = vst [vmem:[#allocation4 + $0x1d4] sm:$0xf] %v2274
      %2307 = vst [vmem:[#allocation4 + $0x1f8] sm:$0xf] %v2275
      %2308 = vst [vmem:[#allocation4 + $0x21c] sm:$0xf] %v2276
      %2309 = vst [vmem:[#allocation4 + $0x240] sm:$0xf] %v2277
      %2310 = vst [vmem:[#allocation4 + $0x264] sm:$0xf] %v2278
      %2311 = vst [vmem:[#allocation4 + $0x288] sm:$0xf] %v2279
      %2312 = vst [vmem:[#allocation4 + $0x2ac] sm:$0xf] %v2280
      %2313 = vst [vmem:[#allocation4 + $0x2d0] sm:$0xf] %v2281
      %2314 = vst [vmem:[#allocation4 + $0x2f4] sm:$0xf] %v2282
      %2315 = vst [vmem:[#allocation4 + $0x318] sm:$0xf] %v2283
      %2316 = vst [vmem:[#allocation4 + $0x33c] sm:$0xf] %v2284
      %2317 = vst [vmem:[#allocation4 + $0x360] sm:$0xf] %v2285
      %2318 = vst [vmem:[#allocation4 + $0x384] sm:$0xf] %v2286
      %2319 = vst [vmem:[#allocation4 + $0x3a8] sm:$0xf] %v2287
      %2320 = vst [vmem:[#allocation4 + $0x3cc] sm:$0xf] %v2288
      %2321 = vst [vmem:[#allocation4 + $0x3f0] sm:$0xf] %v2289
      %2322 = vst [vmem:[#allocation4 + $0x414] sm:$0xf] %v2290
      %2323 = vst [vmem:[#allocation4 + $0x438] sm:$0xf] %v2291
      %2324 = vst [vmem:[#allocation4 + $0x45c] sm:$0xf] %v2292
      %v2325 = vld [vmem:[#allocation3 + $0x8] sm:$0xff]
      %v2326 = vld [vmem:[#allocation3 + $0x10] sm:$0xff]
      %v2327 = vld [vmem:[#allocation3 + $0x28] sm:$0xff]
      %v2328 = vld [vmem:[#allocation3 + $0x30] sm:$0xff]
      %v2329 = vld [vmem:[#allocation3 + $0x48] sm:$0xff]
      %v2330 = vld [vmem:[#allocation3 + $0x50] sm:$0xff]
      %v2331 = vld [vmem:[#allocation3 + $0x68] sm:$0xff]
      %v2332 = vld [vmem:[#allocation3 + $0x70] sm:$0xff]
      %v2333 = vld [vmem:[#allocation3 + $0x88] sm:$0xff]
      %v2334 = vld [vmem:[#allocation3 + $0x90] sm:$0xff]
      %v2335 = vld [vmem:[#allocation3 + $0xa8] sm:$0xff]
      %v2336 = vld [vmem:[#allocation3 + $0xb0] sm:$0xff]
      %v2337 = vld [vmem:[#allocation3 + $0xc8] sm:$0xff]
      %v2338 = vld [vmem:[#allocation3 + $0xd0] sm:$0xff]
      %v2339 = vld [vmem:[#allocation3 + $0xe8] sm:$0xff]
      %v2340 = vld [vmem:[#allocation3 + $0xf0] sm:$0xff]
      %v2341 = vld [vmem:[#allocation3 + $0x108] sm:$0xff]
      %v2342 = vld [vmem:[#allocation3 + $0x110] sm:$0xff]
      %v2343 = vld [vmem:[#allocation3 + $0x128] sm:$0xff]
      %v2344 = vld [vmem:[#allocation3 + $0x130] sm:$0xff]
      %v2345 = vld [vmem:[#allocation3 + $0x148] sm:$0xff]
      %v2346 = vld [vmem:[#allocation3 + $0x150] sm:$0xff]
      %v2347 = vld [vmem:[#allocation3 + $0x168] sm:$0xff]
      %v2348 = vld [vmem:[#allocation3 + $0x170] sm:$0xff]
      %v2349 = vld [vmem:[#allocation3 + $0x188] sm:$0xff]
      %v2350 = vld [vmem:[#allocation3 + $0x190] sm:$0xff]
      %v2351 = vld [vmem:[#allocation3 + $0x1a8] sm:$0xff]
      %v2352 = vld [vmem:[#allocation3 + $0x1b0] sm:$0xff]
      %v2353 = vld [vmem:[#allocation3 + $0x1c8] sm:$0xff]
      %v2354 = vld [vmem:[#allocation3 + $0x1d0] sm:$0xff]
      %v2355 = vld [vmem:[#allocation3 + $0x1e8] sm:$0xff]
      %v2356 = vld [vmem:[#allocation3 + $0x1f0] sm:$0xff]
      %v2357 = vpack.c.bf16 %v2325, %v2325
      %v2358 = vpack.c.bf16 %v2326, %v2326
      %v2359 = vpack.c.bf16 %v2327, %v2327
      %v2360 = vpack.c.bf16 %v2328, %v2328
      %v2361 = vpack.c.bf16 %v2329, %v2329
      %v2362 = vpack.c.bf16 %v2330, %v2330
      %v2363 = vpack.c.bf16 %v2331, %v2331
      %v2364 = vpack.c.bf16 %v2332, %v2332
      %v2365 = vpack.c.bf16 %v2333, %v2333
      %v2366 = vpack.c.bf16 %v2334, %v2334
      %v2367 = vpack.c.bf16 %v2335, %v2335
      %v2368 = vpack.c.bf16 %v2336, %v2336
      %v2369 = vpack.c.bf16 %v2337, %v2337
      %v2370 = vpack.c.bf16 %v2338, %v2338
      %v2371 = vpack.c.bf16 %v2339, %v2339
      %v2372 = vpack.c.bf16 %v2340, %v2340
      %v2373 = vpack.c.bf16 %v2341, %v2341
      %v2374 = vpack.c.bf16 %v2342, %v2342
      %v2375 = vpack.c.bf16 %v2343, %v2343
      %v2376 = vpack.c.bf16 %v2344, %v2344
      %v2377 = vpack.c.bf16 %v2345, %v2345
      %v2378 = vpack.c.bf16 %v2346, %v2346
      %v2379 = vpack.c.bf16 %v2347, %v2347
      %v2380 = vpack.c.bf16 %v2348, %v2348
      %v2381 = vpack.c.bf16 %v2349, %v2349
      %v2382 = vpack.c.bf16 %v2350, %v2350
      %v2383 = vpack.c.bf16 %v2351, %v2351
      %v2384 = vpack.c.bf16 %v2352, %v2352
      %v2385 = vpack.c.bf16 %v2353, %v2353
      %v2386 = vpack.c.bf16 %v2354, %v2354
      %v2387 = vpack.c.bf16 %v2355, %v2355
      %v2388 = vpack.c.bf16 %v2356, %v2356
      %2389 = vst [vmem:[#allocation4 + $0x4] sm:$0xf] %v2357
      %2390 = vst [vmem:[#allocation4 + $0x28] sm:$0xf] %v2358
      %2391 = vst [vmem:[#allocation4 + $0x4c] sm:$0xf] %v2359
      %2392 = vst [vmem:[#allocation4 + $0x70] sm:$0xf] %v2360
      %2393 = vst [vmem:[#allocation4 + $0x94] sm:$0xf] %v2361
      %2394 = vst [vmem:[#allocation4 + $0xb8] sm:$0xf] %v2362
      %2395 = vst [vmem:[#allocation4 + $0xdc] sm:$0xf] %v2363
      %2396 = vst [vmem:[#allocation4 + $0x100] sm:$0xf] %v2364
      %2397 = vst [vmem:[#allocation4 + $0x124] sm:$0xf] %v2365
      %2398 = vst [vmem:[#allocation4 + $0x148] sm:$0xf] %v2366
      %2399 = vst [vmem:[#allocation4 + $0x16c] sm:$0xf] %v2367
      %2400 = vst [vmem:[#allocation4 + $0x190] sm:$0xf] %v2368
      %2401 = vst [vmem:[#allocation4 + $0x1b4] sm:$0xf] %v2369
      %2402 = vst [vmem:[#allocation4 + $0x1d8] sm:$0xf] %v2370
      %2403 = vst [vmem:[#allocation4 + $0x1fc] sm:$0xf] %v2371
      %2404 = vst [vmem:[#allocation4 + $0x220] sm:$0xf] %v2372
      %2405 = vst [vmem:[#allocation4 + $0x244] sm:$0xf] %v2373
      %2406 = vst [vmem:[#allocation4 + $0x268] sm:$0xf] %v2374
      %2407 = vst [vmem:[#allocation4 + $0x28c] sm:$0xf] %v2375
      %2408 = vst [vmem:[#allocation4 + $0x2b0] sm:$0xf] %v2376
      %2409 = vst [vmem:[#allocation4 + $0x2d4] sm:$0xf] %v2377
      %2410 = vst [vmem:[#allocation4 + $0x2f8] sm:$0xf] %v2378
      %2411 = vst [vmem:[#allocation4 + $0x31c] sm:$0xf] %v2379
      %2412 = vst [vmem:[#allocation4 + $0x340] sm:$0xf] %v2380
      %2413 = vst [vmem:[#allocation4 + $0x364] sm:$0xf] %v2381
      %2414 = vst [vmem:[#allocation4 + $0x388] sm:$0xf] %v2382
      %2415 = vst [vmem:[#allocation4 + $0x3ac] sm:$0xf] %v2383
      %2416 = vst [vmem:[#allocation4 + $0x3d0] sm:$0xf] %v2384
      %2417 = vst [vmem:[#allocation4 + $0x3f4] sm:$0xf] %v2385
      %2418 = vst [vmem:[#allocation4 + $0x418] sm:$0xf] %v2386
      %2419 = vst [vmem:[#allocation4 + $0x43c] sm:$0xf] %v2387
      %2420 = vst [vmem:[#allocation4 + $0x460] sm:$0xf] %v2388
      %v2421 = vld [vmem:[#allocation3 + $0x9] sm:$0xff]
      %v2422 = vld [vmem:[#allocation3 + $0x11] sm:$0xff]
      %v2423 = vld [vmem:[#allocation3 + $0x29] sm:$0xff]
      %v2424 = vld [vmem:[#allocation3 + $0x31] sm:$0xff]
      %v2425 = vld [vmem:[#allocation3 + $0x49] sm:$0xff]
      %v2426 = vld [vmem:[#allocation3 + $0x51] sm:$0xff]
      %v2427 = vld [vmem:[#allocation3 + $0x69] sm:$0xff]
      %v2428 = vld [vmem:[#allocation3 + $0x71] sm:$0xff]
      %v2429 = vld [vmem:[#allocation3 + $0x89] sm:$0xff]
      %v2430 = vld [vmem:[#allocation3 + $0x91] sm:$0xff]
      %v2431 = vld [vmem:[#allocation3 + $0xa9] sm:$0xff]
      %v2432 = vld [vmem:[#allocation3 + $0xb1] sm:$0xff]
      %v2433 = vld [vmem:[#allocation3 + $0xc9] sm:$0xff]
      %v2434 = vld [vmem:[#allocation3 + $0xd1] sm:$0xff]
      %v2435 = vld [vmem:[#allocation3 + $0xe9] sm:$0xff]
      %v2436 = vld [vmem:[#allocation3 + $0xf1] sm:$0xff]
      %v2437 = vld [vmem:[#allocation3 + $0x109] sm:$0xff]
      %v2438 = vld [vmem:[#allocation3 + $0x111] sm:$0xff]
      %v2439 = vld [vmem:[#allocation3 + $0x129] sm:$0xff]
      %v2440 = vld [vmem:[#allocation3 + $0x131] sm:$0xff]
      %v2441 = vld [vmem:[#allocation3 + $0x149] sm:$0xff]
      %v2442 = vld [vmem:[#allocation3 + $0x151] sm:$0xff]
      %v2443 = vld [vmem:[#allocation3 + $0x169] sm:$0xff]
      %v2444 = vld [vmem:[#allocation3 + $0x171] sm:$0xff]
      %v2445 = vld [vmem:[#allocation3 + $0x189] sm:$0xff]
      %v2446 = vld [vmem:[#allocation3 + $0x191] sm:$0xff]
      %v2447 = vld [vmem:[#allocation3 + $0x1a9] sm:$0xff]
      %v2448 = vld [vmem:[#allocation3 + $0x1b1] sm:$0xff]
      %v2449 = vld [vmem:[#allocation3 + $0x1c9] sm:$0xff]
      %v2450 = vld [vmem:[#allocation3 + $0x1d1] sm:$0xff]
      %v2451 = vld [vmem:[#allocation3 + $0x1e9] sm:$0xff]
      %v2452 = vld [vmem:[#allocation3 + $0x1f1] sm:$0xff]
      %v2453 = vpack.c.bf16 %v2421, %v2421
      %v2454 = vpack.c.bf16 %v2422, %v2422
      %v2455 = vpack.c.bf16 %v2423, %v2423
      %v2456 = vpack.c.bf16 %v2424, %v2424
      %v2457 = vpack.c.bf16 %v2425, %v2425
      %v2458 = vpack.c.bf16 %v2426, %v2426
      %v2459 = vpack.c.bf16 %v2427, %v2427
      %v2460 = vpack.c.bf16 %v2428, %v2428
      %v2461 = vpack.c.bf16 %v2429, %v2429
      %v2462 = vpack.c.bf16 %v2430, %v2430
      %v2463 = vpack.c.bf16 %v2431, %v2431
      %v2464 = vpack.c.bf16 %v2432, %v2432
      %v2465 = vpack.c.bf16 %v2433, %v2433
      %v2466 = vpack.c.bf16 %v2434, %v2434
      %v2467 = vpack.c.bf16 %v2435, %v2435
      %v2468 = vpack.c.bf16 %v2436, %v2436
      %v2469 = vpack.c.bf16 %v2437, %v2437
      %v2470 = vpack.c.bf16 %v2438, %v2438
      %v2471 = vpack.c.bf16 %v2439, %v2439
      %v2472 = vpack.c.bf16 %v2440, %v2440
      %v2473 = vpack.c.bf16 %v2441, %v2441
      %v2474 = vpack.c.bf16 %v2442, %v2442
      %v2475 = vpack.c.bf16 %v2443, %v2443
      %v2476 = vpack.c.bf16 %v2444, %v2444
      %v2477 = vpack.c.bf16 %v2445, %v2445
      %v2478 = vpack.c.bf16 %v2446, %v2446
      %v2479 = vpack.c.bf16 %v2447, %v2447
      %v2480 = vpack.c.bf16 %v2448, %v2448
      %v2481 = vpack.c.bf16 %v2449, %v2449
      %v2482 = vpack.c.bf16 %v2450, %v2450
      %v2483 = vpack.c.bf16 %v2451, %v2451
      %v2484 = vpack.c.bf16 %v2452, %v2452
      %2485 = vst [vmem:[#allocation4 + $0x8] sm:$0xf] %v2453
      %2486 = vst [vmem:[#allocation4 + $0x2c] sm:$0xf] %v2454
      %2487 = vst [vmem:[#allocation4 + $0x50] sm:$0xf] %v2455
      %2488 = vst [vmem:[#allocation4 + $0x74] sm:$0xf] %v2456
      %2489 = vst [vmem:[#allocation4 + $0x98] sm:$0xf] %v2457
      %2490 = vst [vmem:[#allocation4 + $0xbc] sm:$0xf] %v2458
      %2491 = vst [vmem:[#allocation4 + $0xe0] sm:$0xf] %v2459
      %2492 = vst [vmem:[#allocation4 + $0x104] sm:$0xf] %v2460
      %2493 = vst [vmem:[#allocation4 + $0x128] sm:$0xf] %v2461
      %2494 = vst [vmem:[#allocation4 + $0x14c] sm:$0xf] %v2462
      %2495 = vst [vmem:[#allocation4 + $0x170] sm:$0xf] %v2463
      %2496 = vst [vmem:[#allocation4 + $0x194] sm:$0xf] %v2464
      %2497 = vst [vmem:[#allocation4 + $0x1b8] sm:$0xf] %v2465
      %2498 = vst [vmem:[#allocation4 + $0x1dc] sm:$0xf] %v2466
      %2499 = vst [vmem:[#allocation4 + $0x200] sm:$0xf] %v2467
      %2500 = vst [vmem:[#allocation4 + $0x224] sm:$0xf] %v2468
      %2501 = vst [vmem:[#allocation4 + $0x248] sm:$0xf] %v2469
      %2502 = vst [vmem:[#allocation4 + $0x26c] sm:$0xf] %v2470
      %2503 = vst [vmem:[#allocation4 + $0x290] sm:$0xf] %v2471
      %2504 = vst [vmem:[#allocation4 + $0x2b4] sm:$0xf] %v2472
      %2505 = vst [vmem:[#allocation4 + $0x2d8] sm:$0xf] %v2473
      %2506 = vst [vmem:[#allocation4 + $0x2fc] sm:$0xf] %v2474
      %2507 = vst [vmem:[#allocation4 + $0x320] sm:$0xf] %v2475
      %2508 = vst [vmem:[#allocation4 + $0x344] sm:$0xf] %v2476
      %2509 = vst [vmem:[#allocation4 + $0x368] sm:$0xf] %v2477
      %2510 = vst [vmem:[#allocation4 + $0x38c] sm:$0xf] %v2478
      %2511 = vst [vmem:[#allocation4 + $0x3b0] sm:$0xf] %v2479
      %2512 = vst [vmem:[#allocation4 + $0x3d4] sm:$0xf] %v2480
      %2513 = vst [vmem:[#allocation4 + $0x3f8] sm:$0xf] %v2481
      %2514 = vst [vmem:[#allocation4 + $0x41c] sm:$0xf] %v2482
      %2515 = vst [vmem:[#allocation4 + $0x440] sm:$0xf] %v2483
      %2516 = vst [vmem:[#allocation4 + $0x464] sm:$0xf] %v2484
      %v2517 = vld [vmem:[%s2196 + $0x7] sm:$0xff]
      %v2518 = vld [vmem:[%s2196 + $0xf] sm:$0xff]
      %v2519 = vld [vmem:[%s2196 + $0x27] sm:$0xff]
      %v2520 = vld [vmem:[%s2196 + $0x2f] sm:$0xff]
      %v2521 = vld [vmem:[%s2196 + $0x47] sm:$0xff]
      %v2522 = vld [vmem:[%s2196 + $0x4f] sm:$0xff]
      %v2523 = vld [vmem:[%s2196 + $0x67] sm:$0xff]
      %v2524 = vld [vmem:[%s2196 + $0x6f] sm:$0xff]
      %v2525 = vld [vmem:[%s2196 + $0x87] sm:$0xff]
      %v2526 = vld [vmem:[%s2196 + $0x8f] sm:$0xff]
      %v2527 = vld [vmem:[%s2196 + $0xa7] sm:$0xff]
      %v2528 = vld [vmem:[%s2196 + $0xaf] sm:$0xff]
      %v2529 = vld [vmem:[%s2196 + $0xc7] sm:$0xff]
      %v2530 = vld [vmem:[%s2196 + $0xcf] sm:$0xff]
      %v2531 = vld [vmem:[%s2196 + $0xe7] sm:$0xff]
      %v2532 = vld [vmem:[%s2196 + $0xef] sm:$0xff]
      %v2533 = vld [vmem:[%s2196 + $0x107] sm:$0xff]
      %v2534 = vld [vmem:[%s2196 + $0x10f] sm:$0xff]
      %v2535 = vld [vmem:[%s2196 + $0x127] sm:$0xff]
      %v2536 = vld [vmem:[%s2196 + $0x12f] sm:$0xff]
      %v2537 = vld [vmem:[%s2196 + $0x147] sm:$0xff]
      %v2538 = vld [vmem:[%s2196 + $0x14f] sm:$0xff]
      %v2539 = vld [vmem:[%s2196 + $0x167] sm:$0xff]
      %v2540 = vld [vmem:[%s2196 + $0x16f] sm:$0xff]
      %v2541 = vld [vmem:[%s2196 + $0x187] sm:$0xff]
      %v2542 = vld [vmem:[%s2196 + $0x18f] sm:$0xff]
      %v2543 = vld [vmem:[%s2196 + $0x1a7] sm:$0xff]
      %v2544 = vld [vmem:[%s2196 + $0x1af] sm:$0xff]
      %v2545 = vld [vmem:[%s2196 + $0x1c7] sm:$0xff]
      %v2546 = vld [vmem:[%s2196 + $0x1cf] sm:$0xff]
      %v2547 = vld [vmem:[%s2196 + $0x1e7] sm:$0xff]
      %v2548 = vld [vmem:[%s2196 + $0x1ef] sm:$0xff]
      %v2549 = vpack.c.bf16 %v2517, %v2517
      %v2550 = vpack.c.bf16 %v2518, %v2518
      %v2551 = vpack.c.bf16 %v2519, %v2519
      %v2552 = vpack.c.bf16 %v2520, %v2520
      %v2553 = vpack.c.bf16 %v2521, %v2521
      %v2554 = vpack.c.bf16 %v2522, %v2522
      %v2555 = vpack.c.bf16 %v2523, %v2523
      %v2556 = vpack.c.bf16 %v2524, %v2524
      %v2557 = vpack.c.bf16 %v2525, %v2525
      %v2558 = vpack.c.bf16 %v2526, %v2526
      %v2559 = vpack.c.bf16 %v2527, %v2527
      %v2560 = vpack.c.bf16 %v2528, %v2528
      %v2561 = vpack.c.bf16 %v2529, %v2529
      %v2562 = vpack.c.bf16 %v2530, %v2530
      %v2563 = vpack.c.bf16 %v2531, %v2531
      %v2564 = vpack.c.bf16 %v2532, %v2532
      %v2565 = vpack.c.bf16 %v2533, %v2533
      %v2566 = vpack.c.bf16 %v2534, %v2534
      %v2567 = vpack.c.bf16 %v2535, %v2535
      %v2568 = vpack.c.bf16 %v2536, %v2536
      %v2569 = vpack.c.bf16 %v2537, %v2537
      %v2570 = vpack.c.bf16 %v2538, %v2538
      %v2571 = vpack.c.bf16 %v2539, %v2539
      %v2572 = vpack.c.bf16 %v2540, %v2540
      %v2573 = vpack.c.bf16 %v2541, %v2541
      %v2574 = vpack.c.bf16 %v2542, %v2542
      %v2575 = vpack.c.bf16 %v2543, %v2543
      %v2576 = vpack.c.bf16 %v2544, %v2544
      %v2577 = vpack.c.bf16 %v2545, %v2545
      %v2578 = vpack.c.bf16 %v2546, %v2546
      %v2579 = vpack.c.bf16 %v2547, %v2547
      %v2580 = vpack.c.bf16 %v2548, %v2548
      %2581 = vst [vmem:[#allocation4 + $0xc] sm:$0xf] %v2549
      %2582 = vst [vmem:[#allocation4 + $0x30] sm:$0xf] %v2550
      %2583 = vst [vmem:[#allocation4 + $0x54] sm:$0xf] %v2551
      %2584 = vst [vmem:[#allocation4 + $0x78] sm:$0xf] %v2552
      %2585 = vst [vmem:[#allocation4 + $0x9c] sm:$0xf] %v2553
      %2586 = vst [vmem:[#allocation4 + $0xc0] sm:$0xf] %v2554
      %2587 = vst [vmem:[#allocation4 + $0xe4] sm:$0xf] %v2555
      %2588 = vst [vmem:[#allocation4 + $0x108] sm:$0xf] %v2556
      %2589 = vst [vmem:[#allocation4 + $0x12c] sm:$0xf] %v2557
      %2590 = vst [vmem:[#allocation4 + $0x150] sm:$0xf] %v2558
      %2591 = vst [vmem:[#allocation4 + $0x174] sm:$0xf] %v2559
      %2592 = vst [vmem:[#allocation4 + $0x198] sm:$0xf] %v2560
      %2593 = vst [vmem:[#allocation4 + $0x1bc] sm:$0xf] %v2561
      %2594 = vst [vmem:[#allocation4 + $0x1e0] sm:$0xf] %v2562
      %2595 = vst [vmem:[#allocation4 + $0x204] sm:$0xf] %v2563
      %2596 = vst [vmem:[#allocation4 + $0x228] sm:$0xf] %v2564
      %2597 = vst [vmem:[#allocation4 + $0x24c] sm:$0xf] %v2565
      %2598 = vst [vmem:[#allocation4 + $0x270] sm:$0xf] %v2566
      %2599 = vst [vmem:[#allocation4 + $0x294] sm:$0xf] %v2567
      %2600 = vst [vmem:[#allocation4 + $0x2b8] sm:$0xf] %v2568
      %2601 = vst [vmem:[#allocation4 + $0x2dc] sm:$0xf] %v2569
      %2602 = vst [vmem:[#allocation4 + $0x300] sm:$0xf] %v2570
      %2603 = vst [vmem:[#allocation4 + $0x324] sm:$0xf] %v2571
      %2604 = vst [vmem:[#allocation4 + $0x348] sm:$0xf] %v2572
      %2605 = vst [vmem:[#allocation4 + $0x36c] sm:$0xf] %v2573
      %2606 = vst [vmem:[#allocation4 + $0x390] sm:$0xf] %v2574
      %2607 = vst [vmem:[#allocation4 + $0x3b4] sm:$0xf] %v2575
      %2608 = vst [vmem:[#allocation4 + $0x3d8] sm:$0xf] %v2576
      %2609 = vst [vmem:[#allocation4 + $0x3fc] sm:$0xf] %v2577
      %2610 = vst [vmem:[#allocation4 + $0x420] sm:$0xf] %v2578
      %2611 = vst [vmem:[#allocation4 + $0x444] sm:$0xf] %v2579
      %2612 = vst [vmem:[#allocation4 + $0x468] sm:$0xf] %v2580
      %v2613 = vld [vmem:[%s2196 + $0x8] sm:$0xff]
      %v2614 = vld [vmem:[%s2196 + $0x10] sm:$0xff]
      %v2615 = vld [vmem:[%s2196 + $0x28] sm:$0xff]
      %v2616 = vld [vmem:[%s2196 + $0x30] sm:$0xff]
      %v2617 = vld [vmem:[%s2196 + $0x48] sm:$0xff]
      %v2618 = vld [vmem:[%s2196 + $0x50] sm:$0xff]
      %v2619 = vld [vmem:[%s2196 + $0x68] sm:$0xff]
      %v2620 = vld [vmem:[%s2196 + $0x70] sm:$0xff]
      %v2621 = vld [vmem:[%s2196 + $0x88] sm:$0xff]
      %v2622 = vld [vmem:[%s2196 + $0x90] sm:$0xff]
      %v2623 = vld [vmem:[%s2196 + $0xa8] sm:$0xff]
      %v2624 = vld [vmem:[%s2196 + $0xb0] sm:$0xff]
      %v2625 = vld [vmem:[%s2196 + $0xc8] sm:$0xff]
      %v2626 = vld [vmem:[%s2196 + $0xd0] sm:$0xff]
      %v2627 = vld [vmem:[%s2196 + $0xe8] sm:$0xff]
      %v2628 = vld [vmem:[%s2196 + $0xf0] sm:$0xff]
      %v2629 = vld [vmem:[%s2196 + $0x108] sm:$0xff]
      %v2630 = vld [vmem:[%s2196 + $0x110] sm:$0xff]
      %v2631 = vld [vmem:[%s2196 + $0x128] sm:$0xff]
      %v2632 = vld [vmem:[%s2196 + $0x130] sm:$0xff]
      %v2633 = vld [vmem:[%s2196 + $0x148] sm:$0xff]
      %v2634 = vld [vmem:[%s2196 + $0x150] sm:$0xff]
      %v2635 = vld [vmem:[%s2196 + $0x168] sm:$0xff]
      %v2636 = vld [vmem:[%s2196 + $0x170] sm:$0xff]
      %v2637 = vld [vmem:[%s2196 + $0x188] sm:$0xff]
      %v2638 = vld [vmem:[%s2196 + $0x190] sm:$0xff]
      %v2639 = vld [vmem:[%s2196 + $0x1a8] sm:$0xff]
      %v2640 = vld [vmem:[%s2196 + $0x1b0] sm:$0xff]
      %v2641 = vld [vmem:[%s2196 + $0x1c8] sm:$0xff]
      %v2642 = vld [vmem:[%s2196 + $0x1d0] sm:$0xff]
      %v2643 = vld [vmem:[%s2196 + $0x1e8] sm:$0xff]
      %v2644 = vld [vmem:[%s2196 + $0x1f0] sm:$0xff]
      %v2645 = vpack.c.bf16 %v2613, %v2613
      %v2646 = vpack.c.bf16 %v2614, %v2614
      %v2647 = vpack.c.bf16 %v2615, %v2615
      %v2648 = vpack.c.bf16 %v2616, %v2616
      %v2649 = vpack.c.bf16 %v2617, %v2617
      %v2650 = vpack.c.bf16 %v2618, %v2618
      %v2651 = vpack.c.bf16 %v2619, %v2619
      %v2652 = vpack.c.bf16 %v2620, %v2620
      %v2653 = vpack.c.bf16 %v2621, %v2621
      %v2654 = vpack.c.bf16 %v2622, %v2622
      %v2655 = vpack.c.bf16 %v2623, %v2623
      %v2656 = vpack.c.bf16 %v2624, %v2624
      %v2657 = vpack.c.bf16 %v2625, %v2625
      %v2658 = vpack.c.bf16 %v2626, %v2626
      %v2659 = vpack.c.bf16 %v2627, %v2627
      %v2660 = vpack.c.bf16 %v2628, %v2628
      %v2661 = vpack.c.bf16 %v2629, %v2629
      %v2662 = vpack.c.bf16 %v2630, %v2630
      %v2663 = vpack.c.bf16 %v2631, %v2631
      %v2664 = vpack.c.bf16 %v2632, %v2632
      %v2665 = vpack.c.bf16 %v2633, %v2633
      %v2666 = vpack.c.bf16 %v2634, %v2634
      %v2667 = vpack.c.bf16 %v2635, %v2635
      %v2668 = vpack.c.bf16 %v2636, %v2636
      %v2669 = vpack.c.bf16 %v2637, %v2637
      %v2670 = vpack.c.bf16 %v2638, %v2638
      %v2671 = vpack.c.bf16 %v2639, %v2639
      %v2672 = vpack.c.bf16 %v2640, %v2640
      %v2673 = vpack.c.bf16 %v2641, %v2641
      %v2674 = vpack.c.bf16 %v2642, %v2642
      %v2675 = vpack.c.bf16 %v2643, %v2643
      %v2676 = vpack.c.bf16 %v2644, %v2644
      %2677 = vst [vmem:[#allocation4 + $0x10] sm:$0xf] %v2645
      %2678 = vst [vmem:[#allocation4 + $0x34] sm:$0xf] %v2646
      %2679 = vst [vmem:[#allocation4 + $0x58] sm:$0xf] %v2647
      %2680 = vst [vmem:[#allocation4 + $0x7c] sm:$0xf] %v2648
      %2681 = vst [vmem:[#allocation4 + $0xa0] sm:$0xf] %v2649
      %2682 = vst [vmem:[#allocation4 + $0xc4] sm:$0xf] %v2650
      %2683 = vst [vmem:[#allocation4 + $0xe8] sm:$0xf] %v2651
      %2684 = vst [vmem:[#allocation4 + $0x10c] sm:$0xf] %v2652
      %2685 = vst [vmem:[#allocation4 + $0x130] sm:$0xf] %v2653
      %2686 = vst [vmem:[#allocation4 + $0x154] sm:$0xf] %v2654
      %2687 = vst [vmem:[#allocation4 + $0x178] sm:$0xf] %v2655
      %2688 = vst [vmem:[#allocation4 + $0x19c] sm:$0xf] %v2656
      %2689 = vst [vmem:[#allocation4 + $0x1c0] sm:$0xf] %v2657
      %2690 = vst [vmem:[#allocation4 + $0x1e4] sm:$0xf] %v2658
      %2691 = vst [vmem:[#allocation4 + $0x208] sm:$0xf] %v2659
      %2692 = vst [vmem:[#allocation4 + $0x22c] sm:$0xf] %v2660
      %2693 = vst [vmem:[#allocation4 + $0x250] sm:$0xf] %v2661
      %2694 = vst [vmem:[#allocation4 + $0x274] sm:$0xf] %v2662
      %2695 = vst [vmem:[#allocation4 + $0x298] sm:$0xf] %v2663
      %2696 = vst [vmem:[#allocation4 + $0x2bc] sm:$0xf] %v2664
      %2697 = vst [vmem:[#allocation4 + $0x2e0] sm:$0xf] %v2665
      %2698 = vst [vmem:[#allocation4 + $0x304] sm:$0xf] %v2666
      %2699 = vst [vmem:[#allocation4 + $0x328] sm:$0xf] %v2667
      %2700 = vst [vmem:[#allocation4 + $0x34c] sm:$0xf] %v2668
      %2701 = vst [vmem:[#allocation4 + $0x370] sm:$0xf] %v2669
      %2702 = vst [vmem:[#allocation4 + $0x394] sm:$0xf] %v2670
      %2703 = vst [vmem:[#allocation4 + $0x3b8] sm:$0xf] %v2671
      %2704 = vst [vmem:[#allocation4 + $0x3dc] sm:$0xf] %v2672
      %2705 = vst [vmem:[#allocation4 + $0x400] sm:$0xf] %v2673
      %2706 = vst [vmem:[#allocation4 + $0x424] sm:$0xf] %v2674
      %2707 = vst [vmem:[#allocation4 + $0x448] sm:$0xf] %v2675
      %2708 = vst [vmem:[#allocation4 + $0x46c] sm:$0xf] %v2676
      %v2709 = vld [vmem:[%s2196 + $0x9] sm:$0xff]
      %v2710 = vld [vmem:[%s2196 + $0x11] sm:$0xff]
      %v2711 = vld [vmem:[%s2196 + $0x29] sm:$0xff]
      %v2712 = vld [vmem:[%s2196 + $0x31] sm:$0xff]
      %v2713 = vld [vmem:[%s2196 + $0x49] sm:$0xff]
      %v2714 = vld [vmem:[%s2196 + $0x51] sm:$0xff]
      %v2715 = vld [vmem:[%s2196 + $0x69] sm:$0xff]
      %v2716 = vld [vmem:[%s2196 + $0x71] sm:$0xff]
      %v2717 = vld [vmem:[%s2196 + $0x89] sm:$0xff]
      %v2718 = vld [vmem:[%s2196 + $0x91] sm:$0xff]
      %v2719 = vld [vmem:[%s2196 + $0xa9] sm:$0xff]
      %v2720 = vld [vmem:[%s2196 + $0xb1] sm:$0xff]
      %v2721 = vld [vmem:[%s2196 + $0xc9] sm:$0xff]
      %v2722 = vld [vmem:[%s2196 + $0xd1] sm:$0xff]
      %v2723 = vld [vmem:[%s2196 + $0xe9] sm:$0xff]
      %v2724 = vld [vmem:[%s2196 + $0xf1] sm:$0xff]
      %v2725 = vld [vmem:[%s2196 + $0x109] sm:$0xff]
      %v2726 = vld [vmem:[%s2196 + $0x111] sm:$0xff]
      %v2727 = vld [vmem:[%s2196 + $0x129] sm:$0xff]
      %v2728 = vld [vmem:[%s2196 + $0x131] sm:$0xff]
      %v2729 = vld [vmem:[%s2196 + $0x149] sm:$0xff]
      %v2730 = vld [vmem:[%s2196 + $0x151] sm:$0xff]
      %v2731 = vld [vmem:[%s2196 + $0x169] sm:$0xff]
      %v2732 = vld [vmem:[%s2196 + $0x171] sm:$0xff]
      %v2733 = vld [vmem:[%s2196 + $0x189] sm:$0xff]
      %v2734 = vld [vmem:[%s2196 + $0x191] sm:$0xff]
      %v2735 = vld [vmem:[%s2196 + $0x1a9] sm:$0xff]
      %v2736 = vld [vmem:[%s2196 + $0x1b1] sm:$0xff]
      %v2737 = vld [vmem:[%s2196 + $0x1c9] sm:$0xff]
      %v2738 = vld [vmem:[%s2196 + $0x1d1] sm:$0xff]
      %v2739 = vld [vmem:[%s2196 + $0x1e9] sm:$0xff]
      %v2740 = vld [vmem:[%s2196 + $0x1f1] sm:$0xff]
      %v2741 = vpack.c.bf16 %v2709, %v2709
      %v2742 = vpack.c.bf16 %v2710, %v2710
      %v2743 = vpack.c.bf16 %v2711, %v2711
      %v2744 = vpack.c.bf16 %v2712, %v2712
      %v2745 = vpack.c.bf16 %v2713, %v2713
      %v2746 = vpack.c.bf16 %v2714, %v2714
      %v2747 = vpack.c.bf16 %v2715, %v2715
      %v2748 = vpack.c.bf16 %v2716, %v2716
      %v2749 = vpack.c.bf16 %v2717, %v2717
      %v2750 = vpack.c.bf16 %v2718, %v2718
      %v2751 = vpack.c.bf16 %v2719, %v2719
      %v2752 = vpack.c.bf16 %v2720, %v2720
      %v2753 = vpack.c.bf16 %v2721, %v2721
      %v2754 = vpack.c.bf16 %v2722, %v2722
      %v2755 = vpack.c.bf16 %v2723, %v2723
      %v2756 = vpack.c.bf16 %v2724, %v2724
      %v2757 = vpack.c.bf16 %v2725, %v2725
      %v2758 = vpack.c.bf16 %v2726, %v2726
      %v2759 = vpack.c.bf16 %v2727, %v2727
      %v2760 = vpack.c.bf16 %v2728, %v2728
      %v2761 = vpack.c.bf16 %v2729, %v2729
      %v2762 = vpack.c.bf16 %v2730, %v2730
      %v2763 = vpack.c.bf16 %v2731, %v2731
      %v2764 = vpack.c.bf16 %v2732, %v2732
      %v2765 = vpack.c.bf16 %v2733, %v2733
      %v2766 = vpack.c.bf16 %v2734, %v2734
      %v2767 = vpack.c.bf16 %v2735, %v2735
      %v2768 = vpack.c.bf16 %v2736, %v2736
      %v2769 = vpack.c.bf16 %v2737, %v2737
      %v2770 = vpack.c.bf16 %v2738, %v2738
      %v2771 = vpack.c.bf16 %v2739, %v2739
      %v2772 = vpack.c.bf16 %v2740, %v2740
      %2773 = vst [vmem:[#allocation4 + $0x14] sm:$0xf] %v2741
      %2774 = vst [vmem:[#allocation4 + $0x38] sm:$0xf] %v2742
      %2775 = vst [vmem:[#allocation4 + $0x5c] sm:$0xf] %v2743
      %2776 = vst [vmem:[#allocation4 + $0x80] sm:$0xf] %v2744
      %2777 = vst [vmem:[#allocation4 + $0xa4] sm:$0xf] %v2745
      %2778 = vst [vmem:[#allocation4 + $0xc8] sm:$0xf] %v2746
      %2779 = vst [vmem:[#allocation4 + $0xec] sm:$0xf] %v2747
      %2780 = vst [vmem:[#allocation4 + $0x110] sm:$0xf] %v2748
      %2781 = vst [vmem:[#allocation4 + $0x134] sm:$0xf] %v2749
      %2782 = vst [vmem:[#allocation4 + $0x158] sm:$0xf] %v2750
      %2783 = vst [vmem:[#allocation4 + $0x17c] sm:$0xf] %v2751
      %2784 = vst [vmem:[#allocation4 + $0x1a0] sm:$0xf] %v2752
      %2785 = vst [vmem:[#allocation4 + $0x1c4] sm:$0xf] %v2753
      %2786 = vst [vmem:[#allocation4 + $0x1e8] sm:$0xf] %v2754
      %2787 = vst [vmem:[#allocation4 + $0x20c] sm:$0xf] %v2755
      %2788 = vst [vmem:[#allocation4 + $0x230] sm:$0xf] %v2756
      %2789 = vst [vmem:[#allocation4 + $0x254] sm:$0xf] %v2757
      %2790 = vst [vmem:[#allocation4 + $0x278] sm:$0xf] %v2758
      %2791 = vst [vmem:[#allocation4 + $0x29c] sm:$0xf] %v2759
      %2792 = vst [vmem:[#allocation4 + $0x2c0] sm:$0xf] %v2760
      %2793 = vst [vmem:[#allocation4 + $0x2e4] sm:$0xf] %v2761
      %2794 = vst [vmem:[#allocation4 + $0x308] sm:$0xf] %v2762
      %2795 = vst [vmem:[#allocation4 + $0x32c] sm:$0xf] %v2763
      %2796 = vst [vmem:[#allocation4 + $0x350] sm:$0xf] %v2764
      %2797 = vst [vmem:[#allocation4 + $0x374] sm:$0xf] %v2765
      %2798 = vst [vmem:[#allocation4 + $0x398] sm:$0xf] %v2766
      %2799 = vst [vmem:[#allocation4 + $0x3bc] sm:$0xf] %v2767
      %2800 = vst [vmem:[#allocation4 + $0x3e0] sm:$0xf] %v2768
      %2801 = vst [vmem:[#allocation4 + $0x404] sm:$0xf] %v2769
      %2802 = vst [vmem:[#allocation4 + $0x428] sm:$0xf] %v2770
      %2803 = vst [vmem:[#allocation4 + $0x44c] sm:$0xf] %v2771
      %2804 = vst [vmem:[#allocation4 + $0x470] sm:$0xf] %v2772
      %s2805 = scalar_lea.vmem [#allocation3], 64
      %v2806 = vld [vmem:[%s2805 + $0x7] sm:$0xff]
      %v2807 = vld [vmem:[%s2805 + $0xf] sm:$0xff]
      %v2808 = vld [vmem:[%s2805 + $0x27] sm:$0xff]
      %v2809 = vld [vmem:[%s2805 + $0x2f] sm:$0xff]
      %v2810 = vld [vmem:[%s2805 + $0x47] sm:$0xff]
      %v2811 = vld [vmem:[%s2805 + $0x4f] sm:$0xff]
      %v2812 = vld [vmem:[%s2805 + $0x67] sm:$0xff]
      %v2813 = vld [vmem:[%s2805 + $0x6f] sm:$0xff]
      %v2814 = vld [vmem:[%s2805 + $0x87] sm:$0xff]
      %v2815 = vld [vmem:[%s2805 + $0x8f] sm:$0xff]
      %v2816 = vld [vmem:[%s2805 + $0xa7] sm:$0xff]
      %v2817 = vld [vmem:[%s2805 + $0xaf] sm:$0xff]
      %v2818 = vld [vmem:[%s2805 + $0xc7] sm:$0xff]
      %v2819 = vld [vmem:[%s2805 + $0xcf] sm:$0xff]
      %v2820 = vld [vmem:[%s2805 + $0xe7] sm:$0xff]
      %v2821 = vld [vmem:[%s2805 + $0xef] sm:$0xff]
      %v2822 = vld [vmem:[%s2805 + $0x107] sm:$0xff]
      %v2823 = vld [vmem:[%s2805 + $0x10f] sm:$0xff]
      %v2824 = vld [vmem:[%s2805 + $0x127] sm:$0xff]
      %v2825 = vld [vmem:[%s2805 + $0x12f] sm:$0xff]
      %v2826 = vld [vmem:[%s2805 + $0x147] sm:$0xff]
      %v2827 = vld [vmem:[%s2805 + $0x14f] sm:$0xff]
      %v2828 = vld [vmem:[%s2805 + $0x167] sm:$0xff]
      %v2829 = vld [vmem:[%s2805 + $0x16f] sm:$0xff]
      %v2830 = vld [vmem:[%s2805 + $0x187] sm:$0xff]
      %v2831 = vld [vmem:[%s2805 + $0x18f] sm:$0xff]
      %v2832 = vld [vmem:[%s2805 + $0x1a7] sm:$0xff]
      %v2833 = vld [vmem:[%s2805 + $0x1af] sm:$0xff]
      %v2834 = vld [vmem:[%s2805 + $0x1c7] sm:$0xff]
      %v2835 = vld [vmem:[%s2805 + $0x1cf] sm:$0xff]
      %v2836 = vld [vmem:[%s2805 + $0x1e7] sm:$0xff]
      %v2837 = vld [vmem:[%s2805 + $0x1ef] sm:$0xff]
      %v2838 = vpack.c.bf16 %v2806, %v2806
      %v2839 = vpack.c.bf16 %v2807, %v2807
      %v2840 = vpack.c.bf16 %v2808, %v2808
      %v2841 = vpack.c.bf16 %v2809, %v2809
      %v2842 = vpack.c.bf16 %v2810, %v2810
      %v2843 = vpack.c.bf16 %v2811, %v2811
      %v2844 = vpack.c.bf16 %v2812, %v2812
      %v2845 = vpack.c.bf16 %v2813, %v2813
      %v2846 = vpack.c.bf16 %v2814, %v2814
      %v2847 = vpack.c.bf16 %v2815, %v2815
      %v2848 = vpack.c.bf16 %v2816, %v2816
      %v2849 = vpack.c.bf16 %v2817, %v2817
      %v2850 = vpack.c.bf16 %v2818, %v2818
      %v2851 = vpack.c.bf16 %v2819, %v2819
      %v2852 = vpack.c.bf16 %v2820, %v2820
      %v2853 = vpack.c.bf16 %v2821, %v2821
      %v2854 = vpack.c.bf16 %v2822, %v2822
      %v2855 = vpack.c.bf16 %v2823, %v2823
      %v2856 = vpack.c.bf16 %v2824, %v2824
      %v2857 = vpack.c.bf16 %v2825, %v2825
      %v2858 = vpack.c.bf16 %v2826, %v2826
      %v2859 = vpack.c.bf16 %v2827, %v2827
      %v2860 = vpack.c.bf16 %v2828, %v2828
      %v2861 = vpack.c.bf16 %v2829, %v2829
      %v2862 = vpack.c.bf16 %v2830, %v2830
      %v2863 = vpack.c.bf16 %v2831, %v2831
      %v2864 = vpack.c.bf16 %v2832, %v2832
      %v2865 = vpack.c.bf16 %v2833, %v2833
      %v2866 = vpack.c.bf16 %v2834, %v2834
      %v2867 = vpack.c.bf16 %v2835, %v2835
      %v2868 = vpack.c.bf16 %v2836, %v2836
      %v2869 = vpack.c.bf16 %v2837, %v2837
      %2870 = vst [vmem:[#allocation4 + $0x18] sm:$0xf] %v2838
      %2871 = vst [vmem:[#allocation4 + $0x3c] sm:$0xf] %v2839
      %2872 = vst [vmem:[#allocation4 + $0x60] sm:$0xf] %v2840
      %2873 = vst [vmem:[#allocation4 + $0x84] sm:$0xf] %v2841
      %2874 = vst [vmem:[#allocation4 + $0xa8] sm:$0xf] %v2842
      %2875 = vst [vmem:[#allocation4 + $0xcc] sm:$0xf] %v2843
      %2876 = vst [vmem:[#allocation4 + $0xf0] sm:$0xf] %v2844
      %2877 = vst [vmem:[#allocation4 + $0x114] sm:$0xf] %v2845
      %2878 = vst [vmem:[#allocation4 + $0x138] sm:$0xf] %v2846
      %2879 = vst [vmem:[#allocation4 + $0x15c] sm:$0xf] %v2847
      %2880 = vst [vmem:[#allocation4 + $0x180] sm:$0xf] %v2848
      %2881 = vst [vmem:[#allocation4 + $0x1a4] sm:$0xf] %v2849
      %2882 = vst [vmem:[#allocation4 + $0x1c8] sm:$0xf] %v2850
      %2883 = vst [vmem:[#allocation4 + $0x1ec] sm:$0xf] %v2851
      %2884 = vst [vmem:[#allocation4 + $0x210] sm:$0xf] %v2852
      %2885 = vst [vmem:[#allocation4 + $0x234] sm:$0xf] %v2853
      %2886 = vst [vmem:[#allocation4 + $0x258] sm:$0xf] %v2854
      %2887 = vst [vmem:[#allocation4 + $0x27c] sm:$0xf] %v2855
      %2888 = vst [vmem:[#allocation4 + $0x2a0] sm:$0xf] %v2856
      %2889 = vst [vmem:[#allocation4 + $0x2c4] sm:$0xf] %v2857
      %2890 = vst [vmem:[#allocation4 + $0x2e8] sm:$0xf] %v2858
      %2891 = vst [vmem:[#allocation4 + $0x30c] sm:$0xf] %v2859
      %2892 = vst [vmem:[#allocation4 + $0x330] sm:$0xf] %v2860
      %2893 = vst [vmem:[#allocation4 + $0x354] sm:$0xf] %v2861
      %2894 = vst [vmem:[#allocation4 + $0x378] sm:$0xf] %v2862
      %2895 = vst [vmem:[#allocation4 + $0x39c] sm:$0xf] %v2863
      %2896 = vst [vmem:[#allocation4 + $0x3c0] sm:$0xf] %v2864
      %2897 = vst [vmem:[#allocation4 + $0x3e4] sm:$0xf] %v2865
      %2898 = vst [vmem:[#allocation4 + $0x408] sm:$0xf] %v2866
      %2899 = vst [vmem:[#allocation4 + $0x42c] sm:$0xf] %v2867
      %2900 = vst [vmem:[#allocation4 + $0x450] sm:$0xf] %v2868
      %2901 = vst [vmem:[#allocation4 + $0x474] sm:$0xf] %v2869
      %v2902 = vld [vmem:[%s2805 + $0x8] sm:$0xff]
      %v2903 = vld [vmem:[%s2805 + $0x10] sm:$0xff]
      %v2904 = vld [vmem:[%s2805 + $0x28] sm:$0xff]
      %v2905 = vld [vmem:[%s2805 + $0x30] sm:$0xff]
      %v2906 = vld [vmem:[%s2805 + $0x48] sm:$0xff]
      %v2907 = vld [vmem:[%s2805 + $0x50] sm:$0xff]
      %v2908 = vld [vmem:[%s2805 + $0x68] sm:$0xff]
      %v2909 = vld [vmem:[%s2805 + $0x70] sm:$0xff]
      %v2910 = vld [vmem:[%s2805 + $0x88] sm:$0xff]
      %v2911 = vld [vmem:[%s2805 + $0x90] sm:$0xff]
      %v2912 = vld [vmem:[%s2805 + $0xa8] sm:$0xff]
      %v2913 = vld [vmem:[%s2805 + $0xb0] sm:$0xff]
      %v2914 = vld [vmem:[%s2805 + $0xc8] sm:$0xff]
      %v2915 = vld [vmem:[%s2805 + $0xd0] sm:$0xff]
      %v2916 = vld [vmem:[%s2805 + $0xe8] sm:$0xff]
      %v2917 = vld [vmem:[%s2805 + $0xf0] sm:$0xff]
      %v2918 = vld [vmem:[%s2805 + $0x108] sm:$0xff]
      %v2919 = vld [vmem:[%s2805 + $0x110] sm:$0xff]
      %v2920 = vld [vmem:[%s2805 + $0x128] sm:$0xff]
      %v2921 = vld [vmem:[%s2805 + $0x130] sm:$0xff]
      %v2922 = vld [vmem:[%s2805 + $0x148] sm:$0xff]
      %v2923 = vld [vmem:[%s2805 + $0x150] sm:$0xff]
      %v2924 = vld [vmem:[%s2805 + $0x168] sm:$0xff]
      %v2925 = vld [vmem:[%s2805 + $0x170] sm:$0xff]
      %v2926 = vld [vmem:[%s2805 + $0x188] sm:$0xff]
      %v2927 = vld [vmem:[%s2805 + $0x190] sm:$0xff]
      %v2928 = vld [vmem:[%s2805 + $0x1a8] sm:$0xff]
      %v2929 = vld [vmem:[%s2805 + $0x1b0] sm:$0xff]
      %v2930 = vld [vmem:[%s2805 + $0x1c8] sm:$0xff]
      %v2931 = vld [vmem:[%s2805 + $0x1d0] sm:$0xff]
      %v2932 = vld [vmem:[%s2805 + $0x1e8] sm:$0xff]
      %v2933 = vld [vmem:[%s2805 + $0x1f0] sm:$0xff]
      %v2934 = vpack.c.bf16 %v2902, %v2902
      %v2935 = vpack.c.bf16 %v2903, %v2903
      %v2936 = vpack.c.bf16 %v2904, %v2904
      %v2937 = vpack.c.bf16 %v2905, %v2905
      %v2938 = vpack.c.bf16 %v2906, %v2906
      %v2939 = vpack.c.bf16 %v2907, %v2907
      %v2940 = vpack.c.bf16 %v2908, %v2908
      %v2941 = vpack.c.bf16 %v2909, %v2909
      %v2942 = vpack.c.bf16 %v2910, %v2910
      %v2943 = vpack.c.bf16 %v2911, %v2911
      %v2944 = vpack.c.bf16 %v2912, %v2912
      %v2945 = vpack.c.bf16 %v2913, %v2913
      %v2946 = vpack.c.bf16 %v2914, %v2914
      %v2947 = vpack.c.bf16 %v2915, %v2915
      %v2948 = vpack.c.bf16 %v2916, %v2916
      %v2949 = vpack.c.bf16 %v2917, %v2917
      %v2950 = vpack.c.bf16 %v2918, %v2918
      %v2951 = vpack.c.bf16 %v2919, %v2919
      %v2952 = vpack.c.bf16 %v2920, %v2920
      %v2953 = vpack.c.bf16 %v2921, %v2921
      %v2954 = vpack.c.bf16 %v2922, %v2922
      %v2955 = vpack.c.bf16 %v2923, %v2923
      %v2956 = vpack.c.bf16 %v2924, %v2924
      %v2957 = vpack.c.bf16 %v2925, %v2925
      %v2958 = vpack.c.bf16 %v2926, %v2926
      %v2959 = vpack.c.bf16 %v2927, %v2927
      %v2960 = vpack.c.bf16 %v2928, %v2928
      %v2961 = vpack.c.bf16 %v2929, %v2929
      %v2962 = vpack.c.bf16 %v2930, %v2930
      %v2963 = vpack.c.bf16 %v2931, %v2931
      %v2964 = vpack.c.bf16 %v2932, %v2932
      %v2965 = vpack.c.bf16 %v2933, %v2933
      %2966 = vst [vmem:[#allocation4 + $0x1c] sm:$0xf] %v2934
      %2967 = vst [vmem:[#allocation4 + $0x40] sm:$0xf] %v2935
      %2968 = vst [vmem:[#allocation4 + $0x64] sm:$0xf] %v2936
      %2969 = vst [vmem:[#allocation4 + $0x88] sm:$0xf] %v2937
      %2970 = vst [vmem:[#allocation4 + $0xac] sm:$0xf] %v2938
      %2971 = vst [vmem:[#allocation4 + $0xd0] sm:$0xf] %v2939
      %2972 = vst [vmem:[#allocation4 + $0xf4] sm:$0xf] %v2940
      %2973 = vst [vmem:[#allocation4 + $0x118] sm:$0xf] %v2941
      %2974 = vst [vmem:[#allocation4 + $0x13c] sm:$0xf] %v2942
      %2975 = vst [vmem:[#allocation4 + $0x160] sm:$0xf] %v2943
      %2976 = vst [vmem:[#allocation4 + $0x184] sm:$0xf] %v2944
      %2977 = vst [vmem:[#allocation4 + $0x1a8] sm:$0xf] %v2945
      %2978 = vst [vmem:[#allocation4 + $0x1cc] sm:$0xf] %v2946
      %2979 = vst [vmem:[#allocation4 + $0x1f0] sm:$0xf] %v2947
      %2980 = vst [vmem:[#allocation4 + $0x214] sm:$0xf] %v2948
      %2981 = vst [vmem:[#allocation4 + $0x238] sm:$0xf] %v2949
      %2982 = vst [vmem:[#allocation4 + $0x25c] sm:$0xf] %v2950
      %2983 = vst [vmem:[#allocation4 + $0x280] sm:$0xf] %v2951
      %2984 = vst [vmem:[#allocation4 + $0x2a4] sm:$0xf] %v2952
      %2985 = vst [vmem:[#allocation4 + $0x2c8] sm:$0xf] %v2953
      %2986 = vst [vmem:[#allocation4 + $0x2ec] sm:$0xf] %v2954
      %2987 = vst [vmem:[#allocation4 + $0x310] sm:$0xf] %v2955
      %2988 = vst [vmem:[#allocation4 + $0x334] sm:$0xf] %v2956
      %2989 = vst [vmem:[#allocation4 + $0x358] sm:$0xf] %v2957
      %2990 = vst [vmem:[#allocation4 + $0x37c] sm:$0xf] %v2958
      %2991 = vst [vmem:[#allocation4 + $0x3a0] sm:$0xf] %v2959
      %2992 = vst [vmem:[#allocation4 + $0x3c4] sm:$0xf] %v2960
      %2993 = vst [vmem:[#allocation4 + $0x3e8] sm:$0xf] %v2961
      %2994 = vst [vmem:[#allocation4 + $0x40c] sm:$0xf] %v2962
      %2995 = vst [vmem:[#allocation4 + $0x430] sm:$0xf] %v2963
      %2996 = vst [vmem:[#allocation4 + $0x454] sm:$0xf] %v2964
      %2997 = vst [vmem:[#allocation4 + $0x478] sm:$0xf] %v2965
      %v2998 = vld [vmem:[%s2805 + $0x9] sm:$0xff]
      %v2999 = vld [vmem:[%s2805 + $0x11] sm:$0xff]
      %v3000 = vld [vmem:[%s2805 + $0x29] sm:$0xff]
      %v3001 = vld [vmem:[%s2805 + $0x31] sm:$0xff]
      %v3002 = vld [vmem:[%s2805 + $0x49] sm:$0xff]
      %v3003 = vld [vmem:[%s2805 + $0x51] sm:$0xff]
      %v3004 = vld [vmem:[%s2805 + $0x69] sm:$0xff]
      %v3005 = vld [vmem:[%s2805 + $0x71] sm:$0xff]
      %v3006 = vld [vmem:[%s2805 + $0x89] sm:$0xff]
      %v3007 = vld [vmem:[%s2805 + $0x91] sm:$0xff]
      %v3008 = vld [vmem:[%s2805 + $0xa9] sm:$0xff]
      %v3009 = vld [vmem:[%s2805 + $0xb1] sm:$0xff]
      %v3010 = vld [vmem:[%s2805 + $0xc9] sm:$0xff]
      %v3011 = vld [vmem:[%s2805 + $0xd1] sm:$0xff]
      %v3012 = vld [vmem:[%s2805 + $0xe9] sm:$0xff]
      %v3013 = vld [vmem:[%s2805 + $0xf1] sm:$0xff]
      %v3014 = vld [vmem:[%s2805 + $0x109] sm:$0xff]
      %v3015 = vld [vmem:[%s2805 + $0x111] sm:$0xff]
      %v3016 = vld [vmem:[%s2805 + $0x129] sm:$0xff]
      %v3017 = vld [vmem:[%s2805 + $0x131] sm:$0xff]
      %v3018 = vld [vmem:[%s2805 + $0x149] sm:$0xff]
      %v3019 = vld [vmem:[%s2805 + $0x151] sm:$0xff]
      %v3020 = vld [vmem:[%s2805 + $0x169] sm:$0xff]
      %v3021 = vld [vmem:[%s2805 + $0x171] sm:$0xff]
      %v3022 = vld [vmem:[%s2805 + $0x189] sm:$0xff]
      %v3023 = vld [vmem:[%s2805 + $0x191] sm:$0xff]
      %v3024 = vld [vmem:[%s2805 + $0x1a9] sm:$0xff]
      %v3025 = vld [vmem:[%s2805 + $0x1b1] sm:$0xff]
      %v3026 = vld [vmem:[%s2805 + $0x1c9] sm:$0xff]
      %v3027 = vld [vmem:[%s2805 + $0x1d1] sm:$0xff]
      %v3028 = vld [vmem:[%s2805 + $0x1e9] sm:$0xff]
      %v3029 = vld [vmem:[%s2805 + $0x1f1] sm:$0xff]
      %v3030 = vpack.c.bf16 %v2998, %v2998
      %v3031 = vpack.c.bf16 %v2999, %v2999
      %v3032 = vpack.c.bf16 %v3000, %v3000
      %v3033 = vpack.c.bf16 %v3001, %v3001
      %v3034 = vpack.c.bf16 %v3002, %v3002
      %v3035 = vpack.c.bf16 %v3003, %v3003
      %v3036 = vpack.c.bf16 %v3004, %v3004
      %v3037 = vpack.c.bf16 %v3005, %v3005
      %v3038 = vpack.c.bf16 %v3006, %v3006
      %v3039 = vpack.c.bf16 %v3007, %v3007
      %v3040 = vpack.c.bf16 %v3008, %v3008
      %v3041 = vpack.c.bf16 %v3009, %v3009
      %v3042 = vpack.c.bf16 %v3010, %v3010
      %v3043 = vpack.c.bf16 %v3011, %v3011
      %v3044 = vpack.c.bf16 %v3012, %v3012
      %v3045 = vpack.c.bf16 %v3013, %v3013
      %v3046 = vpack.c.bf16 %v3014, %v3014
      %v3047 = vpack.c.bf16 %v3015, %v3015
      %v3048 = vpack.c.bf16 %v3016, %v3016
      %v3049 = vpack.c.bf16 %v3017, %v3017
      %v3050 = vpack.c.bf16 %v3018, %v3018
      %v3051 = vpack.c.bf16 %v3019, %v3019
      %v3052 = vpack.c.bf16 %v3020, %v3020
      %v3053 = vpack.c.bf16 %v3021, %v3021
      %v3054 = vpack.c.bf16 %v3022, %v3022
      %v3055 = vpack.c.bf16 %v3023, %v3023
      %v3056 = vpack.c.bf16 %v3024, %v3024
      %v3057 = vpack.c.bf16 %v3025, %v3025
      %v3058 = vpack.c.bf16 %v3026, %v3026
      %v3059 = vpack.c.bf16 %v3027, %v3027
      %v3060 = vpack.c.bf16 %v3028, %v3028
      %v3061 = vpack.c.bf16 %v3029, %v3029
      %3062 = vst [vmem:[#allocation4 + $0x20] sm:$0xf] %v3030
      %3063 = vst [vmem:[#allocation4 + $0x44] sm:$0xf] %v3031
      %3064 = vst [vmem:[#allocation4 + $0x68] sm:$0xf] %v3032
      %3065 = vst [vmem:[#allocation4 + $0x8c] sm:$0xf] %v3033
      %3066 = vst [vmem:[#allocation4 + $0xb0] sm:$0xf] %v3034
      %3067 = vst [vmem:[#allocation4 + $0xd4] sm:$0xf] %v3035
      %3068 = vst [vmem:[#allocation4 + $0xf8] sm:$0xf] %v3036
      %3069 = vst [vmem:[#allocation4 + $0x11c] sm:$0xf] %v3037
      %3070 = vst [vmem:[#allocation4 + $0x140] sm:$0xf] %v3038
      %3071 = vst [vmem:[#allocation4 + $0x164] sm:$0xf] %v3039
      %3072 = vst [vmem:[#allocation4 + $0x188] sm:$0xf] %v3040
      %3073 = vst [vmem:[#allocation4 + $0x1ac] sm:$0xf] %v3041
      %3074 = vst [vmem:[#allocation4 + $0x1d0] sm:$0xf] %v3042
      %3075 = vst [vmem:[#allocation4 + $0x1f4] sm:$0xf] %v3043
      %3076 = vst [vmem:[#allocation4 + $0x218] sm:$0xf] %v3044
      %3077 = vst [vmem:[#allocation4 + $0x23c] sm:$0xf] %v3045
      %3078 = vst [vmem:[#allocation4 + $0x260] sm:$0xf] %v3046
      %3079 = vst [vmem:[#allocation4 + $0x284] sm:$0xf] %v3047
      %3080 = vst [vmem:[#allocation4 + $0x2a8] sm:$0xf] %v3048
      %3081 = vst [vmem:[#allocation4 + $0x2cc] sm:$0xf] %v3049
      %3082 = vst [vmem:[#allocation4 + $0x2f0] sm:$0xf] %v3050
      %3083 = vst [vmem:[#allocation4 + $0x314] sm:$0xf] %v3051
      %3084 = vst [vmem:[#allocation4 + $0x338] sm:$0xf] %v3052
      %3085 = vst [vmem:[#allocation4 + $0x35c] sm:$0xf] %v3053
      %3086 = vst [vmem:[#allocation4 + $0x380] sm:$0xf] %v3054
      %3087 = vst [vmem:[#allocation4 + $0x3a4] sm:$0xf] %v3055
      %3088 = vst [vmem:[#allocation4 + $0x3c8] sm:$0xf] %v3056
      %3089 = vst [vmem:[#allocation4 + $0x3ec] sm:$0xf] %v3057
      %3090 = vst [vmem:[#allocation4 + $0x410] sm:$0xf] %v3058
      %3091 = vst [vmem:[#allocation4 + $0x434] sm:$0xf] %v3059
      %3092 = vst [vmem:[#allocation4 + $0x458] sm:$0xf] %v3060
      %3093 = vst [vmem:[#allocation4 + $0x47c] sm:$0xf] %v3061
      %v3094 = vld [vmem:[#allocation4] sm:$0xff]
      %v3095 = vld [vmem:[#allocation4 + $0x8] sm:$0xff]
      %v3096 = vld [vmem:[#allocation4 + $0x10] sm:$0xff]
      %v3097 = vld [vmem:[#allocation4 + $0x18] sm:$0xff]
      %v3098 = vld [vmem:[#allocation4 + $0x20] sm:$0xf]
      %v3099 = vld [vmem:[#allocation4 + $0x24] sm:$0xff]
      %v3100 = vld [vmem:[#allocation4 + $0x2c] sm:$0xff]
      %v3101 = vld [vmem:[#allocation4 + $0x34] sm:$0xff]
      %v3102 = vld [vmem:[#allocation4 + $0x3c] sm:$0xff]
      %v3103 = vld [vmem:[#allocation4 + $0x44] sm:$0xf]
      %v3104 = vld [vmem:[#allocation4 + $0x48] sm:$0xff]
      %v3105 = vld [vmem:[#allocation4 + $0x50] sm:$0xff]
      %v3106 = vld [vmem:[#allocation4 + $0x58] sm:$0xff]
      %v3107 = vld [vmem:[#allocation4 + $0x60] sm:$0xff]
      %v3108 = vld [vmem:[#allocation4 + $0x68] sm:$0xf]
      %v3109 = vld [vmem:[#allocation4 + $0x6c] sm:$0xff]
      %v3110 = vld [vmem:[#allocation4 + $0x74] sm:$0xff]
      %v3111 = vld [vmem:[#allocation4 + $0x7c] sm:$0xff]
      %v3112 = vld [vmem:[#allocation4 + $0x84] sm:$0xff]
      %v3113 = vld [vmem:[#allocation4 + $0x8c] sm:$0xf]
      %v3114 = vld [vmem:[#allocation4 + $0x90] sm:$0xff]
      %v3115 = vld [vmem:[#allocation4 + $0x98] sm:$0xff]
      %v3116 = vld [vmem:[#allocation4 + $0xa0] sm:$0xff]
      %v3117 = vld [vmem:[#allocation4 + $0xa8] sm:$0xff]
      %v3118 = vld [vmem:[#allocation4 + $0xb0] sm:$0xf]
      %v3119 = vld [vmem:[#allocation4 + $0xb4] sm:$0xff]
      %v3120 = vld [vmem:[#allocation4 + $0xbc] sm:$0xff]
      %v3121 = vld [vmem:[#allocation4 + $0xc4] sm:$0xff]
      %v3122 = vld [vmem:[#allocation4 + $0xcc] sm:$0xff]
      %v3123 = vld [vmem:[#allocation4 + $0xd4] sm:$0xf]
      %v3124 = vld [vmem:[#allocation4 + $0xd8] sm:$0xff]
      %v3125 = vld [vmem:[#allocation4 + $0xe0] sm:$0xff]
      %v3126 = vld [vmem:[#allocation4 + $0xe8] sm:$0xff]
      %v3127 = vld [vmem:[#allocation4 + $0xf0] sm:$0xff]
      %v3128 = vld [vmem:[#allocation4 + $0xf8] sm:$0xf]
      %v3129 = vld [vmem:[#allocation4 + $0xfc] sm:$0xff]
      %v3130 = vld [vmem:[#allocation4 + $0x104] sm:$0xff]
      %v3131 = vld [vmem:[#allocation4 + $0x10c] sm:$0xff]
      %v3132 = vld [vmem:[#allocation4 + $0x114] sm:$0xff]
      %v3133 = vld [vmem:[#allocation4 + $0x11c] sm:$0xf]
      %v3134 = vld [vmem:[#allocation4 + $0x120] sm:$0xff]
      %v3135 = vld [vmem:[#allocation4 + $0x128] sm:$0xff]
      %v3136 = vld [vmem:[#allocation4 + $0x130] sm:$0xff]
      %v3137 = vld [vmem:[#allocation4 + $0x138] sm:$0xff]
      %v3138 = vld [vmem:[#allocation4 + $0x140] sm:$0xf]
      %v3139 = vld [vmem:[#allocation4 + $0x144] sm:$0xff]
      %v3140 = vld [vmem:[#allocation4 + $0x14c] sm:$0xff]
      %v3141 = vld [vmem:[#allocation4 + $0x154] sm:$0xff]
      %v3142 = vld [vmem:[#allocation4 + $0x15c] sm:$0xff]
      %v3143 = vld [vmem:[#allocation4 + $0x164] sm:$0xf]
      %v3144 = vld [vmem:[#allocation4 + $0x168] sm:$0xff]
      %v3145 = vld [vmem:[#allocation4 + $0x170] sm:$0xff]
      %v3146 = vld [vmem:[#allocation4 + $0x178] sm:$0xff]
      %v3147 = vld [vmem:[#allocation4 + $0x180] sm:$0xff]
      %v3148 = vld [vmem:[#allocation4 + $0x188] sm:$0xf]
      %v3149 = vld [vmem:[#allocation4 + $0x18c] sm:$0xff]
      %v3150 = vld [vmem:[#allocation4 + $0x194] sm:$0xff]
      %v3151 = vld [vmem:[#allocation4 + $0x19c] sm:$0xff]
      %v3152 = vld [vmem:[#allocation4 + $0x1a4] sm:$0xff]
      %v3153 = vld [vmem:[#allocation4 + $0x1ac] sm:$0xf]
      %v3154 = vld [vmem:[#allocation4 + $0x1b0] sm:$0xff]
      %v3155 = vld [vmem:[#allocation4 + $0x1b8] sm:$0xff]
      %v3156 = vld [vmem:[#allocation4 + $0x1c0] sm:$0xff]
      %v3157 = vld [vmem:[#allocation4 + $0x1c8] sm:$0xff]
      %v3158 = vld [vmem:[#allocation4 + $0x1d0] sm:$0xf]
      %v3159 = vld [vmem:[#allocation4 + $0x1d4] sm:$0xff]
      %v3160 = vld [vmem:[#allocation4 + $0x1dc] sm:$0xff]
      %v3161 = vld [vmem:[#allocation4 + $0x1e4] sm:$0xff]
      %v3162 = vld [vmem:[#allocation4 + $0x1ec] sm:$0xff]
      %v3163 = vld [vmem:[#allocation4 + $0x1f4] sm:$0xf]
      %v3164 = vld [vmem:[#allocation4 + $0x1f8] sm:$0xff]
      %v3165 = vld [vmem:[#allocation4 + $0x200] sm:$0xff]
      %v3166 = vld [vmem:[#allocation4 + $0x208] sm:$0xff]
      %v3167 = vld [vmem:[#allocation4 + $0x210] sm:$0xff]
      %v3168 = vld [vmem:[#allocation4 + $0x218] sm:$0xf]
      %v3169 = vld [vmem:[#allocation4 + $0x21c] sm:$0xff]
      %v3170 = vld [vmem:[#allocation4 + $0x224] sm:$0xff]
      %v3171 = vld [vmem:[#allocation4 + $0x22c] sm:$0xff]
      %v3172 = vld [vmem:[#allocation4 + $0x234] sm:$0xff]
      %v3173 = vld [vmem:[#allocation4 + $0x23c] sm:$0xf]
      %v3174 = vld [vmem:[#allocation4 + $0x240] sm:$0xff]
      %v3175 = vld [vmem:[#allocation4 + $0x248] sm:$0xff]
      %v3176 = vld [vmem:[#allocation4 + $0x250] sm:$0xff]
      %v3177 = vld [vmem:[#allocation4 + $0x258] sm:$0xff]
      %v3178 = vld [vmem:[#allocation4 + $0x260] sm:$0xf]
      %v3179 = vld [vmem:[#allocation4 + $0x264] sm:$0xff]
      %v3180 = vld [vmem:[#allocation4 + $0x26c] sm:$0xff]
      %v3181 = vld [vmem:[#allocation4 + $0x274] sm:$0xff]
      %v3182 = vld [vmem:[#allocation4 + $0x27c] sm:$0xff]
      %v3183 = vld [vmem:[#allocation4 + $0x284] sm:$0xf]
      %v3184 = vld [vmem:[#allocation4 + $0x288] sm:$0xff]
      %v3185 = vld [vmem:[#allocation4 + $0x290] sm:$0xff]
      %v3186 = vld [vmem:[#allocation4 + $0x298] sm:$0xff]
      %v3187 = vld [vmem:[#allocation4 + $0x2a0] sm:$0xff]
      %v3188 = vld [vmem:[#allocation4 + $0x2a8] sm:$0xf]
      %v3189 = vld [vmem:[#allocation4 + $0x2ac] sm:$0xff]
      %v3190 = vld [vmem:[#allocation4 + $0x2b4] sm:$0xff]
      %v3191 = vld [vmem:[#allocation4 + $0x2bc] sm:$0xff]
      %v3192 = vld [vmem:[#allocation4 + $0x2c4] sm:$0xff]
      %v3193 = vld [vmem:[#allocation4 + $0x2cc] sm:$0xf]
      %v3194 = vld [vmem:[#allocation4 + $0x2d0] sm:$0xff]
      %v3195 = vld [vmem:[#allocation4 + $0x2d8] sm:$0xff]
      %v3196 = vld [vmem:[#allocation4 + $0x2e0] sm:$0xff]
      %v3197 = vld [vmem:[#allocation4 + $0x2e8] sm:$0xff]
      %v3198 = vld [vmem:[#allocation4 + $0x2f0] sm:$0xf]
      %v3199 = vld [vmem:[#allocation4 + $0x2f4] sm:$0xff]
      %v3200 = vld [vmem:[#allocation4 + $0x2fc] sm:$0xff]
      %v3201 = vld [vmem:[#allocation4 + $0x304] sm:$0xff]
      %v3202 = vld [vmem:[#allocation4 + $0x30c] sm:$0xff]
      %v3203 = vld [vmem:[#allocation4 + $0x314] sm:$0xf]
      %v3204 = vld [vmem:[#allocation4 + $0x318] sm:$0xff]
      %v3205 = vld [vmem:[#allocation4 + $0x320] sm:$0xff]
      %v3206 = vld [vmem:[#allocation4 + $0x328] sm:$0xff]
      %v3207 = vld [vmem:[#allocation4 + $0x330] sm:$0xff]
      %v3208 = vld [vmem:[#allocation4 + $0x338] sm:$0xf]
      %v3209 = vld [vmem:[#allocation4 + $0x33c] sm:$0xff]
      %v3210 = vld [vmem:[#allocation4 + $0x344] sm:$0xff]
      %v3211 = vld [vmem:[#allocation4 + $0x34c] sm:$0xff]
      %v3212 = vld [vmem:[#allocation4 + $0x354] sm:$0xff]
      %v3213 = vld [vmem:[#allocation4 + $0x35c] sm:$0xf]
      %v3214 = vld [vmem:[#allocation4 + $0x360] sm:$0xff]
      %v3215 = vld [vmem:[#allocation4 + $0x368] sm:$0xff]
      %v3216 = vld [vmem:[#allocation4 + $0x370] sm:$0xff]
      %v3217 = vld [vmem:[#allocation4 + $0x378] sm:$0xff]
      %v3218 = vld [vmem:[#allocation4 + $0x380] sm:$0xf]
      %v3219 = vld [vmem:[#allocation4 + $0x384] sm:$0xff]
      %v3220 = vld [vmem:[#allocation4 + $0x38c] sm:$0xff]
      %v3221 = vld [vmem:[#allocation4 + $0x394] sm:$0xff]
      %v3222 = vld [vmem:[#allocation4 + $0x39c] sm:$0xff]
      %v3223 = vld [vmem:[#allocation4 + $0x3a4] sm:$0xf]
      %v3224 = vld [vmem:[#allocation4 + $0x3a8] sm:$0xff]
      %v3225 = vld [vmem:[#allocation4 + $0x3b0] sm:$0xff]
      %v3226 = vld [vmem:[#allocation4 + $0x3b8] sm:$0xff]
      %v3227 = vld [vmem:[#allocation4 + $0x3c0] sm:$0xff]
      %v3228 = vld [vmem:[#allocation4 + $0x3c8] sm:$0xf]
      %v3229 = vld [vmem:[#allocation4 + $0x3cc] sm:$0xff]
      %v3230 = vld [vmem:[#allocation4 + $0x3d4] sm:$0xff]
      %v3231 = vld [vmem:[#allocation4 + $0x3dc] sm:$0xff]
      %v3232 = vld [vmem:[#allocation4 + $0x3e4] sm:$0xff]
      %v3233 = vld [vmem:[#allocation4 + $0x3ec] sm:$0xf]
      %v3234 = vld [vmem:[#allocation4 + $0x3f0] sm:$0xff]
      %v3235 = vld [vmem:[#allocation4 + $0x3f8] sm:$0xff]
      %v3236 = vld [vmem:[#allocation4 + $0x400] sm:$0xff]
      %v3237 = vld [vmem:[#allocation4 + $0x408] sm:$0xff]
      %v3238 = vld [vmem:[#allocation4 + $0x410] sm:$0xf]
      %v3239 = vld [vmem:[#allocation4 + $0x414] sm:$0xff]
      %v3240 = vld [vmem:[#allocation4 + $0x41c] sm:$0xff]
      %v3241 = vld [vmem:[#allocation4 + $0x424] sm:$0xff]
      %v3242 = vld [vmem:[#allocation4 + $0x42c] sm:$0xff]
      %v3243 = vld [vmem:[#allocation4 + $0x434] sm:$0xf]
      %v3244 = vld [vmem:[#allocation4 + $0x438] sm:$0xff]
      %v3245 = vld [vmem:[#allocation4 + $0x440] sm:$0xff]
      %v3246 = vld [vmem:[#allocation4 + $0x448] sm:$0xff]
      %v3247 = vld [vmem:[#allocation4 + $0x450] sm:$0xff]
      %v3248 = vld [vmem:[#allocation4 + $0x458] sm:$0xf]
      %v3249 = vld [vmem:[#allocation4 + $0x45c] sm:$0xff]
      %v3250 = vld [vmem:[#allocation4 + $0x464] sm:$0xff]
      %v3251 = vld [vmem:[#allocation4 + $0x46c] sm:$0xff]
      %v3252 = vld [vmem:[#allocation4 + $0x474] sm:$0xff]
      %v3253 = vld [vmem:[#allocation4 + $0x47c] sm:$0xf]
      %v3254 = vld [vmem:[%s4] sm:$0xf]
      %v3255 = vld [vmem:[%s4 + $0x4] sm:$0xf]
      %v3256 = vld [vmem:[%s4 + $0x8] sm:$0xf]
      %v3257 = vld [vmem:[%s4 + $0xc] sm:$0xf]
      %v3258 = vld [vmem:[%s4 + $0x10] sm:$0xf]
      %v3259 = vld [vmem:[%s4 + $0x14] sm:$0xf]
      %v3260 = vld [vmem:[%s4 + $0x18] sm:$0xf]
      %v3261 = vld [vmem:[%s4 + $0x1c] sm:$0xf]
      %v3262 = vld [vmem:[%s4 + $0x20] sm:$0xf]
      %v3263 = vld [vmem:[%s4 + $0x24] sm:$0xf]
      %v3264 = vld [vmem:[%s4 + $0x28] sm:$0xf]
      %v3265 = vld [vmem:[%s4 + $0x2c] sm:$0xf]
      %v3266 = vld [vmem:[%s4 + $0x30] sm:$0xf]
      %v3267 = vld [vmem:[%s4 + $0x34] sm:$0xf]
      %v3268 = vld [vmem:[%s4 + $0x38] sm:$0xf]
      %v3269 = vld [vmem:[%s4 + $0x3c] sm:$0xf]
      %v3270 = vld [vmem:[%s4 + $0x40] sm:$0xf]
      %v3271 = vld [vmem:[%s4 + $0x44] sm:$0xf]
      %v3272 = vld [vmem:[%s4 + $0x48] sm:$0xf]
      %v3273 = vld [vmem:[%s4 + $0x4c] sm:$0xf]
      %v3274 = vld [vmem:[%s4 + $0x50] sm:$0xf]
      %v3275 = vld [vmem:[%s4 + $0x54] sm:$0xf]
      %v3276 = vld [vmem:[%s4 + $0x58] sm:$0xf]
      %v3277 = vld [vmem:[%s4 + $0x5c] sm:$0xf]
      %v3278 = vld [vmem:[%s4 + $0x60] sm:$0xf]
      %v3279 = vld [vmem:[%s4 + $0x64] sm:$0xf]
      %v3280 = vld [vmem:[%s4 + $0x68] sm:$0xf]
      %v3281 = vld [vmem:[%s4 + $0x6c] sm:$0xf]
      %v3282 = vld [vmem:[%s4 + $0x70] sm:$0xf]
      %v3283 = vld [vmem:[%s4 + $0x74] sm:$0xf]
      %v3284 = vld [vmem:[%s4 + $0x78] sm:$0xf]
      %v3285 = vld [vmem:[%s4 + $0x7c] sm:$0xf]
      %v3286 = vld [vmem:[%s4 + $0x80] sm:$0xf]
      %v3287 = vld [vmem:[%s4 + $0x84] sm:$0xf]
      %v3288 = vld [vmem:[%s4 + $0x88] sm:$0xf]
      %v3289 = vld [vmem:[%s4 + $0x8c] sm:$0xf]
      %v3290 = vld [vmem:[%s4 + $0x90] sm:$0xf]
      %v3291 = vld [vmem:[%s4 + $0x94] sm:$0xf]
      %v3292 = vld [vmem:[%s4 + $0x98] sm:$0xf]
      %v3293 = vld [vmem:[%s4 + $0x9c] sm:$0xf]
      %v3294 = vld [vmem:[%s4 + $0xa0] sm:$0xf]
      %v3295 = vld [vmem:[%s4 + $0xa4] sm:$0xf]
      %v3296 = vld [vmem:[%s4 + $0xa8] sm:$0xf]
      %v3297 = vld [vmem:[%s4 + $0xac] sm:$0xf]
      %v3298 = vld [vmem:[%s4 + $0xb0] sm:$0xf]
      %v3299 = vld [vmem:[%s4 + $0xb4] sm:$0xf]
      %v3300 = vld [vmem:[%s4 + $0xb8] sm:$0xf]
      %v3301 = vld [vmem:[%s4 + $0xbc] sm:$0xf]
      %v3302 = vld [vmem:[%s4 + $0xc0] sm:$0xf]
      %v3303 = vld [vmem:[%s4 + $0xc4] sm:$0xf]
      %v3304 = vld [vmem:[%s4 + $0xc8] sm:$0xf]
      %v3305 = vld [vmem:[%s4 + $0xcc] sm:$0xf]
      %v3306 = vld [vmem:[%s4 + $0xd0] sm:$0xf]
      %v3307 = vld [vmem:[%s4 + $0xd4] sm:$0xf]
      %v3308 = vld [vmem:[%s4 + $0xd8] sm:$0xf]
      %v3309 = vld [vmem:[%s4 + $0xdc] sm:$0xf]
      %v3310 = vld [vmem:[%s4 + $0xe0] sm:$0xf]
      %v3311 = vld [vmem:[%s4 + $0xe4] sm:$0xf]
      %v3312 = vld [vmem:[%s4 + $0xe8] sm:$0xf]
      %v3313 = vld [vmem:[%s4 + $0xec] sm:$0xf]
      %v3314 = vld [vmem:[%s4 + $0xf0] sm:$0xf]
      %v3315 = vld [vmem:[%s4 + $0xf4] sm:$0xf]
      %v3316 = vld [vmem:[%s4 + $0xf8] sm:$0xf]
      %v3317 = vld [vmem:[%s4 + $0xfc] sm:$0xf]
      %v3318 = vld [vmem:[%s4 + $0x100] sm:$0xf]
      %v3319 = vld [vmem:[%s4 + $0x104] sm:$0xf]
      %v3320 = vld [vmem:[%s4 + $0x108] sm:$0xf]
      %v3321 = vld [vmem:[%s4 + $0x10c] sm:$0xf]
      %v3322 = vld [vmem:[%s4 + $0x110] sm:$0xf]
      %v3323 = vld [vmem:[%s4 + $0x114] sm:$0xf]
      %v3324 = vld [vmem:[%s4 + $0x118] sm:$0xf]
      %v3325 = vld [vmem:[%s4 + $0x11c] sm:$0xf]
      %v3326 = vld [vmem:[%s4 + $0x120] sm:$0xf]
      %v3327 = vld [vmem:[%s4 + $0x124] sm:$0xf]
      %v3328 = vld [vmem:[%s4 + $0x128] sm:$0xf]
      %v3329 = vld [vmem:[%s4 + $0x12c] sm:$0xf]
      %v3330 = vld [vmem:[%s4 + $0x130] sm:$0xf]
      %v3331 = vld [vmem:[%s4 + $0x134] sm:$0xf]
      %v3332 = vld [vmem:[%s4 + $0x138] sm:$0xf]
      %v3333 = vld [vmem:[%s4 + $0x13c] sm:$0xf]
      %v3334 = vld [vmem:[%s4 + $0x140] sm:$0xf]
      %v3335 = vld [vmem:[%s4 + $0x144] sm:$0xf]
      %v3336 = vld [vmem:[%s4 + $0x148] sm:$0xf]
      %v3337 = vld [vmem:[%s4 + $0x14c] sm:$0xf]
      %v3338 = vld [vmem:[%s4 + $0x150] sm:$0xf]
      %v3339 = vld [vmem:[%s4 + $0x154] sm:$0xf]
      %v3340 = vld [vmem:[%s4 + $0x158] sm:$0xf]
      %v3341 = vld [vmem:[%s4 + $0x15c] sm:$0xf]
      %v3342 = vld [vmem:[%s4 + $0x160] sm:$0xf]
      %v3343 = vld [vmem:[%s4 + $0x164] sm:$0xf]
      %v3344 = vld [vmem:[%s4 + $0x168] sm:$0xf]
      %v3345 = vld [vmem:[%s4 + $0x16c] sm:$0xf]
      %v3346 = vld [vmem:[%s4 + $0x170] sm:$0xf]
      %v3347 = vld [vmem:[%s4 + $0x174] sm:$0xf]
      %v3348 = vld [vmem:[%s4 + $0x178] sm:$0xf]
      %v3349 = vld [vmem:[%s4 + $0x17c] sm:$0xf]
      %v3350 = vld [vmem:[%s4 + $0x180] sm:$0xf]
      %v3351 = vld [vmem:[%s4 + $0x184] sm:$0xf]
      %v3352 = vld [vmem:[%s4 + $0x188] sm:$0xf]
      %v3353 = vld [vmem:[%s4 + $0x18c] sm:$0xf]
      %v3354 = vld [vmem:[%s4 + $0x190] sm:$0xf]
      %v3355 = vld [vmem:[%s4 + $0x194] sm:$0xf]
      %v3356 = vld [vmem:[%s4 + $0x198] sm:$0xf]
      %v3357 = vld [vmem:[%s4 + $0x19c] sm:$0xf]
      %v3358 = vld [vmem:[%s4 + $0x1a0] sm:$0xf]
      %v3359 = vld [vmem:[%s4 + $0x1a4] sm:$0xf]
      %v3360 = vld [vmem:[%s4 + $0x1a8] sm:$0xf]
      %v3361 = vld [vmem:[%s4 + $0x1ac] sm:$0xf]
      %v3362 = vld [vmem:[%s4 + $0x1b0] sm:$0xf]
      %v3363 = vld [vmem:[%s4 + $0x1b4] sm:$0xf]
      %v3364 = vld [vmem:[%s4 + $0x1b8] sm:$0xf]
      %v3365 = vld [vmem:[%s4 + $0x1bc] sm:$0xf]
      %v3366 = vld [vmem:[%s4 + $0x1c0] sm:$0xf]
      %v3367 = vld [vmem:[%s4 + $0x1c4] sm:$0xf]
      %v3368 = vld [vmem:[%s4 + $0x1c8] sm:$0xf]
      %v3369 = vld [vmem:[%s4 + $0x1cc] sm:$0xf]
      %v3370 = vld [vmem:[%s4 + $0x1d0] sm:$0xf]
      %v3371 = vld [vmem:[%s4 + $0x1d4] sm:$0xf]
      %v3372 = vld [vmem:[%s4 + $0x1d8] sm:$0xf]
      %v3373 = vld [vmem:[%s4 + $0x1dc] sm:$0xf]
      %v3374 = vld [vmem:[%s4 + $0x1e0] sm:$0xf]
      %v3375 = vld [vmem:[%s4 + $0x1e4] sm:$0xf]
      %v3376 = vld [vmem:[%s4 + $0x1e8] sm:$0xf]
      %v3377 = vld [vmem:[%s4 + $0x1ec] sm:$0xf]
      %v3378 = vld [vmem:[%s4 + $0x1f0] sm:$0xf]
      %v3379 = vld [vmem:[%s4 + $0x1f4] sm:$0xf]
      %v3380 = vld [vmem:[%s4 + $0x1f8] sm:$0xf]
      %v3381 = vld [vmem:[%s4 + $0x1fc] sm:$0xf]
      %v3382 = vld [vmem:[%s4 + $0x200] sm:$0xf]
      %v3383 = vld [vmem:[%s4 + $0x204] sm:$0xf]
      %v3384 = vld [vmem:[%s4 + $0x208] sm:$0xf]
      %v3385 = vld [vmem:[%s4 + $0x20c] sm:$0xf]
      %v3386 = vld [vmem:[%s4 + $0x210] sm:$0xf]
      %v3387 = vld [vmem:[%s4 + $0x214] sm:$0xf]
      %v3388 = vld [vmem:[%s4 + $0x218] sm:$0xf]
      %v3389 = vld [vmem:[%s4 + $0x21c] sm:$0xf]
      %v3390 = vld [vmem:[%s4 + $0x220] sm:$0xf]
      %v3391 = vld [vmem:[%s4 + $0x224] sm:$0xf]
      %v3392 = vld [vmem:[%s4 + $0x228] sm:$0xf]
      %v3393 = vld [vmem:[%s4 + $0x22c] sm:$0xf]
      %v3394 = vld [vmem:[%s4 + $0x230] sm:$0xf]
      %v3395 = vld [vmem:[%s4 + $0x234] sm:$0xf]
      %v3396 = vld [vmem:[%s4 + $0x238] sm:$0xf]
      %v3397 = vld [vmem:[%s4 + $0x23c] sm:$0xf]
      %v3558 = vunpack.c.l.b16 %v3094
      %v3559 = vunpack.c.h.b16 %v3094
      %v3560 = vunpack.c.l.b16 %v3095
      %v3561 = vunpack.c.h.b16 %v3095
      %v3562 = vunpack.c.l.b16 %v3096
      %v3563 = vunpack.c.h.b16 %v3096
      %v3564 = vunpack.c.l.b16 %v3097
      %v3565 = vunpack.c.h.b16 %v3097
      %v3566 = vunpack.c.l.b16 %v3098
      %v3567 = vunpack.c.l.b16 %v3099
      %v3568 = vunpack.c.h.b16 %v3099
      %v3569 = vunpack.c.l.b16 %v3100
      %v3570 = vunpack.c.h.b16 %v3100
      %v3571 = vunpack.c.l.b16 %v3101
      %v3572 = vunpack.c.h.b16 %v3101
      %v3573 = vunpack.c.l.b16 %v3102
      %v3574 = vunpack.c.h.b16 %v3102
      %v3575 = vunpack.c.l.b16 %v3103
      %v3576 = vunpack.c.l.b16 %v3104
      %v3577 = vunpack.c.h.b16 %v3104
      %v3578 = vunpack.c.l.b16 %v3105
      %v3579 = vunpack.c.h.b16 %v3105
      %v3580 = vunpack.c.l.b16 %v3106
      %v3581 = vunpack.c.h.b16 %v3106
      %v3582 = vunpack.c.l.b16 %v3107
      %v3583 = vunpack.c.h.b16 %v3107
      %v3584 = vunpack.c.l.b16 %v3108
      %v3585 = vunpack.c.l.b16 %v3109
      %v3586 = vunpack.c.h.b16 %v3109
      %v3587 = vunpack.c.l.b16 %v3110
      %v3588 = vunpack.c.h.b16 %v3110
      %v3589 = vunpack.c.l.b16 %v3111
      %v3590 = vunpack.c.h.b16 %v3111
      %v3591 = vunpack.c.l.b16 %v3112
      %v3592 = vunpack.c.h.b16 %v3112
      %v3593 = vunpack.c.l.b16 %v3113
      %v3594 = vunpack.c.l.b16 %v3114
      %v3595 = vunpack.c.h.b16 %v3114
      %v3596 = vunpack.c.l.b16 %v3115
      %v3597 = vunpack.c.h.b16 %v3115
      %v3598 = vunpack.c.l.b16 %v3116
      %v3599 = vunpack.c.h.b16 %v3116
      %v3600 = vunpack.c.l.b16 %v3117
      %v3601 = vunpack.c.h.b16 %v3117
      %v3602 = vunpack.c.l.b16 %v3118
      %v3603 = vunpack.c.l.b16 %v3119
      %v3604 = vunpack.c.h.b16 %v3119
      %v3605 = vunpack.c.l.b16 %v3120
      %v3606 = vunpack.c.h.b16 %v3120
      %v3607 = vunpack.c.l.b16 %v3121
      %v3608 = vunpack.c.h.b16 %v3121
      %v3609 = vunpack.c.l.b16 %v3122
      %v3610 = vunpack.c.h.b16 %v3122
      %v3611 = vunpack.c.l.b16 %v3123
      %v3612 = vunpack.c.l.b16 %v3124
      %v3613 = vunpack.c.h.b16 %v3124
      %v3614 = vunpack.c.l.b16 %v3125
      %v3615 = vunpack.c.h.b16 %v3125
      %v3616 = vunpack.c.l.b16 %v3126
      %v3617 = vunpack.c.h.b16 %v3126
      %v3618 = vunpack.c.l.b16 %v3127
      %v3619 = vunpack.c.h.b16 %v3127
      %v3620 = vunpack.c.l.b16 %v3128
      %v3621 = vunpack.c.l.b16 %v3129
      %v3622 = vunpack.c.h.b16 %v3129
      %v3623 = vunpack.c.l.b16 %v3130
      %v3624 = vunpack.c.h.b16 %v3130
      %v3625 = vunpack.c.l.b16 %v3131
      %v3626 = vunpack.c.h.b16 %v3131
      %v3627 = vunpack.c.l.b16 %v3132
      %v3628 = vunpack.c.h.b16 %v3132
      %v3629 = vunpack.c.l.b16 %v3133
      %v3630 = vunpack.c.l.b16 %v3134
      %v3631 = vunpack.c.h.b16 %v3134
      %v3632 = vunpack.c.l.b16 %v3135
      %v3633 = vunpack.c.h.b16 %v3135
      %v3634 = vunpack.c.l.b16 %v3136
      %v3635 = vunpack.c.h.b16 %v3136
      %v3636 = vunpack.c.l.b16 %v3137
      %v3637 = vunpack.c.h.b16 %v3137
      %v3638 = vunpack.c.l.b16 %v3138
      %v3639 = vunpack.c.l.b16 %v3139
      %v3640 = vunpack.c.h.b16 %v3139
      %v3641 = vunpack.c.l.b16 %v3140
      %v3642 = vunpack.c.h.b16 %v3140
      %v3643 = vunpack.c.l.b16 %v3141
      %v3644 = vunpack.c.h.b16 %v3141
      %v3645 = vunpack.c.l.b16 %v3142
      %v3646 = vunpack.c.h.b16 %v3142
      %v3647 = vunpack.c.l.b16 %v3143
      %v3648 = vunpack.c.l.b16 %v3144
      %v3649 = vunpack.c.h.b16 %v3144
      %v3650 = vunpack.c.l.b16 %v3145
      %v3651 = vunpack.c.h.b16 %v3145
      %v3652 = vunpack.c.l.b16 %v3146
      %v3653 = vunpack.c.h.b16 %v3146
      %v3654 = vunpack.c.l.b16 %v3147
      %v3655 = vunpack.c.h.b16 %v3147
      %v3656 = vunpack.c.l.b16 %v3148
      %v3657 = vunpack.c.l.b16 %v3149
      %v3658 = vunpack.c.h.b16 %v3149
      %v3659 = vunpack.c.l.b16 %v3150
      %v3660 = vunpack.c.h.b16 %v3150
      %v3661 = vunpack.c.l.b16 %v3151
      %v3662 = vunpack.c.h.b16 %v3151
      %v3663 = vunpack.c.l.b16 %v3152
      %v3664 = vunpack.c.h.b16 %v3152
      %v3665 = vunpack.c.l.b16 %v3153
      %v3666 = vunpack.c.l.b16 %v3154
      %v3667 = vunpack.c.h.b16 %v3154
      %v3668 = vunpack.c.l.b16 %v3155
      %v3669 = vunpack.c.h.b16 %v3155
      %v3670 = vunpack.c.l.b16 %v3156
      %v3671 = vunpack.c.h.b16 %v3156
      %v3672 = vunpack.c.l.b16 %v3157
      %v3673 = vunpack.c.h.b16 %v3157
      %v3674 = vunpack.c.l.b16 %v3158
      %v3675 = vunpack.c.l.b16 %v3159
      %v3676 = vunpack.c.h.b16 %v3159
      %v3677 = vunpack.c.l.b16 %v3160
      %v3678 = vunpack.c.h.b16 %v3160
      %v3679 = vunpack.c.l.b16 %v3161
      %v3680 = vunpack.c.h.b16 %v3161
      %v3681 = vunpack.c.l.b16 %v3162
      %v3682 = vunpack.c.h.b16 %v3162
      %v3683 = vunpack.c.l.b16 %v3163
      %v3684 = vunpack.c.l.b16 %v3164
      %v3685 = vunpack.c.h.b16 %v3164
      %v3686 = vunpack.c.l.b16 %v3165
      %v3687 = vunpack.c.h.b16 %v3165
      %v3688 = vunpack.c.l.b16 %v3166
      %v3689 = vunpack.c.h.b16 %v3166
      %v3690 = vunpack.c.l.b16 %v3167
      %v3691 = vunpack.c.h.b16 %v3167
      %v3692 = vunpack.c.l.b16 %v3168
      %v3693 = vunpack.c.l.b16 %v3169
      %v3694 = vunpack.c.h.b16 %v3169
      %v3695 = vunpack.c.l.b16 %v3170
      %v3696 = vunpack.c.h.b16 %v3170
      %v3697 = vunpack.c.l.b16 %v3171
      %v3698 = vunpack.c.h.b16 %v3171
      %v3699 = vunpack.c.l.b16 %v3172
      %v3700 = vunpack.c.h.b16 %v3172
      %v3701 = vunpack.c.l.b16 %v3173
      %v3702 = vunpack.c.l.b16 %v3174
      %v3703 = vunpack.c.h.b16 %v3174
      %v3704 = vunpack.c.l.b16 %v3175
      %v3705 = vunpack.c.h.b16 %v3175
      %v3706 = vunpack.c.l.b16 %v3176
      %v3707 = vunpack.c.h.b16 %v3176
      %v3708 = vunpack.c.l.b16 %v3177
      %v3709 = vunpack.c.h.b16 %v3177
      %v3710 = vunpack.c.l.b16 %v3178
      %v3711 = vunpack.c.l.b16 %v3179
      %v3712 = vunpack.c.h.b16 %v3179
      %v3713 = vunpack.c.l.b16 %v3180
      %v3714 = vunpack.c.h.b16 %v3180
      %v3715 = vunpack.c.l.b16 %v3181
      %v3716 = vunpack.c.h.b16 %v3181
      %v3717 = vunpack.c.l.b16 %v3182
      %v3718 = vunpack.c.h.b16 %v3182
      %v3719 = vunpack.c.l.b16 %v3183
      %v3720 = vunpack.c.l.b16 %v3184
      %v3721 = vunpack.c.h.b16 %v3184
      %v3722 = vunpack.c.l.b16 %v3185
      %v3723 = vunpack.c.h.b16 %v3185
      %v3724 = vunpack.c.l.b16 %v3186
      %v3725 = vunpack.c.h.b16 %v3186
      %v3726 = vunpack.c.l.b16 %v3187
      %v3727 = vunpack.c.h.b16 %v3187
      %v3728 = vunpack.c.l.b16 %v3188
      %v3729 = vunpack.c.l.b16 %v3189
      %v3730 = vunpack.c.h.b16 %v3189
      %v3731 = vunpack.c.l.b16 %v3190
      %v3732 = vunpack.c.h.b16 %v3190
      %v3733 = vunpack.c.l.b16 %v3191
      %v3734 = vunpack.c.h.b16 %v3191
      %v3735 = vunpack.c.l.b16 %v3192
      %v3736 = vunpack.c.h.b16 %v3192
      %v3737 = vunpack.c.l.b16 %v3193
      %v3738 = vunpack.c.l.b16 %v3194
      %v3739 = vunpack.c.h.b16 %v3194
      %v3740 = vunpack.c.l.b16 %v3195
      %v3741 = vunpack.c.h.b16 %v3195
      %v3742 = vunpack.c.l.b16 %v3196
      %v3743 = vunpack.c.h.b16 %v3196
      %v3744 = vunpack.c.l.b16 %v3197
      %v3745 = vunpack.c.h.b16 %v3197
      %v3746 = vunpack.c.l.b16 %v3198
      %v3747 = vunpack.c.l.b16 %v3199
      %v3748 = vunpack.c.h.b16 %v3199
      %v3749 = vunpack.c.l.b16 %v3200
      %v3750 = vunpack.c.h.b16 %v3200
      %v3751 = vunpack.c.l.b16 %v3201
      %v3752 = vunpack.c.h.b16 %v3201
      %v3753 = vunpack.c.l.b16 %v3202
      %v3754 = vunpack.c.h.b16 %v3202
      %v3755 = vunpack.c.l.b16 %v3203
      %v3756 = vunpack.c.l.b16 %v3204
      %v3757 = vunpack.c.h.b16 %v3204
      %v3758 = vunpack.c.l.b16 %v3205
      %v3759 = vunpack.c.h.b16 %v3205
      %v3760 = vunpack.c.l.b16 %v3206
      %v3761 = vunpack.c.h.b16 %v3206
      %v3762 = vunpack.c.l.b16 %v3207
      %v3763 = vunpack.c.h.b16 %v3207
      %v3764 = vunpack.c.l.b16 %v3208
      %v3765 = vunpack.c.l.b16 %v3209
      %v3766 = vunpack.c.h.b16 %v3209
      %v3767 = vunpack.c.l.b16 %v3210
      %v3768 = vunpack.c.h.b16 %v3210
      %v3769 = vunpack.c.l.b16 %v3211
      %v3770 = vunpack.c.h.b16 %v3211
      %v3771 = vunpack.c.l.b16 %v3212
      %v3772 = vunpack.c.h.b16 %v3212
      %v3773 = vunpack.c.l.b16 %v3213
      %v3774 = vunpack.c.l.b16 %v3214
      %v3775 = vunpack.c.h.b16 %v3214
      %v3776 = vunpack.c.l.b16 %v3215
      %v3777 = vunpack.c.h.b16 %v3215
      %v3778 = vunpack.c.l.b16 %v3216
      %v3779 = vunpack.c.h.b16 %v3216
      %v3780 = vunpack.c.l.b16 %v3217
      %v3781 = vunpack.c.h.b16 %v3217
      %v3782 = vunpack.c.l.b16 %v3218
      %v3783 = vunpack.c.l.b16 %v3219
      %v3784 = vunpack.c.h.b16 %v3219
      %v3785 = vunpack.c.l.b16 %v3220
      %v3786 = vunpack.c.h.b16 %v3220
      %v3787 = vunpack.c.l.b16 %v3221
      %v3788 = vunpack.c.h.b16 %v3221
      %v3789 = vunpack.c.l.b16 %v3222
      %v3790 = vunpack.c.h.b16 %v3222
      %v3791 = vunpack.c.l.b16 %v3223
      %v3792 = vunpack.c.l.b16 %v3224
      %v3793 = vunpack.c.h.b16 %v3224
      %v3794 = vunpack.c.l.b16 %v3225
      %v3795 = vunpack.c.h.b16 %v3225
      %v3796 = vunpack.c.l.b16 %v3226
      %v3797 = vunpack.c.h.b16 %v3226
      %v3798 = vunpack.c.l.b16 %v3227
      %v3799 = vunpack.c.h.b16 %v3227
      %v3800 = vunpack.c.l.b16 %v3228
      %v3801 = vunpack.c.l.b16 %v3229
      %v3802 = vunpack.c.h.b16 %v3229
      %v3803 = vunpack.c.l.b16 %v3230
      %v3804 = vunpack.c.h.b16 %v3230
      %v3805 = vunpack.c.l.b16 %v3231
      %v3806 = vunpack.c.h.b16 %v3231
      %v3807 = vunpack.c.l.b16 %v3232
      %v3808 = vunpack.c.h.b16 %v3232
      %v3809 = vunpack.c.l.b16 %v3233
      %v3810 = vunpack.c.l.b16 %v3234
      %v3811 = vunpack.c.h.b16 %v3234
      %v3812 = vunpack.c.l.b16 %v3235
      %v3813 = vunpack.c.h.b16 %v3235
      %v3814 = vunpack.c.l.b16 %v3236
      %v3815 = vunpack.c.h.b16 %v3236
      %v3816 = vunpack.c.l.b16 %v3237
      %v3817 = vunpack.c.h.b16 %v3237
      %v3818 = vunpack.c.l.b16 %v3238
      %v3819 = vunpack.c.l.b16 %v3239
      %v3820 = vunpack.c.h.b16 %v3239
      %v3821 = vunpack.c.l.b16 %v3240
      %v3822 = vunpack.c.h.b16 %v3240
      %v3823 = vunpack.c.l.b16 %v3241
      %v3824 = vunpack.c.h.b16 %v3241
      %v3825 = vunpack.c.l.b16 %v3242
      %v3826 = vunpack.c.h.b16 %v3242
      %v3827 = vunpack.c.l.b16 %v3243
      %v3828 = vunpack.c.l.b16 %v3244
      %v3829 = vunpack.c.h.b16 %v3244
      %v3830 = vunpack.c.l.b16 %v3245
      %v3831 = vunpack.c.h.b16 %v3245
      %v3832 = vunpack.c.l.b16 %v3246
      %v3833 = vunpack.c.h.b16 %v3246
      %v3834 = vunpack.c.l.b16 %v3247
      %v3835 = vunpack.c.h.b16 %v3247
      %v3836 = vunpack.c.l.b16 %v3248
      %v3837 = vunpack.c.l.b16 %v3249
      %v3838 = vunpack.c.h.b16 %v3249
      %v3839 = vunpack.c.l.b16 %v3250
      %v3840 = vunpack.c.h.b16 %v3250
      %v3841 = vunpack.c.l.b16 %v3251
      %v3842 = vunpack.c.h.b16 %v3251
      %v3843 = vunpack.c.l.b16 %v3252
      %v3844 = vunpack.c.h.b16 %v3252
      %v3845 = vunpack.c.l.b16 %v3253
      %v3846 = vpack.c.b16 %v3567, %v3558
      %v3847 = vpack.c.b16 %v3568, %v3559
      %v3848 = vpack.c.b16 %v3569, %v3560
      %v3849 = vpack.c.b16 %v3570, %v3561
      %v3850 = vpack.c.b16 %v3571, %v3562
      %v3851 = vpack.c.b16 %v3572, %v3563
      %v3852 = vpack.c.b16 %v3573, %v3564
      %v3853 = vpack.c.b16 %v3574, %v3565
      %v3854 = vpack.c.b16 %v3575, %v3566
      %v3855 = vpack.c.b16 %v3585, %v3576
      %v3856 = vpack.c.b16 %v3586, %v3577
      %v3857 = vpack.c.b16 %v3587, %v3578
      %v3858 = vpack.c.b16 %v3588, %v3579
      %v3859 = vpack.c.b16 %v3589, %v3580
      %v3860 = vpack.c.b16 %v3590, %v3581
      %v3861 = vpack.c.b16 %v3591, %v3582
      %v3862 = vpack.c.b16 %v3592, %v3583
      %v3863 = vpack.c.b16 %v3593, %v3584
      %v3864 = vpack.c.b16 %v3603, %v3594
      %v3865 = vpack.c.b16 %v3604, %v3595
      %v3866 = vpack.c.b16 %v3605, %v3596
      %v3867 = vpack.c.b16 %v3606, %v3597
      %v3868 = vpack.c.b16 %v3607, %v3598
      %v3869 = vpack.c.b16 %v3608, %v3599
      %v3870 = vpack.c.b16 %v3609, %v3600
      %v3871 = vpack.c.b16 %v3610, %v3601
      %v3872 = vpack.c.b16 %v3611, %v3602
      %v3873 = vpack.c.b16 %v3621, %v3612
      %v3874 = vpack.c.b16 %v3622, %v3613
      %v3875 = vpack.c.b16 %v3623, %v3614
      %v3876 = vpack.c.b16 %v3624, %v3615
      %v3877 = vpack.c.b16 %v3625, %v3616
      %v3878 = vpack.c.b16 %v3626, %v3617
      %v3879 = vpack.c.b16 %v3627, %v3618
      %v3880 = vpack.c.b16 %v3628, %v3619
      %v3881 = vpack.c.b16 %v3629, %v3620
      %v3882 = vpack.c.b16 %v3639, %v3630
      %v3883 = vpack.c.b16 %v3640, %v3631
      %v3884 = vpack.c.b16 %v3641, %v3632
      %v3885 = vpack.c.b16 %v3642, %v3633
      %v3886 = vpack.c.b16 %v3643, %v3634
      %v3887 = vpack.c.b16 %v3644, %v3635
      %v3888 = vpack.c.b16 %v3645, %v3636
      %v3889 = vpack.c.b16 %v3646, %v3637
      %v3890 = vpack.c.b16 %v3647, %v3638
      %v3891 = vpack.c.b16 %v3657, %v3648
      %v3892 = vpack.c.b16 %v3658, %v3649
      %v3893 = vpack.c.b16 %v3659, %v3650
      %v3894 = vpack.c.b16 %v3660, %v3651
      %v3895 = vpack.c.b16 %v3661, %v3652
      %v3896 = vpack.c.b16 %v3662, %v3653
      %v3897 = vpack.c.b16 %v3663, %v3654
      %v3898 = vpack.c.b16 %v3664, %v3655
      %v3899 = vpack.c.b16 %v3665, %v3656
      %v3900 = vpack.c.b16 %v3675, %v3666
      %v3901 = vpack.c.b16 %v3676, %v3667
      %v3902 = vpack.c.b16 %v3677, %v3668
      %v3903 = vpack.c.b16 %v3678, %v3669
      %v3904 = vpack.c.b16 %v3679, %v3670
      %v3905 = vpack.c.b16 %v3680, %v3671
      %v3906 = vpack.c.b16 %v3681, %v3672
      %v3907 = vpack.c.b16 %v3682, %v3673
      %v3908 = vpack.c.b16 %v3683, %v3674
      %v3909 = vpack.c.b16 %v3693, %v3684
      %v3910 = vpack.c.b16 %v3694, %v3685
      %v3911 = vpack.c.b16 %v3695, %v3686
      %v3912 = vpack.c.b16 %v3696, %v3687
      %v3913 = vpack.c.b16 %v3697, %v3688
      %v3914 = vpack.c.b16 %v3698, %v3689
      %v3915 = vpack.c.b16 %v3699, %v3690
      %v3916 = vpack.c.b16 %v3700, %v3691
      %v3917 = vpack.c.b16 %v3701, %v3692
      %v3918 = vpack.c.b16 %v3711, %v3702
      %v3919 = vpack.c.b16 %v3712, %v3703
      %v3920 = vpack.c.b16 %v3713, %v3704
      %v3921 = vpack.c.b16 %v3714, %v3705
      %v3922 = vpack.c.b16 %v3715, %v3706
      %v3923 = vpack.c.b16 %v3716, %v3707
      %v3924 = vpack.c.b16 %v3717, %v3708
      %v3925 = vpack.c.b16 %v3718, %v3709
      %v3926 = vpack.c.b16 %v3719, %v3710
      %v3927 = vpack.c.b16 %v3729, %v3720
      %v3928 = vpack.c.b16 %v3730, %v3721
      %v3929 = vpack.c.b16 %v3731, %v3722
      %v3930 = vpack.c.b16 %v3732, %v3723
      %v3931 = vpack.c.b16 %v3733, %v3724
      %v3932 = vpack.c.b16 %v3734, %v3725
      %v3933 = vpack.c.b16 %v3735, %v3726
      %v3934 = vpack.c.b16 %v3736, %v3727
      %v3935 = vpack.c.b16 %v3737, %v3728
      %v3936 = vpack.c.b16 %v3747, %v3738
      %v3937 = vpack.c.b16 %v3748, %v3739
      %v3938 = vpack.c.b16 %v3749, %v3740
      %v3939 = vpack.c.b16 %v3750, %v3741
      %v3940 = vpack.c.b16 %v3751, %v3742
      %v3941 = vpack.c.b16 %v3752, %v3743
      %v3942 = vpack.c.b16 %v3753, %v3744
      %v3943 = vpack.c.b16 %v3754, %v3745
      %v3944 = vpack.c.b16 %v3755, %v3746
      %v3945 = vpack.c.b16 %v3765, %v3756
      %v3946 = vpack.c.b16 %v3766, %v3757
      %v3947 = vpack.c.b16 %v3767, %v3758
      %v3948 = vpack.c.b16 %v3768, %v3759
      %v3949 = vpack.c.b16 %v3769, %v3760
      %v3950 = vpack.c.b16 %v3770, %v3761
      %v3951 = vpack.c.b16 %v3771, %v3762
      %v3952 = vpack.c.b16 %v3772, %v3763
      %v3953 = vpack.c.b16 %v3773, %v3764
      %v3954 = vpack.c.b16 %v3783, %v3774
      %v3955 = vpack.c.b16 %v3784, %v3775
      %v3956 = vpack.c.b16 %v3785, %v3776
      %v3957 = vpack.c.b16 %v3786, %v3777
      %v3958 = vpack.c.b16 %v3787, %v3778
      %v3959 = vpack.c.b16 %v3788, %v3779
      %v3960 = vpack.c.b16 %v3789, %v3780
      %v3961 = vpack.c.b16 %v3790, %v3781
      %v3962 = vpack.c.b16 %v3791, %v3782
      %v3963 = vpack.c.b16 %v3801, %v3792
      %v3964 = vpack.c.b16 %v3802, %v3793
      %v3965 = vpack.c.b16 %v3803, %v3794
      %v3966 = vpack.c.b16 %v3804, %v3795
      %v3967 = vpack.c.b16 %v3805, %v3796
      %v3968 = vpack.c.b16 %v3806, %v3797
      %v3969 = vpack.c.b16 %v3807, %v3798
      %v3970 = vpack.c.b16 %v3808, %v3799
      %v3971 = vpack.c.b16 %v3809, %v3800
      %v3972 = vpack.c.b16 %v3819, %v3810
      %v3973 = vpack.c.b16 %v3820, %v3811
      %v3974 = vpack.c.b16 %v3821, %v3812
      %v3975 = vpack.c.b16 %v3822, %v3813
      %v3976 = vpack.c.b16 %v3823, %v3814
      %v3977 = vpack.c.b16 %v3824, %v3815
      %v3978 = vpack.c.b16 %v3825, %v3816
      %v3979 = vpack.c.b16 %v3826, %v3817
      %v3980 = vpack.c.b16 %v3827, %v3818
      %v3981 = vpack.c.b16 %v3837, %v3828
      %v3982 = vpack.c.b16 %v3838, %v3829
      %v3983 = vpack.c.b16 %v3839, %v3830
      %v3984 = vpack.c.b16 %v3840, %v3831
      %v3985 = vpack.c.b16 %v3841, %v3832
      %v3986 = vpack.c.b16 %v3842, %v3833
      %v3987 = vpack.c.b16 %v3843, %v3834
      %v3988 = vpack.c.b16 %v3844, %v3835
      %v3989 = vpack.c.b16 %v3845, %v3836
      %v4278 = vunpack.c.l.b16 %v3254
      %v4279 = vunpack.c.l.b16 %v3255
      %v4280 = vunpack.c.l.b16 %v3256
      %v4281 = vunpack.c.l.b16 %v3257
      %v4282 = vunpack.c.l.b16 %v3258
      %v4283 = vunpack.c.l.b16 %v3259
      %v4284 = vunpack.c.l.b16 %v3260
      %v4285 = vunpack.c.l.b16 %v3261
      %v4286 = vunpack.c.l.b16 %v3262
      %v4287 = vunpack.c.l.b16 %v3263
      %v4288 = vunpack.c.l.b16 %v3264
      %v4289 = vunpack.c.l.b16 %v3265
      %v4290 = vunpack.c.l.b16 %v3266
      %v4291 = vunpack.c.l.b16 %v3267
      %v4292 = vunpack.c.l.b16 %v3268
      %v4293 = vunpack.c.l.b16 %v3269
      %v4294 = vunpack.c.l.b16 %v3270
      %v4295 = vunpack.c.l.b16 %v3271
      %v4296 = vunpack.c.l.b16 %v3272
      %v4297 = vunpack.c.l.b16 %v3273
      %v4298 = vunpack.c.l.b16 %v3274
      %v4299 = vunpack.c.l.b16 %v3275
      %v4300 = vunpack.c.l.b16 %v3276
      %v4301 = vunpack.c.l.b16 %v3277
      %v4302 = vunpack.c.l.b16 %v3278
      %v4303 = vunpack.c.l.b16 %v3279
      %v4304 = vunpack.c.l.b16 %v3280
      %v4305 = vunpack.c.l.b16 %v3281
      %v4306 = vunpack.c.l.b16 %v3282
      %v4307 = vunpack.c.l.b16 %v3283
      %v4308 = vunpack.c.l.b16 %v3284
      %v4309 = vunpack.c.l.b16 %v3285
      %v4310 = vunpack.c.l.b16 %v3286
      %v4311 = vunpack.c.l.b16 %v3287
      %v4312 = vunpack.c.l.b16 %v3288
      %v4313 = vunpack.c.l.b16 %v3289
      %v4314 = vunpack.c.l.b16 %v3290
      %v4315 = vunpack.c.l.b16 %v3291
      %v4316 = vunpack.c.l.b16 %v3292
      %v4317 = vunpack.c.l.b16 %v3293
      %v4318 = vunpack.c.l.b16 %v3294
      %v4319 = vunpack.c.l.b16 %v3295
      %v4320 = vunpack.c.l.b16 %v3296
      %v4321 = vunpack.c.l.b16 %v3297
      %v4322 = vunpack.c.l.b16 %v3298
      %v4323 = vunpack.c.l.b16 %v3299
      %v4324 = vunpack.c.l.b16 %v3300
      %v4325 = vunpack.c.l.b16 %v3301
      %v4326 = vunpack.c.l.b16 %v3302
      %v4327 = vunpack.c.l.b16 %v3303
      %v4328 = vunpack.c.l.b16 %v3304
      %v4329 = vunpack.c.l.b16 %v3305
      %v4330 = vunpack.c.l.b16 %v3306
      %v4331 = vunpack.c.l.b16 %v3307
      %v4332 = vunpack.c.l.b16 %v3308
      %v4333 = vunpack.c.l.b16 %v3309
      %v4334 = vunpack.c.l.b16 %v3310
      %v4335 = vunpack.c.l.b16 %v3311
      %v4336 = vunpack.c.l.b16 %v3312
      %v4337 = vunpack.c.l.b16 %v3313
      %v4338 = vunpack.c.l.b16 %v3314
      %v4339 = vunpack.c.l.b16 %v3315
      %v4340 = vunpack.c.l.b16 %v3316
      %v4341 = vunpack.c.l.b16 %v3317
      %v4342 = vunpack.c.l.b16 %v3318
      %v4343 = vunpack.c.l.b16 %v3319
      %v4344 = vunpack.c.l.b16 %v3320
      %v4345 = vunpack.c.l.b16 %v3321
      %v4346 = vunpack.c.l.b16 %v3322
      %v4347 = vunpack.c.l.b16 %v3323
      %v4348 = vunpack.c.l.b16 %v3324
      %v4349 = vunpack.c.l.b16 %v3325
      %v4350 = vunpack.c.l.b16 %v3326
      %v4351 = vunpack.c.l.b16 %v3327
      %v4352 = vunpack.c.l.b16 %v3328
      %v4353 = vunpack.c.l.b16 %v3329
      %v4354 = vunpack.c.l.b16 %v3330
      %v4355 = vunpack.c.l.b16 %v3331
      %v4356 = vunpack.c.l.b16 %v3332
      %v4357 = vunpack.c.l.b16 %v3333
      %v4358 = vunpack.c.l.b16 %v3334
      %v4359 = vunpack.c.l.b16 %v3335
      %v4360 = vunpack.c.l.b16 %v3336
      %v4361 = vunpack.c.l.b16 %v3337
      %v4362 = vunpack.c.l.b16 %v3338
      %v4363 = vunpack.c.l.b16 %v3339
      %v4364 = vunpack.c.l.b16 %v3340
      %v4365 = vunpack.c.l.b16 %v3341
      %v4366 = vunpack.c.l.b16 %v3342
      %v4367 = vunpack.c.l.b16 %v3343
      %v4368 = vunpack.c.l.b16 %v3344
      %v4369 = vunpack.c.l.b16 %v3345
      %v4370 = vunpack.c.l.b16 %v3346
      %v4371 = vunpack.c.l.b16 %v3347
      %v4372 = vunpack.c.l.b16 %v3348
      %v4373 = vunpack.c.l.b16 %v3349
      %v4374 = vunpack.c.l.b16 %v3350
      %v4375 = vunpack.c.l.b16 %v3351
      %v4376 = vunpack.c.l.b16 %v3352
      %v4377 = vunpack.c.l.b16 %v3353
      %v4378 = vunpack.c.l.b16 %v3354
      %v4379 = vunpack.c.l.b16 %v3355
      %v4380 = vunpack.c.l.b16 %v3356
      %v4381 = vunpack.c.l.b16 %v3357
      %v4382 = vunpack.c.l.b16 %v3358
      %v4383 = vunpack.c.l.b16 %v3359
      %v4384 = vunpack.c.l.b16 %v3360
      %v4385 = vunpack.c.l.b16 %v3361
      %v4386 = vunpack.c.l.b16 %v3362
      %v4387 = vunpack.c.l.b16 %v3363
      %v4388 = vunpack.c.l.b16 %v3364
      %v4389 = vunpack.c.l.b16 %v3365
      %v4390 = vunpack.c.l.b16 %v3366
      %v4391 = vunpack.c.l.b16 %v3367
      %v4392 = vunpack.c.l.b16 %v3368
      %v4393 = vunpack.c.l.b16 %v3369
      %v4394 = vunpack.c.l.b16 %v3370
      %v4395 = vunpack.c.l.b16 %v3371
      %v4396 = vunpack.c.l.b16 %v3372
      %v4397 = vunpack.c.l.b16 %v3373
      %v4398 = vunpack.c.l.b16 %v3374
      %v4399 = vunpack.c.l.b16 %v3375
      %v4400 = vunpack.c.l.b16 %v3376
      %v4401 = vunpack.c.l.b16 %v3377
      %v4402 = vunpack.c.l.b16 %v3378
      %v4403 = vunpack.c.l.b16 %v3379
      %v4404 = vunpack.c.l.b16 %v3380
      %v4405 = vunpack.c.l.b16 %v3381
      %v4406 = vunpack.c.l.b16 %v3382
      %v4407 = vunpack.c.l.b16 %v3383
      %v4408 = vunpack.c.l.b16 %v3384
      %v4409 = vunpack.c.l.b16 %v3385
      %v4410 = vunpack.c.l.b16 %v3386
      %v4411 = vunpack.c.l.b16 %v3387
      %v4412 = vunpack.c.l.b16 %v3388
      %v4413 = vunpack.c.l.b16 %v3389
      %v4414 = vunpack.c.l.b16 %v3390
      %v4415 = vunpack.c.l.b16 %v3391
      %v4416 = vunpack.c.l.b16 %v3392
      %v4417 = vunpack.c.l.b16 %v3393
      %v4418 = vunpack.c.l.b16 %v3394
      %v4419 = vunpack.c.l.b16 %v3395
      %v4420 = vunpack.c.l.b16 %v3396
      %v4421 = vunpack.c.l.b16 %v3397
      %v4422 = vpack.c.b16 %v4279, %v4278
      %v4423 = vpack.c.b16 %v4281, %v4280
      %v4424 = vpack.c.b16 %v4283, %v4282
      %v4425 = vpack.c.b16 %v4285, %v4284
      %v4426 = vpack.c.b16 %v4287, %v4286
      %v4427 = vpack.c.b16 %v4289, %v4288
      %v4428 = vpack.c.b16 %v4291, %v4290
      %v4429 = vpack.c.b16 %v4293, %v4292
      %v4430 = vpack.c.b16 %v4295, %v4294
      %v4431 = vpack.c.b16 %v4297, %v4296
      %v4432 = vpack.c.b16 %v4299, %v4298
      %v4433 = vpack.c.b16 %v4301, %v4300
      %v4434 = vpack.c.b16 %v4303, %v4302
      %v4435 = vpack.c.b16 %v4305, %v4304
      %v4436 = vpack.c.b16 %v4307, %v4306
      %v4437 = vpack.c.b16 %v4309, %v4308
      %v4438 = vpack.c.b16 %v4311, %v4310
      %v4439 = vpack.c.b16 %v4313, %v4312
      %v4440 = vpack.c.b16 %v4315, %v4314
      %v4441 = vpack.c.b16 %v4317, %v4316
      %v4442 = vpack.c.b16 %v4319, %v4318
      %v4443 = vpack.c.b16 %v4321, %v4320
      %v4444 = vpack.c.b16 %v4323, %v4322
      %v4445 = vpack.c.b16 %v4325, %v4324
      %v4446 = vpack.c.b16 %v4327, %v4326
      %v4447 = vpack.c.b16 %v4329, %v4328
      %v4448 = vpack.c.b16 %v4331, %v4330
      %v4449 = vpack.c.b16 %v4333, %v4332
      %v4450 = vpack.c.b16 %v4335, %v4334
      %v4451 = vpack.c.b16 %v4337, %v4336
      %v4452 = vpack.c.b16 %v4339, %v4338
      %v4453 = vpack.c.b16 %v4341, %v4340
      %v4454 = vpack.c.b16 %v4343, %v4342
      %v4455 = vpack.c.b16 %v4345, %v4344
      %v4456 = vpack.c.b16 %v4347, %v4346
      %v4457 = vpack.c.b16 %v4349, %v4348
      %v4458 = vpack.c.b16 %v4351, %v4350
      %v4459 = vpack.c.b16 %v4353, %v4352
      %v4460 = vpack.c.b16 %v4355, %v4354
      %v4461 = vpack.c.b16 %v4357, %v4356
      %v4462 = vpack.c.b16 %v4359, %v4358
      %v4463 = vpack.c.b16 %v4361, %v4360
      %v4464 = vpack.c.b16 %v4363, %v4362
      %v4465 = vpack.c.b16 %v4365, %v4364
      %v4466 = vpack.c.b16 %v4367, %v4366
      %v4467 = vpack.c.b16 %v4369, %v4368
      %v4468 = vpack.c.b16 %v4371, %v4370
      %v4469 = vpack.c.b16 %v4373, %v4372
      %v4470 = vpack.c.b16 %v4375, %v4374
      %v4471 = vpack.c.b16 %v4377, %v4376
      %v4472 = vpack.c.b16 %v4379, %v4378
      %v4473 = vpack.c.b16 %v4381, %v4380
      %v4474 = vpack.c.b16 %v4383, %v4382
      %v4475 = vpack.c.b16 %v4385, %v4384
      %v4476 = vpack.c.b16 %v4387, %v4386
      %v4477 = vpack.c.b16 %v4389, %v4388
      %v4478 = vpack.c.b16 %v4391, %v4390
      %v4479 = vpack.c.b16 %v4393, %v4392
      %v4480 = vpack.c.b16 %v4395, %v4394
      %v4481 = vpack.c.b16 %v4397, %v4396
      %v4482 = vpack.c.b16 %v4399, %v4398
      %v4483 = vpack.c.b16 %v4401, %v4400
      %v4484 = vpack.c.b16 %v4403, %v4402
      %v4485 = vpack.c.b16 %v4405, %v4404
      %v4486 = vpack.c.b16 %v4407, %v4406
      %v4487 = vpack.c.b16 %v4409, %v4408
      %v4488 = vpack.c.b16 %v4411, %v4410
      %v4489 = vpack.c.b16 %v4413, %v4412
      %v4490 = vpack.c.b16 %v4415, %v4414
      %v4491 = vpack.c.b16 %v4417, %v4416
      %v4492 = vpack.c.b16 %v4419, %v4418
      %v4493 = vpack.c.b16 %v4421, %v4420
      %4566 = vmatpush.bf16.msra.mxu0 %v4429
      %4567 = vmatpush.bf16.msra.mxu0 %v4428
      %4568 = vmatpush.bf16.msra.mxu0 %v4427
      %4569 = vmatpush.bf16.msra.mxu0 %v4426
      %4570 = vmatpush.bf16.msra.mxu0 %v4425
      %4571 = vmatpush.bf16.msra.mxu0 %v4424
      %4572 = vmatpush.bf16.msra.mxu0 %v4423
      %4573 = vmatpush.bf16.msra.mxu0 %v4422
      %4574 = vmatmul.bf16.gmra.mxu0 %v3846
      %v4575 = vpop.f32.mrf.mxu0
      %v4576 = vadd.f32 0.0, %v4575
      %v4577 = vpop.f32.mrf.mxu0
      %v4578 = vadd.f32 0.0, %v4577
      %4579 = vmatmul.bf16.gmra.mxu0 %v3855
      %v4580 = vpop.f32.mrf.mxu0
      %v4581 = vadd.f32 0.0, %v4580
      %v4582 = vpop.f32.mrf.mxu0
      %v4583 = vadd.f32 0.0, %v4582
      %4584 = vmatmul.bf16.gmra.mxu0 %v3864
      %v4585 = vpop.f32.mrf.mxu0
      %v4586 = vadd.f32 0.0, %v4585
      %v4587 = vpop.f32.mrf.mxu0
      %v4588 = vadd.f32 0.0, %v4587
      %4589 = vmatmul.bf16.gmra.mxu0 %v3873
      %v4590 = vpop.f32.mrf.mxu0
      %v4591 = vadd.f32 0.0, %v4590
      %v4592 = vpop.f32.mrf.mxu0
      %v4593 = vadd.f32 0.0, %v4592
      %4594 = vmatmul.bf16.gmra.mxu0 %v3882
      %v4595 = vpop.f32.mrf.mxu0
      %v4596 = vadd.f32 0.0, %v4595
      %v4597 = vpop.f32.mrf.mxu0
      %v4598 = vadd.f32 0.0, %v4597
      %4599 = vmatmul.bf16.gmra.mxu0 %v3891
      %v4600 = vpop.f32.mrf.mxu0
      %v4601 = vadd.f32 0.0, %v4600
      %v4602 = vpop.f32.mrf.mxu0
      %v4603 = vadd.f32 0.0, %v4602
      %4604 = vmatmul.bf16.gmra.mxu0 %v3900
      %v4605 = vpop.f32.mrf.mxu0
      %v4606 = vadd.f32 0.0, %v4605
      %v4607 = vpop.f32.mrf.mxu0
      %v4608 = vadd.f32 0.0, %v4607
      %4609 = vmatmul.bf16.gmra.mxu0 %v3909
      %v4610 = vpop.f32.mrf.mxu0
      %v4611 = vadd.f32 0.0, %v4610
      %v4612 = vpop.f32.mrf.mxu0
      %v4613 = vadd.f32 0.0, %v4612
      %4614 = vmatmul.bf16.gmra.mxu0 %v3918
      %v4615 = vpop.f32.mrf.mxu0
      %v4616 = vadd.f32 0.0, %v4615
      %v4617 = vpop.f32.mrf.mxu0
      %v4618 = vadd.f32 0.0, %v4617
      %4619 = vmatmul.bf16.gmra.mxu0 %v3927
      %v4620 = vpop.f32.mrf.mxu0
      %v4621 = vadd.f32 0.0, %v4620
      %v4622 = vpop.f32.mrf.mxu0
      %v4623 = vadd.f32 0.0, %v4622
      %4624 = vmatmul.bf16.gmra.mxu0 %v3936
      %v4625 = vpop.f32.mrf.mxu0
      %v4626 = vadd.f32 0.0, %v4625
      %v4627 = vpop.f32.mrf.mxu0
      %v4628 = vadd.f32 0.0, %v4627
      %4629 = vmatmul.bf16.gmra.mxu0 %v3945
      %v4630 = vpop.f32.mrf.mxu0
      %v4631 = vadd.f32 0.0, %v4630
      %v4632 = vpop.f32.mrf.mxu0
      %v4633 = vadd.f32 0.0, %v4632
      %4634 = vmatmul.bf16.gmra.mxu0 %v3954
      %v4635 = vpop.f32.mrf.mxu0
      %v4636 = vadd.f32 0.0, %v4635
      %v4637 = vpop.f32.mrf.mxu0
      %v4638 = vadd.f32 0.0, %v4637
      %4639 = vmatmul.bf16.gmra.mxu0 %v3963
      %v4640 = vpop.f32.mrf.mxu0
      %v4641 = vadd.f32 0.0, %v4640
      %v4642 = vpop.f32.mrf.mxu0
      %v4643 = vadd.f32 0.0, %v4642
      %4644 = vmatmul.bf16.gmra.mxu0 %v3972
      %v4645 = vpop.f32.mrf.mxu0
      %v4646 = vadd.f32 0.0, %v4645
      %v4647 = vpop.f32.mrf.mxu0
      %v4648 = vadd.f32 0.0, %v4647
      %4649 = vmatmul.bf16.gmra.mxu0 %v3981
      %v4650 = vpop.f32.mrf.mxu0
      %v4651 = vadd.f32 0.0, %v4650
      %v4652 = vpop.f32.mrf.mxu0
      %v4653 = vadd.f32 0.0, %v4652
      %4654 = vdwg.mxu0
      %4655 = vmatpush.bf16.msra.mxu0 %v4437
      %4656 = vmatpush.bf16.msra.mxu0 %v4436
      %4657 = vmatpush.bf16.msra.mxu0 %v4435
      %4658 = vmatpush.bf16.msra.mxu0 %v4434
      %4659 = vmatpush.bf16.msra.mxu0 %v4433
      %4660 = vmatpush.bf16.msra.mxu0 %v4432
      %4661 = vmatpush.bf16.msra.mxu0 %v4431
      %4662 = vmatpush.bf16.msra.mxu0 %v4430
      %4663 = vmatmul.bf16.gmra.mxu0 %v3847
      %v4664 = vpop.f32.mrf.mxu0
      %v4665 = vadd.f32 %v4576, %v4664
      %v4666 = vpop.f32.mrf.mxu0
      %v4667 = vadd.f32 %v4578, %v4666
      %4668 = vmatmul.bf16.gmra.mxu0 %v3856
      %v4669 = vpop.f32.mrf.mxu0
      %v4670 = vadd.f32 %v4581, %v4669
      %v4671 = vpop.f32.mrf.mxu0
      %v4672 = vadd.f32 %v4583, %v4671
      %4673 = vmatmul.bf16.gmra.mxu0 %v3865
      %v4674 = vpop.f32.mrf.mxu0
      %v4675 = vadd.f32 %v4586, %v4674
      %v4676 = vpop.f32.mrf.mxu0
      %v4677 = vadd.f32 %v4588, %v4676
      %4678 = vmatmul.bf16.gmra.mxu0 %v3874
      %v4679 = vpop.f32.mrf.mxu0
      %v4680 = vadd.f32 %v4591, %v4679
      %v4681 = vpop.f32.mrf.mxu0
      %v4682 = vadd.f32 %v4593, %v4681
      %4683 = vmatmul.bf16.gmra.mxu0 %v3883
      %v4684 = vpop.f32.mrf.mxu0
      %v4685 = vadd.f32 %v4596, %v4684
      %v4686 = vpop.f32.mrf.mxu0
      %v4687 = vadd.f32 %v4598, %v4686
      %4688 = vmatmul.bf16.gmra.mxu0 %v3892
      %v4689 = vpop.f32.mrf.mxu0
      %v4690 = vadd.f32 %v4601, %v4689
      %v4691 = vpop.f32.mrf.mxu0
      %v4692 = vadd.f32 %v4603, %v4691
      %4693 = vmatmul.bf16.gmra.mxu0 %v3901
      %v4694 = vpop.f32.mrf.mxu0
      %v4695 = vadd.f32 %v4606, %v4694
      %v4696 = vpop.f32.mrf.mxu0
      %v4697 = vadd.f32 %v4608, %v4696
      %4698 = vmatmul.bf16.gmra.mxu0 %v3910
      %v4699 = vpop.f32.mrf.mxu0
      %v4700 = vadd.f32 %v4611, %v4699
      %v4701 = vpop.f32.mrf.mxu0
      %v4702 = vadd.f32 %v4613, %v4701
      %4703 = vmatmul.bf16.gmra.mxu0 %v3919
      %v4704 = vpop.f32.mrf.mxu0
      %v4705 = vadd.f32 %v4616, %v4704
      %v4706 = vpop.f32.mrf.mxu0
      %v4707 = vadd.f32 %v4618, %v4706
      %4708 = vmatmul.bf16.gmra.mxu0 %v3928
      %v4709 = vpop.f32.mrf.mxu0
      %v4710 = vadd.f32 %v4621, %v4709
      %v4711 = vpop.f32.mrf.mxu0
      %v4712 = vadd.f32 %v4623, %v4711
      %4713 = vmatmul.bf16.gmra.mxu0 %v3937
      %v4714 = vpop.f32.mrf.mxu0
      %v4715 = vadd.f32 %v4626, %v4714
      %v4716 = vpop.f32.mrf.mxu0
      %v4717 = vadd.f32 %v4628, %v4716
      %4718 = vmatmul.bf16.gmra.mxu0 %v3946
      %v4719 = vpop.f32.mrf.mxu0
      %v4720 = vadd.f32 %v4631, %v4719
      %v4721 = vpop.f32.mrf.mxu0
      %v4722 = vadd.f32 %v4633, %v4721
      %4723 = vmatmul.bf16.gmra.mxu0 %v3955
      %v4724 = vpop.f32.mrf.mxu0
      %v4725 = vadd.f32 %v4636, %v4724
      %v4726 = vpop.f32.mrf.mxu0
      %v4727 = vadd.f32 %v4638, %v4726
      %4728 = vmatmul.bf16.gmra.mxu0 %v3964
      %v4729 = vpop.f32.mrf.mxu0
      %v4730 = vadd.f32 %v4641, %v4729
      %v4731 = vpop.f32.mrf.mxu0
      %v4732 = vadd.f32 %v4643, %v4731
      %4733 = vmatmul.bf16.gmra.mxu0 %v3973
      %v4734 = vpop.f32.mrf.mxu0
      %v4735 = vadd.f32 %v4646, %v4734
      %v4736 = vpop.f32.mrf.mxu0
      %v4737 = vadd.f32 %v4648, %v4736
      %4738 = vmatmul.bf16.gmra.mxu0 %v3982
      %v4739 = vpop.f32.mrf.mxu0
      %v4740 = vadd.f32 %v4651, %v4739
      %v4741 = vpop.f32.mrf.mxu0
      %v4742 = vadd.f32 %v4653, %v4741
      %4743 = vdwg.mxu0
      %4744 = vmatpush.bf16.msra.mxu0 %v4445
      %4745 = vmatpush.bf16.msra.mxu0 %v4444
      %4746 = vmatpush.bf16.msra.mxu0 %v4443
      %4747 = vmatpush.bf16.msra.mxu0 %v4442
      %4748 = vmatpush.bf16.msra.mxu0 %v4441
      %4749 = vmatpush.bf16.msra.mxu0 %v4440
      %4750 = vmatpush.bf16.msra.mxu0 %v4439
      %4751 = vmatpush.bf16.msra.mxu0 %v4438
      %4752 = vmatmul.bf16.gmra.mxu0 %v3848
      %v4753 = vpop.f32.mrf.mxu0
      %v4754 = vadd.f32 %v4665, %v4753
      %v4755 = vpop.f32.mrf.mxu0
      %v4756 = vadd.f32 %v4667, %v4755
      %4757 = vmatmul.bf16.gmra.mxu0 %v3857
      %v4758 = vpop.f32.mrf.mxu0
      %v4759 = vadd.f32 %v4670, %v4758
      %v4760 = vpop.f32.mrf.mxu0
      %v4761 = vadd.f32 %v4672, %v4760
      %4762 = vmatmul.bf16.gmra.mxu0 %v3866
      %v4763 = vpop.f32.mrf.mxu0
      %v4764 = vadd.f32 %v4675, %v4763
      %v4765 = vpop.f32.mrf.mxu0
      %v4766 = vadd.f32 %v4677, %v4765
      %4767 = vmatmul.bf16.gmra.mxu0 %v3875
      %v4768 = vpop.f32.mrf.mxu0
      %v4769 = vadd.f32 %v4680, %v4768
      %v4770 = vpop.f32.mrf.mxu0
      %v4771 = vadd.f32 %v4682, %v4770
      %4772 = vmatmul.bf16.gmra.mxu0 %v3884
      %v4773 = vpop.f32.mrf.mxu0
      %v4774 = vadd.f32 %v4685, %v4773
      %v4775 = vpop.f32.mrf.mxu0
      %v4776 = vadd.f32 %v4687, %v4775
      %4777 = vmatmul.bf16.gmra.mxu0 %v3893
      %v4778 = vpop.f32.mrf.mxu0
      %v4779 = vadd.f32 %v4690, %v4778
      %v4780 = vpop.f32.mrf.mxu0
      %v4781 = vadd.f32 %v4692, %v4780
      %4782 = vmatmul.bf16.gmra.mxu0 %v3902
      %v4783 = vpop.f32.mrf.mxu0
      %v4784 = vadd.f32 %v4695, %v4783
      %v4785 = vpop.f32.mrf.mxu0
      %v4786 = vadd.f32 %v4697, %v4785
      %4787 = vmatmul.bf16.gmra.mxu0 %v3911
      %v4788 = vpop.f32.mrf.mxu0
      %v4789 = vadd.f32 %v4700, %v4788
      %v4790 = vpop.f32.mrf.mxu0
      %v4791 = vadd.f32 %v4702, %v4790
      %4792 = vmatmul.bf16.gmra.mxu0 %v3920
      %v4793 = vpop.f32.mrf.mxu0
      %v4794 = vadd.f32 %v4705, %v4793
      %v4795 = vpop.f32.mrf.mxu0
      %v4796 = vadd.f32 %v4707, %v4795
      %4797 = vmatmul.bf16.gmra.mxu0 %v3929
      %v4798 = vpop.f32.mrf.mxu0
      %v4799 = vadd.f32 %v4710, %v4798
      %v4800 = vpop.f32.mrf.mxu0
      %v4801 = vadd.f32 %v4712, %v4800
      %4802 = vmatmul.bf16.gmra.mxu0 %v3938
      %v4803 = vpop.f32.mrf.mxu0
      %v4804 = vadd.f32 %v4715, %v4803
      %v4805 = vpop.f32.mrf.mxu0
      %v4806 = vadd.f32 %v4717, %v4805
      %4807 = vmatmul.bf16.gmra.mxu0 %v3947
      %v4808 = vpop.f32.mrf.mxu0
      %v4809 = vadd.f32 %v4720, %v4808
      %v4810 = vpop.f32.mrf.mxu0
      %v4811 = vadd.f32 %v4722, %v4810
      %4812 = vmatmul.bf16.gmra.mxu0 %v3956
      %v4813 = vpop.f32.mrf.mxu0
      %v4814 = vadd.f32 %v4725, %v4813
      %v4815 = vpop.f32.mrf.mxu0
      %v4816 = vadd.f32 %v4727, %v4815
      %4817 = vmatmul.bf16.gmra.mxu0 %v3965
      %v4818 = vpop.f32.mrf.mxu0
      %v4819 = vadd.f32 %v4730, %v4818
      %v4820 = vpop.f32.mrf.mxu0
      %v4821 = vadd.f32 %v4732, %v4820
      %4822 = vmatmul.bf16.gmra.mxu0 %v3974
      %v4823 = vpop.f32.mrf.mxu0
      %v4824 = vadd.f32 %v4735, %v4823
      %v4825 = vpop.f32.mrf.mxu0
      %v4826 = vadd.f32 %v4737, %v4825
      %4827 = vmatmul.bf16.gmra.mxu0 %v3983
      %v4828 = vpop.f32.mrf.mxu0
      %v4829 = vadd.f32 %v4740, %v4828
      %v4830 = vpop.f32.mrf.mxu0
      %v4831 = vadd.f32 %v4742, %v4830
      %4832 = vdwg.mxu0
      %4833 = vmatpush.bf16.msra.mxu0 %v4453
      %4834 = vmatpush.bf16.msra.mxu0 %v4452
      %4835 = vmatpush.bf16.msra.mxu0 %v4451
      %4836 = vmatpush.bf16.msra.mxu0 %v4450
      %4837 = vmatpush.bf16.msra.mxu0 %v4449
      %4838 = vmatpush.bf16.msra.mxu0 %v4448
      %4839 = vmatpush.bf16.msra.mxu0 %v4447
      %4840 = vmatpush.bf16.msra.mxu0 %v4446
      %4841 = vmatmul.bf16.gmra.mxu0 %v3849
      %v4842 = vpop.f32.mrf.mxu0
      %v4843 = vadd.f32 %v4754, %v4842
      %v4844 = vpop.f32.mrf.mxu0
      %v4845 = vadd.f32 %v4756, %v4844
      %4846 = vmatmul.bf16.gmra.mxu0 %v3858
      %v4847 = vpop.f32.mrf.mxu0
      %v4848 = vadd.f32 %v4759, %v4847
      %v4849 = vpop.f32.mrf.mxu0
      %v4850 = vadd.f32 %v4761, %v4849
      %4851 = vmatmul.bf16.gmra.mxu0 %v3867
      %v4852 = vpop.f32.mrf.mxu0
      %v4853 = vadd.f32 %v4764, %v4852
      %v4854 = vpop.f32.mrf.mxu0
      %v4855 = vadd.f32 %v4766, %v4854
      %4856 = vmatmul.bf16.gmra.mxu0 %v3876
      %v4857 = vpop.f32.mrf.mxu0
      %v4858 = vadd.f32 %v4769, %v4857
      %v4859 = vpop.f32.mrf.mxu0
      %v4860 = vadd.f32 %v4771, %v4859
      %4861 = vmatmul.bf16.gmra.mxu0 %v3885
      %v4862 = vpop.f32.mrf.mxu0
      %v4863 = vadd.f32 %v4774, %v4862
      %v4864 = vpop.f32.mrf.mxu0
      %v4865 = vadd.f32 %v4776, %v4864
      %4866 = vmatmul.bf16.gmra.mxu0 %v3894
      %v4867 = vpop.f32.mrf.mxu0
      %v4868 = vadd.f32 %v4779, %v4867
      %v4869 = vpop.f32.mrf.mxu0
      %v4870 = vadd.f32 %v4781, %v4869
      %4871 = vmatmul.bf16.gmra.mxu0 %v3903
      %v4872 = vpop.f32.mrf.mxu0
      %v4873 = vadd.f32 %v4784, %v4872
      %v4874 = vpop.f32.mrf.mxu0
      %v4875 = vadd.f32 %v4786, %v4874
      %4876 = vmatmul.bf16.gmra.mxu0 %v3912
      %v4877 = vpop.f32.mrf.mxu0
      %v4878 = vadd.f32 %v4789, %v4877
      %v4879 = vpop.f32.mrf.mxu0
      %v4880 = vadd.f32 %v4791, %v4879
      %4881 = vmatmul.bf16.gmra.mxu0 %v3921
      %v4882 = vpop.f32.mrf.mxu0
      %v4883 = vadd.f32 %v4794, %v4882
      %v4884 = vpop.f32.mrf.mxu0
      %v4885 = vadd.f32 %v4796, %v4884
      %4886 = vmatmul.bf16.gmra.mxu0 %v3930
      %v4887 = vpop.f32.mrf.mxu0
      %v4888 = vadd.f32 %v4799, %v4887
      %v4889 = vpop.f32.mrf.mxu0
      %v4890 = vadd.f32 %v4801, %v4889
      %4891 = vmatmul.bf16.gmra.mxu0 %v3939
      %v4892 = vpop.f32.mrf.mxu0
      %v4893 = vadd.f32 %v4804, %v4892
      %v4894 = vpop.f32.mrf.mxu0
      %v4895 = vadd.f32 %v4806, %v4894
      %4896 = vmatmul.bf16.gmra.mxu0 %v3948
      %v4897 = vpop.f32.mrf.mxu0
      %v4898 = vadd.f32 %v4809, %v4897
      %v4899 = vpop.f32.mrf.mxu0
      %v4900 = vadd.f32 %v4811, %v4899
      %4901 = vmatmul.bf16.gmra.mxu0 %v3957
      %v4902 = vpop.f32.mrf.mxu0
      %v4903 = vadd.f32 %v4814, %v4902
      %v4904 = vpop.f32.mrf.mxu0
      %v4905 = vadd.f32 %v4816, %v4904
      %4906 = vmatmul.bf16.gmra.mxu0 %v3966
      %v4907 = vpop.f32.mrf.mxu0
      %v4908 = vadd.f32 %v4819, %v4907
      %v4909 = vpop.f32.mrf.mxu0
      %v4910 = vadd.f32 %v4821, %v4909
      %4911 = vmatmul.bf16.gmra.mxu0 %v3975
      %v4912 = vpop.f32.mrf.mxu0
      %v4913 = vadd.f32 %v4824, %v4912
      %v4914 = vpop.f32.mrf.mxu0
      %v4915 = vadd.f32 %v4826, %v4914
      %4916 = vmatmul.bf16.gmra.mxu0 %v3984
      %v4917 = vpop.f32.mrf.mxu0
      %v4918 = vadd.f32 %v4829, %v4917
      %v4919 = vpop.f32.mrf.mxu0
      %v4920 = vadd.f32 %v4831, %v4919
      %4921 = vdwg.mxu0
      %4922 = vmatpush.bf16.msra.mxu0 %v4461
      %4923 = vmatpush.bf16.msra.mxu0 %v4460
      %4924 = vmatpush.bf16.msra.mxu0 %v4459
      %4925 = vmatpush.bf16.msra.mxu0 %v4458
      %4926 = vmatpush.bf16.msra.mxu0 %v4457
      %4927 = vmatpush.bf16.msra.mxu0 %v4456
      %4928 = vmatpush.bf16.msra.mxu0 %v4455
      %4929 = vmatpush.bf16.msra.mxu0 %v4454
      %4930 = vmatmul.bf16.gmra.mxu0 %v3850
      %v4931 = vpop.f32.mrf.mxu0
      %v4932 = vadd.f32 %v4843, %v4931
      %v4933 = vpop.f32.mrf.mxu0
      %v4934 = vadd.f32 %v4845, %v4933
      %4935 = vmatmul.bf16.gmra.mxu0 %v3859
      %v4936 = vpop.f32.mrf.mxu0
      %v4937 = vadd.f32 %v4848, %v4936
      %v4938 = vpop.f32.mrf.mxu0
      %v4939 = vadd.f32 %v4850, %v4938
      %4940 = vmatmul.bf16.gmra.mxu0 %v3868
      %v4941 = vpop.f32.mrf.mxu0
      %v4942 = vadd.f32 %v4853, %v4941
      %v4943 = vpop.f32.mrf.mxu0
      %v4944 = vadd.f32 %v4855, %v4943
      %4945 = vmatmul.bf16.gmra.mxu0 %v3877
      %v4946 = vpop.f32.mrf.mxu0
      %v4947 = vadd.f32 %v4858, %v4946
      %v4948 = vpop.f32.mrf.mxu0
      %v4949 = vadd.f32 %v4860, %v4948
      %4950 = vmatmul.bf16.gmra.mxu0 %v3886
      %v4951 = vpop.f32.mrf.mxu0
      %v4952 = vadd.f32 %v4863, %v4951
      %v4953 = vpop.f32.mrf.mxu0
      %v4954 = vadd.f32 %v4865, %v4953
      %4955 = vmatmul.bf16.gmra.mxu0 %v3895
      %v4956 = vpop.f32.mrf.mxu0
      %v4957 = vadd.f32 %v4868, %v4956
      %v4958 = vpop.f32.mrf.mxu0
      %v4959 = vadd.f32 %v4870, %v4958
      %4960 = vmatmul.bf16.gmra.mxu0 %v3904
      %v4961 = vpop.f32.mrf.mxu0
      %v4962 = vadd.f32 %v4873, %v4961
      %v4963 = vpop.f32.mrf.mxu0
      %v4964 = vadd.f32 %v4875, %v4963
      %4965 = vmatmul.bf16.gmra.mxu0 %v3913
      %v4966 = vpop.f32.mrf.mxu0
      %v4967 = vadd.f32 %v4878, %v4966
      %v4968 = vpop.f32.mrf.mxu0
      %v4969 = vadd.f32 %v4880, %v4968
      %4970 = vmatmul.bf16.gmra.mxu0 %v3922
      %v4971 = vpop.f32.mrf.mxu0
      %v4972 = vadd.f32 %v4883, %v4971
      %v4973 = vpop.f32.mrf.mxu0
      %v4974 = vadd.f32 %v4885, %v4973
      %4975 = vmatmul.bf16.gmra.mxu0 %v3931
      %v4976 = vpop.f32.mrf.mxu0
      %v4977 = vadd.f32 %v4888, %v4976
      %v4978 = vpop.f32.mrf.mxu0
      %v4979 = vadd.f32 %v4890, %v4978
      %4980 = vmatmul.bf16.gmra.mxu0 %v3940
      %v4981 = vpop.f32.mrf.mxu0
      %v4982 = vadd.f32 %v4893, %v4981
      %v4983 = vpop.f32.mrf.mxu0
      %v4984 = vadd.f32 %v4895, %v4983
      %4985 = vmatmul.bf16.gmra.mxu0 %v3949
      %v4986 = vpop.f32.mrf.mxu0
      %v4987 = vadd.f32 %v4898, %v4986
      %v4988 = vpop.f32.mrf.mxu0
      %v4989 = vadd.f32 %v4900, %v4988
      %4990 = vmatmul.bf16.gmra.mxu0 %v3958
      %v4991 = vpop.f32.mrf.mxu0
      %v4992 = vadd.f32 %v4903, %v4991
      %v4993 = vpop.f32.mrf.mxu0
      %v4994 = vadd.f32 %v4905, %v4993
      %4995 = vmatmul.bf16.gmra.mxu0 %v3967
      %v4996 = vpop.f32.mrf.mxu0
      %v4997 = vadd.f32 %v4908, %v4996
      %v4998 = vpop.f32.mrf.mxu0
      %v4999 = vadd.f32 %v4910, %v4998
      %5000 = vmatmul.bf16.gmra.mxu0 %v3976
      %v5001 = vpop.f32.mrf.mxu0
      %v5002 = vadd.f32 %v4913, %v5001
      %v5003 = vpop.f32.mrf.mxu0
      %v5004 = vadd.f32 %v4915, %v5003
      %5005 = vmatmul.bf16.gmra.mxu0 %v3985
      %v5006 = vpop.f32.mrf.mxu0
      %v5007 = vadd.f32 %v4918, %v5006
      %v5008 = vpop.f32.mrf.mxu0
      %v5009 = vadd.f32 %v4920, %v5008
      %5010 = vdwg.mxu0
      %5011 = vmatpush.bf16.msra.mxu0 %v4469
      %5012 = vmatpush.bf16.msra.mxu0 %v4468
      %5013 = vmatpush.bf16.msra.mxu0 %v4467
      %5014 = vmatpush.bf16.msra.mxu0 %v4466
      %5015 = vmatpush.bf16.msra.mxu0 %v4465
      %5016 = vmatpush.bf16.msra.mxu0 %v4464
      %5017 = vmatpush.bf16.msra.mxu0 %v4463
      %5018 = vmatpush.bf16.msra.mxu0 %v4462
      %5019 = vmatmul.bf16.gmra.mxu0 %v3851
      %v5020 = vpop.f32.mrf.mxu0
      %v5021 = vadd.f32 %v4932, %v5020
      %v5022 = vpop.f32.mrf.mxu0
      %v5023 = vadd.f32 %v4934, %v5022
      %5024 = vmatmul.bf16.gmra.mxu0 %v3860
      %v5025 = vpop.f32.mrf.mxu0
      %v5026 = vadd.f32 %v4937, %v5025
      %v5027 = vpop.f32.mrf.mxu0
      %v5028 = vadd.f32 %v4939, %v5027
      %5029 = vmatmul.bf16.gmra.mxu0 %v3869
      %v5030 = vpop.f32.mrf.mxu0
      %v5031 = vadd.f32 %v4942, %v5030
      %v5032 = vpop.f32.mrf.mxu0
      %v5033 = vadd.f32 %v4944, %v5032
      %5034 = vmatmul.bf16.gmra.mxu0 %v3878
      %v5035 = vpop.f32.mrf.mxu0
      %v5036 = vadd.f32 %v4947, %v5035
      %v5037 = vpop.f32.mrf.mxu0
      %v5038 = vadd.f32 %v4949, %v5037
      %5039 = vmatmul.bf16.gmra.mxu0 %v3887
      %v5040 = vpop.f32.mrf.mxu0
      %v5041 = vadd.f32 %v4952, %v5040
      %v5042 = vpop.f32.mrf.mxu0
      %v5043 = vadd.f32 %v4954, %v5042
      %5044 = vmatmul.bf16.gmra.mxu0 %v3896
      %v5045 = vpop.f32.mrf.mxu0
      %v5046 = vadd.f32 %v4957, %v5045
      %v5047 = vpop.f32.mrf.mxu0
      %v5048 = vadd.f32 %v4959, %v5047
      %5049 = vmatmul.bf16.gmra.mxu0 %v3905
      %v5050 = vpop.f32.mrf.mxu0
      %v5051 = vadd.f32 %v4962, %v5050
      %v5052 = vpop.f32.mrf.mxu0
      %v5053 = vadd.f32 %v4964, %v5052
      %5054 = vmatmul.bf16.gmra.mxu0 %v3914
      %v5055 = vpop.f32.mrf.mxu0
      %v5056 = vadd.f32 %v4967, %v5055
      %v5057 = vpop.f32.mrf.mxu0
      %v5058 = vadd.f32 %v4969, %v5057
      %5059 = vmatmul.bf16.gmra.mxu0 %v3923
      %v5060 = vpop.f32.mrf.mxu0
      %v5061 = vadd.f32 %v4972, %v5060
      %v5062 = vpop.f32.mrf.mxu0
      %v5063 = vadd.f32 %v4974, %v5062
      %5064 = vmatmul.bf16.gmra.mxu0 %v3932
      %v5065 = vpop.f32.mrf.mxu0
      %v5066 = vadd.f32 %v4977, %v5065
      %v5067 = vpop.f32.mrf.mxu0
      %v5068 = vadd.f32 %v4979, %v5067
      %5069 = vmatmul.bf16.gmra.mxu0 %v3941
      %v5070 = vpop.f32.mrf.mxu0
      %v5071 = vadd.f32 %v4982, %v5070
      %v5072 = vpop.f32.mrf.mxu0
      %v5073 = vadd.f32 %v4984, %v5072
      %5074 = vmatmul.bf16.gmra.mxu0 %v3950
      %v5075 = vpop.f32.mrf.mxu0
      %v5076 = vadd.f32 %v4987, %v5075
      %v5077 = vpop.f32.mrf.mxu0
      %v5078 = vadd.f32 %v4989, %v5077
      %5079 = vmatmul.bf16.gmra.mxu0 %v3959
      %v5080 = vpop.f32.mrf.mxu0
      %v5081 = vadd.f32 %v4992, %v5080
      %v5082 = vpop.f32.mrf.mxu0
      %v5083 = vadd.f32 %v4994, %v5082
      %5084 = vmatmul.bf16.gmra.mxu0 %v3968
      %v5085 = vpop.f32.mrf.mxu0
      %v5086 = vadd.f32 %v4997, %v5085
      %v5087 = vpop.f32.mrf.mxu0
      %v5088 = vadd.f32 %v4999, %v5087
      %5089 = vmatmul.bf16.gmra.mxu0 %v3977
      %v5090 = vpop.f32.mrf.mxu0
      %v5091 = vadd.f32 %v5002, %v5090
      %v5092 = vpop.f32.mrf.mxu0
      %v5093 = vadd.f32 %v5004, %v5092
      %5094 = vmatmul.bf16.gmra.mxu0 %v3986
      %v5095 = vpop.f32.mrf.mxu0
      %v5096 = vadd.f32 %v5007, %v5095
      %v5097 = vpop.f32.mrf.mxu0
      %v5098 = vadd.f32 %v5009, %v5097
      %5099 = vdwg.mxu0
      %5100 = vmatpush.bf16.msra.mxu0 %v4477
      %5101 = vmatpush.bf16.msra.mxu0 %v4476
      %5102 = vmatpush.bf16.msra.mxu0 %v4475
      %5103 = vmatpush.bf16.msra.mxu0 %v4474
      %5104 = vmatpush.bf16.msra.mxu0 %v4473
      %5105 = vmatpush.bf16.msra.mxu0 %v4472
      %5106 = vmatpush.bf16.msra.mxu0 %v4471
      %5107 = vmatpush.bf16.msra.mxu0 %v4470
      %5108 = vmatmul.bf16.gmra.mxu0 %v3852
      %v5109 = vpop.f32.mrf.mxu0
      %v5110 = vadd.f32 %v5021, %v5109
      %v5111 = vpop.f32.mrf.mxu0
      %v5112 = vadd.f32 %v5023, %v5111
      %5113 = vmatmul.bf16.gmra.mxu0 %v3861
      %v5114 = vpop.f32.mrf.mxu0
      %v5115 = vadd.f32 %v5026, %v5114
      %v5116 = vpop.f32.mrf.mxu0
      %v5117 = vadd.f32 %v5028, %v5116
      %5118 = vmatmul.bf16.gmra.mxu0 %v3870
      %v5119 = vpop.f32.mrf.mxu0
      %v5120 = vadd.f32 %v5031, %v5119
      %v5121 = vpop.f32.mrf.mxu0
      %v5122 = vadd.f32 %v5033, %v5121
      %5123 = vmatmul.bf16.gmra.mxu0 %v3879
      %v5124 = vpop.f32.mrf.mxu0
      %v5125 = vadd.f32 %v5036, %v5124
      %v5126 = vpop.f32.mrf.mxu0
      %v5127 = vadd.f32 %v5038, %v5126
      %5128 = vmatmul.bf16.gmra.mxu0 %v3888
      %v5129 = vpop.f32.mrf.mxu0
      %v5130 = vadd.f32 %v5041, %v5129
      %v5131 = vpop.f32.mrf.mxu0
      %v5132 = vadd.f32 %v5043, %v5131
      %5133 = vmatmul.bf16.gmra.mxu0 %v3897
      %v5134 = vpop.f32.mrf.mxu0
      %v5135 = vadd.f32 %v5046, %v5134
      %v5136 = vpop.f32.mrf.mxu0
      %v5137 = vadd.f32 %v5048, %v5136
      %5138 = vmatmul.bf16.gmra.mxu0 %v3906
      %v5139 = vpop.f32.mrf.mxu0
      %v5140 = vadd.f32 %v5051, %v5139
      %v5141 = vpop.f32.mrf.mxu0
      %v5142 = vadd.f32 %v5053, %v5141
      %5143 = vmatmul.bf16.gmra.mxu0 %v3915
      %v5144 = vpop.f32.mrf.mxu0
      %v5145 = vadd.f32 %v5056, %v5144
      %v5146 = vpop.f32.mrf.mxu0
      %v5147 = vadd.f32 %v5058, %v5146
      %5148 = vmatmul.bf16.gmra.mxu0 %v3924
      %v5149 = vpop.f32.mrf.mxu0
      %v5150 = vadd.f32 %v5061, %v5149
      %v5151 = vpop.f32.mrf.mxu0
      %v5152 = vadd.f32 %v5063, %v5151
      %5153 = vmatmul.bf16.gmra.mxu0 %v3933
      %v5154 = vpop.f32.mrf.mxu0
      %v5155 = vadd.f32 %v5066, %v5154
      %v5156 = vpop.f32.mrf.mxu0
      %v5157 = vadd.f32 %v5068, %v5156
      %5158 = vmatmul.bf16.gmra.mxu0 %v3942
      %v5159 = vpop.f32.mrf.mxu0
      %v5160 = vadd.f32 %v5071, %v5159
      %v5161 = vpop.f32.mrf.mxu0
      %v5162 = vadd.f32 %v5073, %v5161
      %5163 = vmatmul.bf16.gmra.mxu0 %v3951
      %v5164 = vpop.f32.mrf.mxu0
      %v5165 = vadd.f32 %v5076, %v5164
      %v5166 = vpop.f32.mrf.mxu0
      %v5167 = vadd.f32 %v5078, %v5166
      %5168 = vmatmul.bf16.gmra.mxu0 %v3960
      %v5169 = vpop.f32.mrf.mxu0
      %v5170 = vadd.f32 %v5081, %v5169
      %v5171 = vpop.f32.mrf.mxu0
      %v5172 = vadd.f32 %v5083, %v5171
      %5173 = vmatmul.bf16.gmra.mxu0 %v3969
      %v5174 = vpop.f32.mrf.mxu0
      %v5175 = vadd.f32 %v5086, %v5174
      %v5176 = vpop.f32.mrf.mxu0
      %v5177 = vadd.f32 %v5088, %v5176
      %5178 = vmatmul.bf16.gmra.mxu0 %v3978
      %v5179 = vpop.f32.mrf.mxu0
      %v5180 = vadd.f32 %v5091, %v5179
      %v5181 = vpop.f32.mrf.mxu0
      %v5182 = vadd.f32 %v5093, %v5181
      %5183 = vmatmul.bf16.gmra.mxu0 %v3987
      %v5184 = vpop.f32.mrf.mxu0
      %v5185 = vadd.f32 %v5096, %v5184
      %v5186 = vpop.f32.mrf.mxu0
      %v5187 = vadd.f32 %v5098, %v5186
      %5188 = vdwg.mxu0
      %5189 = vmatpush.bf16.msra.mxu0 %v4485
      %5190 = vmatpush.bf16.msra.mxu0 %v4484
      %5191 = vmatpush.bf16.msra.mxu0 %v4483
      %5192 = vmatpush.bf16.msra.mxu0 %v4482
      %5193 = vmatpush.bf16.msra.mxu0 %v4481
      %5194 = vmatpush.bf16.msra.mxu0 %v4480
      %5195 = vmatpush.bf16.msra.mxu0 %v4479
      %5196 = vmatpush.bf16.msra.mxu0 %v4478
      %5197 = vmatmul.bf16.gmra.mxu0 %v3853
      %v5198 = vpop.f32.mrf.mxu0
      %v5199 = vadd.f32 %v5110, %v5198
      %v5200 = vpop.f32.mrf.mxu0
      %v5201 = vadd.f32 %v5112, %v5200
      %5202 = vmatmul.bf16.gmra.mxu0 %v3862
      %v5203 = vpop.f32.mrf.mxu0
      %v5204 = vadd.f32 %v5115, %v5203
      %v5205 = vpop.f32.mrf.mxu0
      %v5206 = vadd.f32 %v5117, %v5205
      %5207 = vmatmul.bf16.gmra.mxu0 %v3871
      %v5208 = vpop.f32.mrf.mxu0
      %v5209 = vadd.f32 %v5120, %v5208
      %v5210 = vpop.f32.mrf.mxu0
      %v5211 = vadd.f32 %v5122, %v5210
      %5212 = vmatmul.bf16.gmra.mxu0 %v3880
      %v5213 = vpop.f32.mrf.mxu0
      %v5214 = vadd.f32 %v5125, %v5213
      %v5215 = vpop.f32.mrf.mxu0
      %v5216 = vadd.f32 %v5127, %v5215
      %5217 = vmatmul.bf16.gmra.mxu0 %v3889
      %v5218 = vpop.f32.mrf.mxu0
      %v5219 = vadd.f32 %v5130, %v5218
      %v5220 = vpop.f32.mrf.mxu0
      %v5221 = vadd.f32 %v5132, %v5220
      %5222 = vmatmul.bf16.gmra.mxu0 %v3898
      %v5223 = vpop.f32.mrf.mxu0
      %v5224 = vadd.f32 %v5135, %v5223
      %v5225 = vpop.f32.mrf.mxu0
      %v5226 = vadd.f32 %v5137, %v5225
      %5227 = vmatmul.bf16.gmra.mxu0 %v3907
      %v5228 = vpop.f32.mrf.mxu0
      %v5229 = vadd.f32 %v5140, %v5228
      %v5230 = vpop.f32.mrf.mxu0
      %v5231 = vadd.f32 %v5142, %v5230
      %5232 = vmatmul.bf16.gmra.mxu0 %v3916
      %v5233 = vpop.f32.mrf.mxu0
      %v5234 = vadd.f32 %v5145, %v5233
      %v5235 = vpop.f32.mrf.mxu0
      %v5236 = vadd.f32 %v5147, %v5235
      %5237 = vmatmul.bf16.gmra.mxu0 %v3925
      %v5238 = vpop.f32.mrf.mxu0
      %v5239 = vadd.f32 %v5150, %v5238
      %v5240 = vpop.f32.mrf.mxu0
      %v5241 = vadd.f32 %v5152, %v5240
      %5242 = vmatmul.bf16.gmra.mxu0 %v3934
      %v5243 = vpop.f32.mrf.mxu0
      %v5244 = vadd.f32 %v5155, %v5243
      %v5245 = vpop.f32.mrf.mxu0
      %v5246 = vadd.f32 %v5157, %v5245
      %5247 = vmatmul.bf16.gmra.mxu0 %v3943
      %v5248 = vpop.f32.mrf.mxu0
      %v5249 = vadd.f32 %v5160, %v5248
      %v5250 = vpop.f32.mrf.mxu0
      %v5251 = vadd.f32 %v5162, %v5250
      %5252 = vmatmul.bf16.gmra.mxu0 %v3952
      %v5253 = vpop.f32.mrf.mxu0
      %v5254 = vadd.f32 %v5165, %v5253
      %v5255 = vpop.f32.mrf.mxu0
      %v5256 = vadd.f32 %v5167, %v5255
      %5257 = vmatmul.bf16.gmra.mxu0 %v3961
      %v5258 = vpop.f32.mrf.mxu0
      %v5259 = vadd.f32 %v5170, %v5258
      %v5260 = vpop.f32.mrf.mxu0
      %v5261 = vadd.f32 %v5172, %v5260
      %5262 = vmatmul.bf16.gmra.mxu0 %v3970
      %v5263 = vpop.f32.mrf.mxu0
      %v5264 = vadd.f32 %v5175, %v5263
      %v5265 = vpop.f32.mrf.mxu0
      %v5266 = vadd.f32 %v5177, %v5265
      %5267 = vmatmul.bf16.gmra.mxu0 %v3979
      %v5268 = vpop.f32.mrf.mxu0
      %v5269 = vadd.f32 %v5180, %v5268
      %v5270 = vpop.f32.mrf.mxu0
      %v5271 = vadd.f32 %v5182, %v5270
      %5272 = vmatmul.bf16.gmra.mxu0 %v3988
      %v5273 = vpop.f32.mrf.mxu0
      %v5274 = vadd.f32 %v5185, %v5273
      %v5275 = vpop.f32.mrf.mxu0
      %v5276 = vadd.f32 %v5187, %v5275
      %5277 = vdwg.mxu0
      %5278 = vmatpush.bf16.msra.mxu0 %v4493
      %5279 = vmatpush.bf16.msra.mxu0 %v4492
      %5280 = vmatpush.bf16.msra.mxu0 %v4491
      %5281 = vmatpush.bf16.msra.mxu0 %v4490
      %5282 = vmatpush.bf16.msra.mxu0 %v4489
      %5283 = vmatpush.bf16.msra.mxu0 %v4488
      %5284 = vmatpush.bf16.msra.mxu0 %v4487
      %5285 = vmatpush.bf16.msra.mxu0 %v4486
      %5286 = vmatmul.bf16.gmra.mxu0 %v3854
      %v5287 = vpop.f32.mrf.mxu0
      %v5288 = vadd.f32 %v5199, %v5287
      %v5289 = vpop.f32.mrf.mxu0
      %v5290 = vadd.f32 %v5201, %v5289
      %5291 = vmatmul.bf16.gmra.mxu0 %v3863
      %v5292 = vpop.f32.mrf.mxu0
      %v5293 = vadd.f32 %v5204, %v5292
      %v5294 = vpop.f32.mrf.mxu0
      %v5295 = vadd.f32 %v5206, %v5294
      %5296 = vmatmul.bf16.gmra.mxu0 %v3872
      %v5297 = vpop.f32.mrf.mxu0
      %v5298 = vadd.f32 %v5209, %v5297
      %v5299 = vpop.f32.mrf.mxu0
      %v5300 = vadd.f32 %v5211, %v5299
      %5301 = vmatmul.bf16.gmra.mxu0 %v3881
      %v5302 = vpop.f32.mrf.mxu0
      %v5303 = vadd.f32 %v5214, %v5302
      %v5304 = vpop.f32.mrf.mxu0
      %v5305 = vadd.f32 %v5216, %v5304
      %5306 = vmatmul.bf16.gmra.mxu0 %v3890
      %v5307 = vpop.f32.mrf.mxu0
      %v5308 = vadd.f32 %v5219, %v5307
      %v5309 = vpop.f32.mrf.mxu0
      %v5310 = vadd.f32 %v5221, %v5309
      %5311 = vmatmul.bf16.gmra.mxu0 %v3899
      %v5312 = vpop.f32.mrf.mxu0
      %v5313 = vadd.f32 %v5224, %v5312
      %v5314 = vpop.f32.mrf.mxu0
      %v5315 = vadd.f32 %v5226, %v5314
      %5316 = vmatmul.bf16.gmra.mxu0 %v3908
      %v5317 = vpop.f32.mrf.mxu0
      %v5318 = vadd.f32 %v5229, %v5317
      %v5319 = vpop.f32.mrf.mxu0
      %v5320 = vadd.f32 %v5231, %v5319
      %5321 = vmatmul.bf16.gmra.mxu0 %v3917
      %v5322 = vpop.f32.mrf.mxu0
      %v5323 = vadd.f32 %v5234, %v5322
      %v5324 = vpop.f32.mrf.mxu0
      %v5325 = vadd.f32 %v5236, %v5324
      %5326 = vmatmul.bf16.gmra.mxu0 %v3926
      %v5327 = vpop.f32.mrf.mxu0
      %v5328 = vadd.f32 %v5239, %v5327
      %v5329 = vpop.f32.mrf.mxu0
      %v5330 = vadd.f32 %v5241, %v5329
      %5331 = vmatmul.bf16.gmra.mxu0 %v3935
      %v5332 = vpop.f32.mrf.mxu0
      %v5333 = vadd.f32 %v5244, %v5332
      %v5334 = vpop.f32.mrf.mxu0
      %v5335 = vadd.f32 %v5246, %v5334
      %5336 = vmatmul.bf16.gmra.mxu0 %v3944
      %v5337 = vpop.f32.mrf.mxu0
      %v5338 = vadd.f32 %v5249, %v5337
      %v5339 = vpop.f32.mrf.mxu0
      %v5340 = vadd.f32 %v5251, %v5339
      %5341 = vmatmul.bf16.gmra.mxu0 %v3953
      %v5342 = vpop.f32.mrf.mxu0
      %v5343 = vadd.f32 %v5254, %v5342
      %v5344 = vpop.f32.mrf.mxu0
      %v5345 = vadd.f32 %v5256, %v5344
      %5346 = vmatmul.bf16.gmra.mxu0 %v3962
      %v5347 = vpop.f32.mrf.mxu0
      %v5348 = vadd.f32 %v5259, %v5347
      %v5349 = vpop.f32.mrf.mxu0
      %v5350 = vadd.f32 %v5261, %v5349
      %5351 = vmatmul.bf16.gmra.mxu0 %v3971
      %v5352 = vpop.f32.mrf.mxu0
      %v5353 = vadd.f32 %v5264, %v5352
      %v5354 = vpop.f32.mrf.mxu0
      %v5355 = vadd.f32 %v5266, %v5354
      %5356 = vmatmul.bf16.gmra.mxu0 %v3980
      %v5357 = vpop.f32.mrf.mxu0
      %v5358 = vadd.f32 %v5269, %v5357
      %v5359 = vpop.f32.mrf.mxu0
      %v5360 = vadd.f32 %v5271, %v5359
      %5361 = vmatmul.bf16.gmra.mxu0 %v3989
      %v5362 = vpop.f32.mrf.mxu0
      %v5363 = vadd.f32 %v5274, %v5362
      %v5364 = vpop.f32.mrf.mxu0
      %v5365 = vadd.f32 %v5276, %v5364
      %5366 = vdwg.mxu0
      %v5367 = vld [vmem:[%s5] sm:$0x1]
      %v5369 = vperm.slane %v5367, 0
      %v5371 = vmul.f32 %v5288, %v5369
      %v5372 = vmul.f32 %v5290, %v5369
      %v5373 = vmul.f32 %v5293, %v5369
      %v5374 = vmul.f32 %v5295, %v5369
      %v5375 = vmul.f32 %v5298, %v5369
      %v5376 = vmul.f32 %v5300, %v5369
      %v5377 = vmul.f32 %v5303, %v5369
      %v5378 = vmul.f32 %v5305, %v5369
      %v5379 = vmul.f32 %v5308, %v5369
      %v5380 = vmul.f32 %v5310, %v5369
      %v5381 = vmul.f32 %v5313, %v5369
      %v5382 = vmul.f32 %v5315, %v5369
      %v5383 = vmul.f32 %v5318, %v5369
      %v5384 = vmul.f32 %v5320, %v5369
      %v5385 = vmul.f32 %v5323, %v5369
      %v5386 = vmul.f32 %v5325, %v5369
      %v5387 = vmul.f32 %v5328, %v5369
      %v5388 = vmul.f32 %v5330, %v5369
      %v5389 = vmul.f32 %v5333, %v5369
      %v5390 = vmul.f32 %v5335, %v5369
      %v5391 = vmul.f32 %v5338, %v5369
      %v5392 = vmul.f32 %v5340, %v5369
      %v5393 = vmul.f32 %v5343, %v5369
      %v5394 = vmul.f32 %v5345, %v5369
      %v5395 = vmul.f32 %v5348, %v5369
      %v5396 = vmul.f32 %v5350, %v5369
      %v5397 = vmul.f32 %v5353, %v5369
      %v5398 = vmul.f32 %v5355, %v5369
      %v5399 = vmul.f32 %v5358, %v5369
      %v5400 = vmul.f32 %v5360, %v5369
      %v5401 = vmul.f32 %v5363, %v5369
      %v5402 = vmul.f32 %v5365, %v5369
      %v5403 = vld [vmem:[%s6] sm:$0x1]
      %v5405 = vperm.slane %v5403, 0
      %v5407 = vadd.f32 %v5371, %v5405
      %v5408 = vadd.f32 %v5372, %v5405
      %v5409 = vadd.f32 %v5373, %v5405
      %v5410 = vadd.f32 %v5374, %v5405
      %v5411 = vadd.f32 %v5375, %v5405
      %v5412 = vadd.f32 %v5376, %v5405
      %v5413 = vadd.f32 %v5377, %v5405
      %v5414 = vadd.f32 %v5378, %v5405
      %v5415 = vadd.f32 %v5379, %v5405
      %v5416 = vadd.f32 %v5380, %v5405
      %v5417 = vadd.f32 %v5381, %v5405
      %v5418 = vadd.f32 %v5382, %v5405
      %v5419 = vadd.f32 %v5383, %v5405
      %v5420 = vadd.f32 %v5384, %v5405
      %v5421 = vadd.f32 %v5385, %v5405
      %v5422 = vadd.f32 %v5386, %v5405
      %v5423 = vadd.f32 %v5387, %v5405
      %v5424 = vadd.f32 %v5388, %v5405
      %v5425 = vadd.f32 %v5389, %v5405
      %v5426 = vadd.f32 %v5390, %v5405
      %v5427 = vadd.f32 %v5391, %v5405
      %v5428 = vadd.f32 %v5392, %v5405
      %v5429 = vadd.f32 %v5393, %v5405
      %v5430 = vadd.f32 %v5394, %v5405
      %v5431 = vadd.f32 %v5395, %v5405
      %v5432 = vadd.f32 %v5396, %v5405
      %v5433 = vadd.f32 %v5397, %v5405
      %v5434 = vadd.f32 %v5398, %v5405
      %v5435 = vadd.f32 %v5399, %v5405
      %v5436 = vadd.f32 %v5400, %v5405
      %v5437 = vadd.f32 %v5401, %v5405
      %v5438 = vadd.f32 %v5402, %v5405
      %v5439 = vld [vmem:[#allocation5] sm:$0xff]
      %v5440 = vld [vmem:[#allocation5 + $0x8] sm:$0xff]
      %v5441 = vld [vmem:[#allocation5 + $0x10] sm:$0xff]
      %v5442 = vld [vmem:[#allocation5 + $0x18] sm:$0xff]
      %v5443 = vld [vmem:[#allocation5 + $0x20] sm:$0xff]
      %v5444 = vld [vmem:[#allocation5 + $0x28] sm:$0xff]
      %v5445 = vld [vmem:[#allocation5 + $0x30] sm:$0xff]
      %v5446 = vld [vmem:[#allocation5 + $0x38] sm:$0xff]
      %v5447 = vld [vmem:[#allocation5 + $0x40] sm:$0xff]
      %v5448 = vld [vmem:[#allocation5 + $0x48] sm:$0xff]
      %v5449 = vld [vmem:[#allocation5 + $0x50] sm:$0xff]
      %v5450 = vld [vmem:[#allocation5 + $0x58] sm:$0xff]
      %v5451 = vld [vmem:[#allocation5 + $0x60] sm:$0xff]
      %v5452 = vld [vmem:[#allocation5 + $0x68] sm:$0xff]
      %v5453 = vld [vmem:[#allocation5 + $0x70] sm:$0xff]
      %v5454 = vld [vmem:[#allocation5 + $0x78] sm:$0xff]
      %v5455 = vld [vmem:[#allocation5 + $0x80] sm:$0xff]
      %v5456 = vld [vmem:[#allocation5 + $0x88] sm:$0xff]
      %v5457 = vld [vmem:[#allocation5 + $0x90] sm:$0xff]
      %v5458 = vld [vmem:[#allocation5 + $0x98] sm:$0xff]
      %v5459 = vld [vmem:[#allocation5 + $0xa0] sm:$0xff]
      %v5460 = vld [vmem:[#allocation5 + $0xa8] sm:$0xff]
      %v5461 = vld [vmem:[#allocation5 + $0xb0] sm:$0xff]
      %v5462 = vld [vmem:[#allocation5 + $0xb8] sm:$0xff]
      %v5463 = vld [vmem:[#allocation5 + $0xc0] sm:$0xff]
      %v5464 = vld [vmem:[#allocation5 + $0xc8] sm:$0xff]
      %v5465 = vld [vmem:[#allocation5 + $0xd0] sm:$0xff]
      %v5466 = vld [vmem:[#allocation5 + $0xd8] sm:$0xff]
      %v5467 = vld [vmem:[#allocation5 + $0xe0] sm:$0xff]
      %v5468 = vld [vmem:[#allocation5 + $0xe8] sm:$0xff]
      %v5469 = vld [vmem:[#allocation5 + $0xf0] sm:$0xff]
      %v5470 = vld [vmem:[#allocation5 + $0xf8] sm:$0xff]
      %v5471 = vadd.f32 %v5407, %v5439
      %v5472 = vadd.f32 %v5408, %v5440
      %v5473 = vadd.f32 %v5409, %v5441
      %v5474 = vadd.f32 %v5410, %v5442
      %v5475 = vadd.f32 %v5411, %v5443
      %v5476 = vadd.f32 %v5412, %v5444
      %v5477 = vadd.f32 %v5413, %v5445
      %v5478 = vadd.f32 %v5414, %v5446
      %v5479 = vadd.f32 %v5415, %v5447
      %v5480 = vadd.f32 %v5416, %v5448
      %v5481 = vadd.f32 %v5417, %v5449
      %v5482 = vadd.f32 %v5418, %v5450
      %v5483 = vadd.f32 %v5419, %v5451
      %v5484 = vadd.f32 %v5420, %v5452
      %v5485 = vadd.f32 %v5421, %v5453
      %v5486 = vadd.f32 %v5422, %v5454
      %v5487 = vadd.f32 %v5423, %v5455
      %v5488 = vadd.f32 %v5424, %v5456
      %v5489 = vadd.f32 %v5425, %v5457
      %v5490 = vadd.f32 %v5426, %v5458
      %v5491 = vadd.f32 %v5427, %v5459
      %v5492 = vadd.f32 %v5428, %v5460
      %v5493 = vadd.f32 %v5429, %v5461
      %v5494 = vadd.f32 %v5430, %v5462
      %v5495 = vadd.f32 %v5431, %v5463
      %v5496 = vadd.f32 %v5432, %v5464
      %v5497 = vadd.f32 %v5433, %v5465
      %v5498 = vadd.f32 %v5434, %v5466
      %v5499 = vadd.f32 %v5435, %v5467
      %v5500 = vadd.f32 %v5436, %v5468
      %v5501 = vadd.f32 %v5437, %v5469
      %v5502 = vadd.f32 %v5438, %v5470
      %v5503 = vmax.f32 %v5471, 0.0
      %v5504 = vmax.f32 %v5472, 0.0
      %v5505 = vmax.f32 %v5473, 0.0
      %v5506 = vmax.f32 %v5474, 0.0
      %v5507 = vmax.f32 %v5475, 0.0
      %v5508 = vmax.f32 %v5476, 0.0
      %v5509 = vmax.f32 %v5477, 0.0
      %v5510 = vmax.f32 %v5478, 0.0
      %v5511 = vmax.f32 %v5479, 0.0
      %v5512 = vmax.f32 %v5480, 0.0
      %v5513 = vmax.f32 %v5481, 0.0
      %v5514 = vmax.f32 %v5482, 0.0
      %v5515 = vmax.f32 %v5483, 0.0
      %v5516 = vmax.f32 %v5484, 0.0
      %v5517 = vmax.f32 %v5485, 0.0
      %v5518 = vmax.f32 %v5486, 0.0
      %v5519 = vmax.f32 %v5487, 0.0
      %v5520 = vmax.f32 %v5488, 0.0
      %v5521 = vmax.f32 %v5489, 0.0
      %v5522 = vmax.f32 %v5490, 0.0
      %v5523 = vmax.f32 %v5491, 0.0
      %v5524 = vmax.f32 %v5492, 0.0
      %v5525 = vmax.f32 %v5493, 0.0
      %v5526 = vmax.f32 %v5494, 0.0
      %v5527 = vmax.f32 %v5495, 0.0
      %v5528 = vmax.f32 %v5496, 0.0
      %v5529 = vmax.f32 %v5497, 0.0
      %v5530 = vmax.f32 %v5498, 0.0
      %v5531 = vmax.f32 %v5499, 0.0
      %v5532 = vmax.f32 %v5500, 0.0
      %v5533 = vmax.f32 %v5501, 0.0
      %v5534 = vmax.f32 %v5502, 0.0
      %5535 = vst [vmem:[%s278] sm:$0xff] %v5503
      %5536 = vst [vmem:[%s278 + $0x8] sm:$0xff] %v5504
      %5537 = vst [vmem:[%s278 + $0x10] sm:$0xff] %v5505
      %5538 = vst [vmem:[%s278 + $0x18] sm:$0xff] %v5506
      %5539 = vst [vmem:[%s278 + $0x20] sm:$0xff] %v5507
      %5540 = vst [vmem:[%s278 + $0x28] sm:$0xff] %v5508
      %5541 = vst [vmem:[%s278 + $0x30] sm:$0xff] %v5509
      %5542 = vst [vmem:[%s278 + $0x38] sm:$0xff] %v5510
      %5543 = vst [vmem:[%s278 + $0x40] sm:$0xff] %v5511
      %5544 = vst [vmem:[%s278 + $0x48] sm:$0xff] %v5512
      %5545 = vst [vmem:[%s278 + $0x50] sm:$0xff] %v5513
      %5546 = vst [vmem:[%s278 + $0x58] sm:$0xff] %v5514
      %5547 = vst [vmem:[%s278 + $0x60] sm:$0xff] %v5515
      %5548 = vst [vmem:[%s278 + $0x68] sm:$0xff] %v5516
      %5549 = vst [vmem:[%s278 + $0x70] sm:$0xff] %v5517
      %5550 = vst [vmem:[%s278 + $0x78] sm:$0xff] %v5518
      %5551 = vst [vmem:[%s278 + $0x80] sm:$0xff] %v5519
      %5552 = vst [vmem:[%s278 + $0x88] sm:$0xff] %v5520
      %5553 = vst [vmem:[%s278 + $0x90] sm:$0xff] %v5521
      %5554 = vst [vmem:[%s278 + $0x98] sm:$0xff] %v5522
      %5555 = vst [vmem:[%s278 + $0xa0] sm:$0xff] %v5523
      %5556 = vst [vmem:[%s278 + $0xa8] sm:$0xff] %v5524
      %5557 = vst [vmem:[%s278 + $0xb0] sm:$0xff] %v5525
      %5558 = vst [vmem:[%s278 + $0xb8] sm:$0xff] %v5526
      %5559 = vst [vmem:[%s278 + $0xc0] sm:$0xff] %v5527
      %5560 = vst [vmem:[%s278 + $0xc8] sm:$0xff] %v5528
      %5561 = vst [vmem:[%s278 + $0xd0] sm:$0xff] %v5529
      %5562 = vst [vmem:[%s278 + $0xd8] sm:$0xff] %v5530
      %5563 = vst [vmem:[%s278 + $0xe0] sm:$0xff] %v5531
      %5564 = vst [vmem:[%s278 + $0xe8] sm:$0xff] %v5532
      %5565 = vst [vmem:[%s278 + $0xf0] sm:$0xff] %v5533
      %5566 = vst [vmem:[%s278 + $0xf8] sm:$0xff] %v5534
      %p5567 = scmp.lt.s32.totalorder %s18, 1
      %s5568 = scalar_select %p5567, %s18, 1
      %s5569 = smul.addr %s5568, 32
      %s5570 = smul.addr %s5569, 8
      %s5571 = scalar_lea.vmem %s7, %s5570
      // Predicated region
      $region49: #{resblock_forward.1} parent=47 // pred_check
        %p5572 = pneg %p188
      $region50: #{resblock_forward.1} parent=47 // pred_check_branch
        %5574 = sbr.rel (%p5572) target = $region52
      $region51: #{resblock_forward.1} parent=47 // pred_region
        _
      $region52: #{resblock_forward.1} parent=47 // pred_fallthru
        _
    $region48: #{resblock_forward.1} parent=5 // pred_fallthru
      _
    %p5575 = scmp.le.s32.totalorder 2, %s13
    // Predicated region
    $region53: #{resblock_forward.1} parent=5 // pred_check
      %p5576 = pneg %p5575
    $region54: #{resblock_forward.1} parent=5 // pred_check_branch
      %5578 = sbr.rel (%p5576) target = $region56
    $region55: #{resblock_forward.1} parent=5 // pred_region
      %s5579 = ssub.s32 %s13, 2
      // Predicated region
      $region57: #{resblock_forward.1} parent=55 // pred_check
        %p5580 = pneg %p194
      $region58: #{resblock_forward.1} parent=55 // pred_check_branch
        %5582 = sbr.rel (%p5580) target = $region60
      $region59: #{resblock_forward.1} parent=55 // pred_region
        %p5583 = scmp.lt.s32.totalorder %s19, 1
        %s5584 = scalar_select %p5583, %s19, 1
        %s5585 = smul.addr %s5584, 32
        %s5586 = smul.addr %s5585, 8
        %s5587 = scalar_lea.vmem %s7, %s5586
      $region60: #{resblock_forward.1} parent=55 // pred_fallthru
        _
    $region56: #{resblock_forward.1} parent=5 // pred_fallthru
      _
  $region6: #{resblock_forward.1} parent=0 // loop_footer
    %s17 = sadd.s32 1, %s13
  $region7: #{resblock_forward.1} parent=0 // loop_footer_branch
    %12 = sbr.rel target = $region3
  $region8: #{resblock_forward.1} parent=0 // loop_exit
    _

</llo_original>
